<compile_context>
chip_gen: v6e
topology: v6e:2x2x1
jax: 0.10.0
libtpu: 0.0.40
codegen_flags: <defaults>
</compile_context>

<pallas_src>
import functools
import math

import numpy as np
import jax
import jax.numpy as jnp
from jax import lax
from jax.experimental import pallas as pl
from jax.experimental.pallas import tpu as pltpu


# ----------------------------- config -----------------------------

class Config:
    d_model = 32
    n_layers = 2
    n_heads = 4
    d_ff = 64
    pre_layernorm = True
    dropout = 0.0
    context_frames = 4   # only used to build the example batch_mask


def _round_up(x, m):
    return ((x + m - 1) // m) * m


# ----------------------------- slab layouts -----------------------------
# Each entry: name -> (row_offset, rows, cols).  Row offsets in the bf16 weight slab are
# 16-aligned (bf16 sublane packing); multi-row blocks in the f32 slab are 8-aligned.

def _build_wlayout(d_motion, cfg, T, dpad):
    d_model, d_ff, L = cfg.d_model, cfg.d_ff, cfg.n_layers
    Wrel = 2 * T
    layout, off = {}, 0

    def add(name, rows, cols):
        nonlocal off
        layout[name] = (off, rows, cols)
        off += _round_up(rows, 16)

    add("enc_w1", 2 * dpad, d_model)
    add("enc_w2", d_model, d_model)
    add("lt_w", d_model, Wrel)
    for l in range(L):
        add(f"wqkv_{l}", d_model, 3 * d_model)
        add(f"wo_{l}", d_model, d_model)
        add(f"ffn_w1_{l}", d_model, d_ff)
        add(f"ffn_w2_{l}", d_ff, d_model)
    add("dec_w1", d_model, d_model)
    add("dec_w2", d_model, dpad)
    return layout, _round_up(off, 16)


def _build_clayout(d_motion, cfg, B, T, dpad):
    d_model, d_ff, L, H = cfg.d_model, cfg.d_ff, cfg.n_layers, cfg.n_heads
    M = B * T
    HM = H * M
    layout, off = {}, 0

    def add(name, rows, cols, align=1):
        nonlocal off
        off = _round_up(off, align)
        layout[name] = (off, rows, cols)
        off += rows

    for name, cols in [("enc_b1", d_model), ("enc_b2", d_model),
                       ("a_enc1", d_model), ("a_enc2", d_model), ("a_dec", d_model),
                       ("final_ln_g", d_model), ("final_ln_b", d_model),
                       ("dec_b1", d_model), ("dec_b2", dpad)]:
        add(name, 1, cols)
    for l in range(L):
        for name, cols in [(f"ln1_g_{l}", d_model), (f"ln1_b_{l}", d_model),
                           (f"bqkv_{l}", 3 * d_model), (f"bo_{l}", d_model),
                           (f"ln2_g_{l}", d_model), (f"ln2_b_{l}", d_model),
                           (f"ffn_b1_{l}", d_ff), (f"ffn_b2_{l}", d_model)]:
            add(name, 1, cols)
    add("head_mask", HM, d_model, align=8)
    add("score_bias", HM, HM, align=8)
    return layout, _round_up(off, 8)


# ----------------------------- fused forward kernel -----------------------------

def _detail_transformer_kernel(
    data_ref,            # (M, 2*dpad) f32: lanes [0:dpad)=x padded, [dpad:2*dpad)=mask padded
    w_ref,               # bf16 weight slab
    c_ref,               # f32 constants slab
    out_ref,             # (M, dpad) f32: lanes [0:d_motion)=blended motion, [d_motion:d_motion+4)=sigmoid(contact)
    *, B, T, d_motion, d_model, n_heads, n_layers, d_ff, dpad, pre_layernorm, WL, CL):

    f32, bf16 = jnp.float32, jnp.bfloat16
    M = B * T
    HM = n_heads * M
    Wrel = 2 * T

    def wload(name):
        o, r, c = WL[name]
        return w_ref[o:o + r, 0:c]

    def cload(name):
        o, r, c = CL[name]
        return c_ref[o:o + r, 0:c]

    def mm(a, b):                       # a @ b     (bf16 operands, f32 accumulation)
        return jnp.dot(a.astype(bf16), b.astype(bf16), preferred_element_type=f32)

    def mm_t(a, b):                     # a @ b.T
        return lax.dot_general(a.astype(bf16), b.astype(bf16),
                               (((1,), (1,)), ((), ())), preferred_element_type=f32)

    def layernorm(x, g, b):
        mu = jnp.mean(x, axis=-1, keepdims=True)
        var = jnp.mean((x - mu) ** 2, axis=-1, keepdims=True)
        return (x - mu) * lax.rsqrt(var + 1e-5) * g + b

    def prelu(x, a_row):
        return jnp.where(x > 0.0, x, a_row * x)

    data = data_ref[...]                                         # (M, 2*dpad) f32

    # ---------------- encoder: Linear(cat[x, mask]) -> PReLU -> Linear -> PReLU ----------------
    h = mm(data, wload("enc_w1")) + cload("enc_b1")
    h = prelu(h, cload("a_enc1"))
    h = mm(h, wload("enc_w2")) + cload("enc_b2")
    xseq = prelu(h, cload("a_enc2"))                              # (M, d_model)

    # ---------------- constants (loaded once, hoisted out of the layer loop) ----------------
    head_mask = cload("head_mask")                                # (HM, d_model)  {0,1}
    score_bias = cload("score_bias")                              # (HM, HM)       {0,-1e9}
    lt_w = wload("lt_w")                                          # (d_model, 2T)  bf16

    # skew select masks: depend only on row % T -> layer invariant
    row = lax.broadcasted_iota(jnp.int32, (HM, Wrel), 0)
    s = (T - 1) - (row % T)                                       # left shift per row
    n_stages = 0
    while (1 << n_stages) < T:
        n_stages += 1
    skew_masks = [((s >> j) & 1) == 1 for j in range(n_stages)]

    for l in range(n_layers):
        # ------------------- multi-head attention with relative position bias -------------------
        residual = xseq
        ln1_g, ln1_b = cload(f"ln1_g_{l}"), cload(f"ln1_b_{l}")
        h = layernorm(xseq, ln1_g, ln1_b) if pre_layernorm else xseq
        qkv = mm(h, wload(f"wqkv_{l}")) + cload(f"bqkv_{l}")      # (M, 3*d_model), Q pre-scaled

        # heads stacked along rows; Q and V masked to their head's feature block
        q = jnp.concatenate([qkv[:, 0:d_model]] * n_heads, axis=0) * head_mask        # (HM, d_model)
        k = jnp.concatenate([qkv[:, d_model:2 * d_model]] * n_heads, axis=0)          # (HM, d_model)
        v = jnp.concatenate([qkv[:, 2 * d_model:3 * d_model]] * n_heads, axis=0) * head_mask

        content = mm_t(q, k)                                       # (HM, HM) block-diag per head
        R = mm(q, lt_w)                                            # (HM, 2T)

        # skew: left-roll row r by (T-1) - (r % T); wrapped lanes land at columns >= T
        cur = R
        for j in range(n_stages):
            kk = 1 << j
            rolled = pltpu.roll(cur, shift=Wrel - kk, axis=1)      # left roll by kk
            cur = jnp.where(skew_masks[j], rolled, cur)
        rel = jnp.concatenate([cur[:, 0:T]] * (HM // T), axis=1)   # (HM, HM)

        scores = content + rel + score_bias
        scores = scores - jnp.max(scores, axis=-1, keepdims=True)
        p = jnp.exp(scores)
        p = p * pl.reciprocal(jnp.sum(p, axis=-1, keepdims=True), approx=True)

        pv = mm(p, v)                                              # (HM, d_model), block-placed
        o = pv[0:M]
        for hh in range(1, n_heads):
            o = o + pv[hh * M:(hh + 1) * M]                        # free "concat" of heads

        out = mm(o, wload(f"wo_{l}")) + cload(f"bo_{l}")
        xseq = residual + out
        if not pre_layernorm:
            xseq = layernorm(xseq, ln1_g, ln1_b)

        # ------------------- position-wise feed-forward -------------------
        residual = xseq
        ln2_g, ln2_b = cload(f"ln2_g_{l}"), cload(f"ln2_b_{l}")
        h = layernorm(xseq, ln2_g, ln2_b) if pre_layernorm else xseq
        h = mm(h, wload(f"ffn_w1_{l}")) + cload(f"ffn_b1_{l}")
        h = jnp.maximum(h, 0.0)
        h = mm(h, wload(f"ffn_w2_{l}")) + cload(f"ffn_b2_{l}")
        xseq = residual + h
        if not pre_layernorm:
            xseq = layernorm(xseq, ln2_g, ln2_b)

    if pre_layernorm:
        xseq = layernorm(xseq, cload("final_ln_g"), cload("final_ln_b"))

    # ---------------- decoder + keyframe blend + sigmoid, one lane-dense store ----------------
    dec = mm(xseq, wload("dec_w1")) + cload("dec_b1")
    dec = prelu(dec, cload("a_dec"))
    dec = mm(dec, wload("dec_w2")) + cload("dec_b2")               # (M, dpad)

    x_p = data[:, 0:dpad]
    m_p = data[:, dpad:2 * dpad]
    blend = m_p * x_p + (1.0 - m_p) * dec
    sig = pl.reciprocal(1.0 + jnp.exp(-dec), approx=True)          # sigmoid via EUP
    lane = lax.broadcasted_iota(jnp.int32, (M, dpad), 1)
    out_ref[...] = jnp.where(lane < d_motion, blend, sig)


# ----------------------------- wrapper -----------------------------

def detail_transformer_forward(x, batch_mask, packed, cfg):
    wslab, cslab, WL, CL, dpad = packed
    B, T, D = x.shape
    M = B * T

    x2 = x.reshape(M, D)
    m2 = batch_mask.reshape(M, D)
    data = jnp.zeros((M, 2 * dpad), jnp.float32)
    data = data.at[:, 0:D].set(x2).at[:, dpad:dpad + D].set(m2)

    kernel = functools.partial(
        _detail_transformer_kernel,
        B=B, T=T, d_motion=D, d_model=cfg.d_model, n_heads=cfg.n_heads,
        n_layers=cfg.n_layers, d_ff=cfg.d_ff, dpad=dpad,
        pre_layernorm=cfg.pre_layernorm, WL=WL, CL=CL)

    vmem = pl.BlockSpec(memory_space=pltpu.MemorySpace.VMEM)
    out = pl.pallas_call(
        kernel,
        out_shape=jax.ShapeDtypeStruct((M, dpad), jnp.float32),
        in_specs=[vmem, vmem, vmem],
        out_specs=vmem,
    )(data, wslab, cslab)

    motion = out[:, :D].reshape(B, T, D)
    contact = out[:, D:D + 4].reshape(B, T, 4)
    return motion, contact


# ----------------------------- parameters -----------------------------

def _init_linear(key, fan_in, fan_out):
    kw, kb = jax.random.split(key)
    w = jax.random.normal(kw, (fan_in, fan_out), jnp.float32) * 0.05
    b = jax.random.normal(kb, (fan_out,), jnp.float32) * 0.01
    return w, b


def init_params(key, d_motion, cfg):
    d_model = cfg.d_model
    d_head = d_model // cfg.n_heads
    keys = iter(jax.random.split(key, 64))
    prelu = lambda: jnp.full((1,), 0.25, jnp.float32)
    p = {}
    p["enc_w1"], p["enc_b1"] = _init_linear(next(keys), d_motion * 2, d_model); p["enc_a1"] = prelu()
    p["enc_w2"], p["enc_b2"] = _init_linear(next(keys), d_model, d_model);      p["enc_a2"] = prelu()
    p["rel_w1"], p["rel_b1"] = _init_linear(next(keys), 1, d_model); p["rel_a1"] = prelu()
    p["rel_w2"], p["rel_b2"] = _init_linear(next(keys), d_model, d_head)
    p["final_ln_g"] = jnp.ones((d_model,), jnp.float32)
    p["final_ln_b"] = jnp.zeros((d_model,), jnp.float32)
    p["layers"] = []
    for _ in range(cfg.n_layers):
        lp = {}
        lp["attn_ln_g"] = jnp.ones((d_model,), jnp.float32)
        lp["attn_ln_b"] = jnp.zeros((d_model,), jnp.float32)
        lp["wq"], lp["bq"] = _init_linear(next(keys), d_model, d_model)
        lp["wk"], lp["bk"] = _init_linear(next(keys), d_model, d_model)
        lp["wv"], lp["bv"] = _init_linear(next(keys), d_model, d_model)
        lp["wo"], lp["bo"] = _init_linear(next(keys), d_model, d_model)
        lp["ffn_ln_g"] = jnp.ones((d_model,), jnp.float32)
        lp["ffn_ln_b"] = jnp.zeros((d_model,), jnp.float32)
        lp["ffn_w1"], lp["ffn_b1"] = _init_linear(next(keys), d_model, cfg.d_ff)
        lp["ffn_w2"], lp["ffn_b2"] = _init_linear(next(keys), cfg.d_ff, d_model)
        p["layers"].append(lp)
    p["dec_w1"], p["dec_b1"] = _init_linear(next(keys), d_model, d_model); p["dec_a1"] = prelu()
    p["dec_w2"], p["dec_b2"] = _init_linear(next(keys), d_model, d_motion + 4)
    return p


def pack_params(params, cfg, d_motion, B, T, dpad=16):
    """Pack everything into one bf16 weight slab + one f32 constants slab."""
    assert d_motion + 4 <= dpad
    d_model, d_ff, L, H = cfg.d_model, cfg.d_ff, cfg.n_layers, cfg.n_heads
    dh = d_model // H
    scale = 1.0 / math.sqrt(dh)
    M, HM, Wrel = B * T, H * B * T, 2 * T

    WL, wrows = _build_wlayout(d_motion, cfg, T, dpad)
    CL, crows = _build_clayout(d_motion, cfg, B, T, dpad)
    wslab = np.zeros((wrows, 128), np.float32)
    cslab = np.zeros((crows, 128), np.float32)

    def wput(name, arr):
        arr = np.asarray(arr, np.float32)
        o, r, c = WL[name]
        wslab[o:o + arr.shape[0], 0:arr.shape[1]] = arr

    def cput(name, arr):
        arr = np.asarray(arr, np.float32)
        if arr.ndim == 1:
            arr = arr.reshape(1, -1)
        o, r, c = CL[name]
        cslab[o:o + arr.shape[0], 0:arr.shape[1]] = arr

    # encoder: split the cat([x, mask]) weight into the padded x / mask row blocks
    enc_w1 = np.asarray(params["enc_w1"], np.float32)            # (2*d_motion, d_model)
    blk = np.zeros((2 * dpad, d_model), np.float32)
    blk[0:d_motion] = enc_w1[0:d_motion]
    blk[dpad:dpad + d_motion] = enc_w1[d_motion:2 * d_motion]
    wput("enc_w1", blk)
    wput("enc_w2", params["enc_w2"])
    cput("enc_b1", params["enc_b1"])
    cput("enc_b2", params["enc_b2"])
    cput("a_enc1", np.full((d_model,), float(params["enc_a1"][0]), np.float32))
    cput("a_enc2", np.full((d_model,), float(params["enc_a2"][0]), np.float32))
    cput("a_dec", np.full((d_model,), float(params["dec_a1"][0]), np.float32))

    # relative-position lookup table (input-independent -> precomputed here)
    rel_dist = np.arange(-T + 1, T, dtype=np.float32)[:, None]    # (2T-1, 1)
    hh = rel_dist @ np.asarray(params["rel_w1"], np.float32) + np.asarray(params["rel_b1"], np.float32)
    a_rel = float(params["rel_a1"][0])
    hh = np.where(hh > 0, hh, a_rel * hh)
    lt = hh @ np.asarray(params["rel_w2"], np.float32) + np.asarray(params["rel_b2"], np.float32)  # (2T-1, dh)
    lt_tiled = np.tile(lt, (1, H))                                 # (2T-1, d_model)
    lt_w = np.zeros((d_model, Wrel), np.float32)
    lt_w[:, 0:2 * T - 1] = lt_tiled.T
    wput("lt_w", lt_w)

    for l, lp in enumerate(params["layers"]):
        wq = np.asarray(lp["wq"], np.float32) * scale              # fold 1/sqrt(d_head)
        bq = np.asarray(lp["bq"], np.float32) * scale
        wput(f"wqkv_{l}", np.concatenate(
            [wq, np.asarray(lp["wk"], np.float32), np.asarray(lp["wv"], np.float32)], axis=1))
        cput(f"bqkv_{l}", np.concatenate(
            [bq, np.asarray(lp["bk"], np.float32), np.asarray(lp["bv"], np.float32)]))
        wput(f"wo_{l}", lp["wo"]);        cput(f"bo_{l}", lp["bo"])
        wput(f"ffn_w1_{l}", lp["ffn_w1"]); cput(f"ffn_b1_{l}", lp["ffn_b1"])
        wput(f"ffn_w2_{l}", lp["ffn_w2"]); cput(f"ffn_b2_{l}", lp["ffn_b2"])
        cput(f"ln1_g_{l}", lp["attn_ln_g"]); cput(f"ln1_b_{l}", lp["attn_ln_b"])
        cput(f"ln2_g_{l}", lp["ffn_ln_g"]);  cput(f"ln2_b_{l}", lp["ffn_ln_b"])

    cput("final_ln_g", params["final_ln_g"])
    cput("final_ln_b", params["final_ln_b"])
    wput("dec_w1", params["dec_w1"])
    cput("dec_b1", params["dec_b1"])
    dec_w2 = np.zeros((d_model, dpad), np.float32)
    dec_w2[:, 0:d_motion + 4] = np.asarray(params["dec_w2"], np.float32)
    wput("dec_w2", dec_w2)
    dec_b2 = np.zeros((dpad,), np.float32)
    dec_b2[0:d_motion + 4] = np.asarray(params["dec_b2"], np.float32)
    cput("dec_b2", dec_b2)

    # head mask (multiplicative) and head+batch additive score bias (input-independent)
    r = np.arange(HM)
    head_of_row = r // M                                           # r = h*M + b*T + t
    j = np.arange(d_model)
    head_mask = (j[None, :] // dh == head_of_row[:, None]).astype(np.float32)
    cput("head_mask", head_mask)
    blk_id = r // T                                                # h*B + b  (unique per head,batch)
    score_bias = np.where(blk_id[:, None] == blk_id[None, :], 0.0, -1e9).astype(np.float32)
    cput("score_bias", score_bias)

    return (jnp.asarray(wslab, dtype=jnp.bfloat16), jnp.asarray(cslab), WL, CL, dpad)


# ----------------------------- main -----------------------------

if __name__ == "__main__":
    cfg = Config()
    d_motion = 6
    B, T = 2, 16

    key = jax.random.PRNGKey(0)
    kx, kp = jax.random.split(key)
    x = jax.random.normal(kx, (B, T, d_motion), jnp.float32)
    params = init_params(kp, d_motion, cfg)
    packed = pack_params(params, cfg, d_motion, B, T)

    # deterministic keyframe-style mask: context frames + last frame are known
    bm = np.ones((B, T, d_motion), np.float32)
    bm[:, cfg.context_frames:-1, :] = 0.0
    batch_mask = jnp.asarray(bm)

    motion, contact = detail_transformer_forward(x, batch_mask, packed, cfg)
    jax.block_until_ready((motion, contact))
    assert motion.shape == (B, T, d_motion) and contact.shape == (B, T, 4)
    assert bool(jnp.all(jnp.isfinite(motion))) and bool(jnp.all(jnp.isfinite(contact)))
    print("KERNEL_OK")
</pallas_src>

<mosaic_0001>
module attributes {stable_mosaic.version = 11 : i64} {
  func.func @_detail_transformer_kernel(%arg0: memref<32x32xf32, #tpu.memory_space<vmem>>, %arg1: memref<480x128xbf16, #tpu.memory_space<vmem>>, %arg2: memref<288x128xf32, #tpu.memory_space<vmem>>, %arg3: memref<32x16xf32, #tpu.memory_space<vmem>>) attributes {dimension_semantics = [], scalar_prefetch = 0 : i64, scratch_operands = 0 : i64, tpu.core_type = #tpu.core_type<tc>} {
    %c0 = arith.constant 0 : index
    %c0_0 = arith.constant 0 : index
    %0 = vector.load %arg0[%c0, %c0_0] : memref<32x32xf32, #tpu.memory_space<vmem>>, vector<32x32xf32>
    %c0_1 = arith.constant 0 : index
    %c0_2 = arith.constant 0 : index
    %1 = vector.load %arg1[%c0_1, %c0_2] : memref<480x128xbf16, #tpu.memory_space<vmem>>, vector<32x32xbf16>
    %2 = arith.truncf %0 : vector<32x32xf32> to vector<32x32xbf16>
    %cst = arith.constant dense<0.000000e+00> : vector<32x32xf32>
    %3 = tpu.matmul %2, %1, %cst {dimension_numbers = #tpu.dot_dimension_numbers<[1], [0], [0], [1], [0, 0, 1, 1], [], []>} : vector<32x32xbf16>, vector<32x32xbf16>, vector<32x32xf32> -> vector<32x32xf32>
    %c0_3 = arith.constant 0 : index
    %c0_4 = arith.constant 0 : index
    %4 = vector.load %arg2[%c0_3, %c0_4] : memref<288x128xf32, #tpu.memory_space<vmem>>, vector<1x32xf32>
    %5 = vector.broadcast %4 : vector<1x32xf32> to vector<32x32xf32>
    %6 = arith.addf %3, %5 : vector<32x32xf32>
    %c2 = arith.constant 2 : index
    %c0_5 = arith.constant 0 : index
    %7 = vector.load %arg2[%c2, %c0_5] : memref<288x128xf32, #tpu.memory_space<vmem>>, vector<1x32xf32>
    %cst_6 = arith.constant 0.000000e+00 : f32
    %8 = vector.broadcast %cst_6 : f32 to vector<32x32xf32>
    %9 = arith.cmpf ogt, %6, %8 : vector<32x32xf32>
    %10 = vector.broadcast %7 : vector<1x32xf32> to vector<32x32xf32>
    %11 = arith.mulf %10, %6 : vector<32x32xf32>
    %12 = arith.select %9, %6, %11 : vector<32x32xi1>, vector<32x32xf32>
    %c32 = arith.constant 32 : index
    %c0_7 = arith.constant 0 : index
    %13 = vector.load %arg1[%c32, %c0_7] : memref<480x128xbf16, #tpu.memory_space<vmem>>, vector<32x32xbf16>
    %14 = arith.truncf %12 : vector<32x32xf32> to vector<32x32xbf16>
    %cst_8 = arith.constant dense<0.000000e+00> : vector<32x32xf32>
    %15 = tpu.matmul %14, %13, %cst_8 {dimension_numbers = #tpu.dot_dimension_numbers<[1], [0], [0], [1], [0, 0, 1, 1], [], []>} : vector<32x32xbf16>, vector<32x32xbf16>, vector<32x32xf32> -> vector<32x32xf32>
    %c1 = arith.constant 1 : index
    %c0_9 = arith.constant 0 : index
    %16 = vector.load %arg2[%c1, %c0_9] : memref<288x128xf32, #tpu.memory_space<vmem>>, vector<1x32xf32>
    %17 = vector.broadcast %16 : vector<1x32xf32> to vector<32x32xf32>
    %18 = arith.addf %15, %17 : vector<32x32xf32>
    %c3 = arith.constant 3 : index
    %c0_10 = arith.constant 0 : index
    %19 = vector.load %arg2[%c3, %c0_10] : memref<288x128xf32, #tpu.memory_space<vmem>>, vector<1x32xf32>
    %cst_11 = arith.constant 0.000000e+00 : f32
    %20 = vector.broadcast %cst_11 : f32 to vector<32x32xf32>
    %21 = arith.cmpf ogt, %18, %20 : vector<32x32xf32>
    %22 = vector.broadcast %19 : vector<1x32xf32> to vector<32x32xf32>
    %23 = arith.mulf %22, %18 : vector<32x32xf32>
    %24 = arith.select %21, %18, %23 : vector<32x32xi1>, vector<32x32xf32>
    %c32_12 = arith.constant 32 : index
    %c0_13 = arith.constant 0 : index
    %25 = vector.load %arg2[%c32_12, %c0_13] : memref<288x128xf32, #tpu.memory_space<vmem>>, vector<128x32xf32>
    %c160 = arith.constant 160 : index
    %c0_14 = arith.constant 0 : index
    %26 = vector.load %arg2[%c160, %c0_14] : memref<288x128xf32, #tpu.memory_space<vmem>>, vector<128x128xf32>
    %c64 = arith.constant 64 : index
    %c0_15 = arith.constant 0 : index
    %27 = vector.load %arg1[%c64, %c0_15] : memref<480x128xbf16, #tpu.memory_space<vmem>>, vector<32x32xbf16>
    %28 = tpu.iota {dimensions = array<i32: 0>} : vector<128x32xi32>
    %c16_i32 = arith.constant 16 : i32
    %c0_i32 = arith.constant 0 : i32
    %29 = arith.cmpi eq, %c16_i32, %c0_i32 : i32
    %c1_i32 = arith.constant 1 : i32
    %30 = arith.select %29, %c1_i32, %c16_i32 : i32
    %31 = vector.broadcast %30 : i32 to vector<128x32xi32>
    %32 = arith.remsi %28, %31 : vector<128x32xi32>
    %c0_i32_16 = arith.constant 0 : i32
    %33 = vector.broadcast %c0_i32_16 : i32 to vector<128x32xi32>
    %34 = arith.cmpi ne, %32, %33 : vector<128x32xi32>
    %c0_i32_17 = arith.constant 0 : i32
    %35 = vector.broadcast %c0_i32_17 : i32 to vector<128x32xi32>
    %36 = arith.cmpi slt, %32, %35 : vector<128x32xi32>
    %c0_i32_18 = arith.constant 0 : i32
    %37 = arith.cmpi slt, %30, %c0_i32_18 : i32
    %38 = vector.broadcast %37 : i1 to vector<128x32xi1>
    %39 = vector.broadcast %38 : vector<128x32xi1> to vector<128x32xi1>
    %40 = arith.xori %36, %39 : vector<128x32xi1>
    %41 = arith.andi %40, %34 : vector<128x32xi1>
    %42 = vector.broadcast %30 : i32 to vector<128x32xi32>
    %43 = arith.addi %32, %42 : vector<128x32xi32>
    %44 = arith.select %41, %43, %32 : vector<128x32xi1>, vector<128x32xi32>
    %c15_i32 = arith.constant 15 : i32
    %45 = vector.broadcast %c15_i32 : i32 to vector<128x32xi32>
    %46 = arith.subi %45, %44 : vector<128x32xi32>
    %c0_i32_19 = arith.constant 0 : i32
    %47 = vector.broadcast %c0_i32_19 : i32 to vector<128x32xi32>
    %48 = arith.shrsi %46, %47 : vector<128x32xi32>
    %c1_i32_20 = arith.constant 1 : i32
    %49 = vector.broadcast %c1_i32_20 : i32 to vector<128x32xi32>
    %50 = arith.andi %48, %49 : vector<128x32xi32>
    %c1_i32_21 = arith.constant 1 : i32
    %51 = vector.broadcast %c1_i32_21 : i32 to vector<128x32xi32>
    %52 = arith.cmpi eq, %50, %51 : vector<128x32xi32>
    %c1_i32_22 = arith.constant 1 : i32
    %53 = vector.broadcast %c1_i32_22 : i32 to vector<128x32xi32>
    %54 = arith.shrsi %46, %53 : vector<128x32xi32>
    %c1_i32_23 = arith.constant 1 : i32
    %55 = vector.broadcast %c1_i32_23 : i32 to vector<128x32xi32>
    %56 = arith.andi %54, %55 : vector<128x32xi32>
    %c1_i32_24 = arith.constant 1 : i32
    %57 = vector.broadcast %c1_i32_24 : i32 to vector<128x32xi32>
    %58 = arith.cmpi eq, %56, %57 : vector<128x32xi32>
    %c2_i32 = arith.constant 2 : i32
    %59 = vector.broadcast %c2_i32 : i32 to vector<128x32xi32>
    %60 = arith.shrsi %46, %59 : vector<128x32xi32>
    %c1_i32_25 = arith.constant 1 : i32
    %61 = vector.broadcast %c1_i32_25 : i32 to vector<128x32xi32>
    %62 = arith.andi %60, %61 : vector<128x32xi32>
    %c1_i32_26 = arith.constant 1 : i32
    %63 = vector.broadcast %c1_i32_26 : i32 to vector<128x32xi32>
    %64 = arith.cmpi eq, %62, %63 : vector<128x32xi32>
    %c3_i32 = arith.constant 3 : i32
    %65 = vector.broadcast %c3_i32 : i32 to vector<128x32xi32>
    %66 = arith.shrsi %46, %65 : vector<128x32xi32>
    %c1_i32_27 = arith.constant 1 : i32
    %67 = vector.broadcast %c1_i32_27 : i32 to vector<128x32xi32>
    %68 = arith.andi %66, %67 : vector<128x32xi32>
    %c1_i32_28 = arith.constant 1 : i32
    %69 = vector.broadcast %c1_i32_28 : i32 to vector<128x32xi32>
    %70 = arith.cmpi eq, %68, %69 : vector<128x32xi32>
    %c9 = arith.constant 9 : index
    %c0_29 = arith.constant 0 : index
    %71 = vector.load %arg2[%c9, %c0_29] : memref<288x128xf32, #tpu.memory_space<vmem>>, vector<1x32xf32>
    %c10 = arith.constant 10 : index
    %c0_30 = arith.constant 0 : index
    %72 = vector.load %arg2[%c10, %c0_30] : memref<288x128xf32, #tpu.memory_space<vmem>>, vector<1x32xf32>
    %cst_31 = arith.constant dense<0.000000e+00> : vector<32xf32>
    %73 = vector.multi_reduction <add>, %24, %cst_31 [1] : vector<32x32xf32> to vector<32xf32>
    %74 = vector.shape_cast %73 : vector<32xf32> to vector<32x1xf32>
    %cst_32 = arith.constant 3.200000e+01 : f32
    %75 = vector.broadcast %cst_32 : f32 to vector<32x1xf32>
    %76 = arith.divf %74, %75 : vector<32x1xf32>
    %77 = vector.broadcast %76 : vector<32x1xf32> to vector<32x32xf32>
    %78 = arith.subf %24, %77 : vector<32x32xf32>
    %79 = arith.mulf %78, %78 : vector<32x32xf32>
    %cst_33 = arith.constant dense<0.000000e+00> : vector<32xf32>
    %80 = vector.multi_reduction <add>, %79, %cst_33 [1] : vector<32x32xf32> to vector<32xf32>
    %81 = vector.shape_cast %80 : vector<32xf32> to vector<32x1xf32>
    %cst_34 = arith.constant 3.200000e+01 : f32
    %82 = vector.broadcast %cst_34 : f32 to vector<32x1xf32>
    %83 = arith.divf %81, %82 : vector<32x1xf32>
    %84 = vector.broadcast %76 : vector<32x1xf32> to vector<32x32xf32>
    %85 = arith.subf %24, %84 : vector<32x32xf32>
    %cst_35 = arith.constant 9.99999974E-6 : f32
    %86 = vector.broadcast %cst_35 : f32 to vector<32x1xf32>
    %87 = arith.addf %83, %86 : vector<32x1xf32>
    %88 = math.rsqrt %87 : vector<32x1xf32>
    %89 = vector.broadcast %88 : vector<32x1xf32> to vector<32x32xf32>
    %90 = arith.mulf %85, %89 : vector<32x32xf32>
    %91 = vector.broadcast %71 : vector<1x32xf32> to vector<32x32xf32>
    %92 = arith.mulf %90, %91 : vector<32x32xf32>
    %93 = vector.broadcast %72 : vector<1x32xf32> to vector<32x32xf32>
    %94 = arith.addf %92, %93 : vector<32x32xf32>
    %c96 = arith.constant 96 : index
    %c0_36 = arith.constant 0 : index
    %95 = vector.load %arg1[%c96, %c0_36] : memref<480x128xbf16, #tpu.memory_space<vmem>>, vector<32x96xbf16>
    %96 = arith.truncf %94 : vector<32x32xf32> to vector<32x32xbf16>
    %cst_37 = arith.constant dense<0.000000e+00> : vector<32x96xf32>
    %97 = tpu.matmul %96, %95, %cst_37 {dimension_numbers = #tpu.dot_dimension_numbers<[1], [0], [0], [1], [0, 0, 1, 1], [], []>} : vector<32x32xbf16>, vector<32x96xbf16>, vector<32x96xf32> -> vector<32x96xf32>
    %c11 = arith.constant 11 : index
    %c0_38 = arith.constant 0 : index
    %98 = vector.load %arg2[%c11, %c0_38] : memref<288x128xf32, #tpu.memory_space<vmem>>, vector<1x96xf32>
    %99 = vector.broadcast %98 : vector<1x96xf32> to vector<32x96xf32>
    %100 = arith.addf %97, %99 : vector<32x96xf32>
    %101 = vector.extract_strided_slice %100 {offsets = [0, 0], sizes = [32, 32], strides = [1, 1]} : vector<32x96xf32> to vector<32x32xf32>
    %102 = tpu.concatenate %101, %101, %101, %101 in 0 : vector<32x32xf32>, vector<32x32xf32>, vector<32x32xf32>, vector<32x32xf32> -> vector<128x32xf32>
    %103 = arith.mulf %102, %25 : vector<128x32xf32>
    %104 = vector.extract_strided_slice %100 {offsets = [0, 32], sizes = [32, 32], strides = [1, 1]} : vector<32x96xf32> to vector<32x32xf32>
    %105 = tpu.concatenate %104, %104, %104, %104 in 0 : vector<32x32xf32>, vector<32x32xf32>, vector<32x32xf32>, vector<32x32xf32> -> vector<128x32xf32>
    %106 = vector.extract_strided_slice %100 {offsets = [0, 64], sizes = [32, 32], strides = [1, 1]} : vector<32x96xf32> to vector<32x32xf32>
    %107 = tpu.concatenate %106, %106, %106, %106 in 0 : vector<32x32xf32>, vector<32x32xf32>, vector<32x32xf32>, vector<32x32xf32> -> vector<128x32xf32>
    %108 = arith.mulf %107, %25 : vector<128x32xf32>
    %109 = arith.truncf %103 : vector<128x32xf32> to vector<128x32xbf16>
    %110 = arith.truncf %105 : vector<128x32xf32> to vector<128x32xbf16>
    %cst_39 = arith.constant dense<0.000000e+00> : vector<128x128xf32>
    %111 = tpu.matmul %109, %110, %cst_39 {dimension_numbers = #tpu.dot_dimension_numbers<[1], [1], [0], [0], [0, 0, 1, 0], [], []>} : vector<128x32xbf16>, vector<128x32xbf16>, vector<128x128xf32> -> vector<128x128xf32>
    %112 = arith.truncf %103 : vector<128x32xf32> to vector<128x32xbf16>
    %cst_40 = arith.constant dense<0.000000e+00> : vector<128x32xf32>
    %113 = tpu.matmul %112, %27, %cst_40 {dimension_numbers = #tpu.dot_dimension_numbers<[1], [0], [0], [1], [0, 0, 1, 1], [], []>} : vector<128x32xbf16>, vector<32x32xbf16>, vector<128x32xf32> -> vector<128x32xf32>
    %c31_i32 = arith.constant 31 : i32
    %114 = tpu.dynamic_rotate %113 by %c31_i32 dim 1 : vector<128x32xf32>, i32 -> vector<128x32xf32>
    %115 = arith.select %52, %114, %113 : vector<128x32xi1>, vector<128x32xf32>
    %c30_i32 = arith.constant 30 : i32
    %116 = tpu.dynamic_rotate %115 by %c30_i32 dim 1 : vector<128x32xf32>, i32 -> vector<128x32xf32>
    %117 = arith.select %58, %116, %115 : vector<128x32xi1>, vector<128x32xf32>
    %c28_i32 = arith.constant 28 : i32
    %118 = tpu.dynamic_rotate %117 by %c28_i32 dim 1 : vector<128x32xf32>, i32 -> vector<128x32xf32>
    %119 = arith.select %64, %118, %117 : vector<128x32xi1>, vector<128x32xf32>
    %c24_i32 = arith.constant 24 : i32
    %120 = tpu.dynamic_rotate %119 by %c24_i32 dim 1 : vector<128x32xf32>, i32 -> vector<128x32xf32>
    %121 = arith.select %70, %120, %119 : vector<128x32xi1>, vector<128x32xf32>
    %122 = vector.extract_strided_slice %121 {offsets = [0, 0], sizes = [128, 16], strides = [1, 1]} : vector<128x32xf32> to vector<128x16xf32>
    %123 = tpu.concatenate %122, %122, %122, %122, %122, %122, %122, %122 in 1 : vector<128x16xf32>, vector<128x16xf32>, vector<128x16xf32>, vector<128x16xf32>, vector<128x16xf32>, vector<128x16xf32>, vector<128x16xf32>, vector<128x16xf32> -> vector<128x128xf32>
    %124 = arith.addf %111, %123 : vector<128x128xf32>
    %125 = arith.addf %124, %26 : vector<128x128xf32>
    %cst_41 = arith.constant dense<0xFF800000> : vector<128xf32>
    %126 = vector.multi_reduction <maximumf>, %125, %cst_41 [1] : vector<128x128xf32> to vector<128xf32>
    %127 = vector.shape_cast %126 : vector<128xf32> to vector<128x1xf32>
    %128 = vector.broadcast %127 : vector<128x1xf32> to vector<128x128xf32>
    %129 = arith.subf %125, %128 : vector<128x128xf32>
    %130 = math.exp %129 : vector<128x128xf32>
    %cst_42 = arith.constant dense<0.000000e+00> : vector<128xf32>
    %131 = vector.multi_reduction <add>, %130, %cst_42 [1] : vector<128x128xf32> to vector<128xf32>
    %132 = vector.shape_cast %131 : vector<128xf32> to vector<128x1xf32>
    %133 = tpu.reciprocal %132 {approx = true} : vector<128x1xf32> -> vector<128x1xf32>
    %134 = vector.broadcast %133 : vector<128x1xf32> to vector<128x128xf32>
    %135 = arith.mulf %130, %134 : vector<128x128xf32>
    %136 = arith.truncf %135 : vector<128x128xf32> to vector<128x128xbf16>
    %137 = arith.truncf %108 : vector<128x32xf32> to vector<128x32xbf16>
    %cst_43 = arith.constant dense<0.000000e+00> : vector<128x32xf32>
    %138 = tpu.matmul %136, %137, %cst_43 {dimension_numbers = #tpu.dot_dimension_numbers<[1], [0], [0], [1], [0, 0, 1, 1], [], []>} : vector<128x128xbf16>, vector<128x32xbf16>, vector<128x32xf32> -> vector<128x32xf32>
    %139 = vector.extract_strided_slice %138 {offsets = [0, 0], sizes = [32, 32], strides = [1, 1]} : vector<128x32xf32> to vector<32x32xf32>
    %140 = vector.extract_strided_slice %138 {offsets = [32, 0], sizes = [32, 32], strides = [1, 1]} : vector<128x32xf32> to vector<32x32xf32>
    %141 = arith.addf %139, %140 : vector<32x32xf32>
    %142 = vector.extract_strided_slice %138 {offsets = [64, 0], sizes = [32, 32], strides = [1, 1]} : vector<128x32xf32> to vector<32x32xf32>
    %143 = arith.addf %141, %142 : vector<32x32xf32>
    %144 = vector.extract_strided_slice %138 {offsets = [96, 0], sizes = [32, 32], strides = [1, 1]} : vector<128x32xf32> to vector<32x32xf32>
    %145 = arith.addf %143, %144 : vector<32x32xf32>
    %c128 = arith.constant 128 : index
    %c0_44 = arith.constant 0 : index
    %146 = vector.load %arg1[%c128, %c0_44] : memref<480x128xbf16, #tpu.memory_space<vmem>>, vector<32x32xbf16>
    %147 = arith.truncf %145 : vector<32x32xf32> to vector<32x32xbf16>
    %cst_45 = arith.constant dense<0.000000e+00> : vector<32x32xf32>
    %148 = tpu.matmul %147, %146, %cst_45 {dimension_numbers = #tpu.dot_dimension_numbers<[1], [0], [0], [1], [0, 0, 1, 1], [], []>} : vector<32x32xbf16>, vector<32x32xbf16>, vector<32x32xf32> -> vector<32x32xf32>
    %c12 = arith.constant 12 : index
    %c0_46 = arith.constant 0 : index
    %149 = vector.load %arg2[%c12, %c0_46] : memref<288x128xf32, #tpu.memory_space<vmem>>, vector<1x32xf32>
    %150 = vector.broadcast %149 : vector<1x32xf32> to vector<32x32xf32>
    %151 = arith.addf %148, %150 : vector<32x32xf32>
    %152 = arith.addf %24, %151 : vector<32x32xf32>
    %c13 = arith.constant 13 : index
    %c0_47 = arith.constant 0 : index
    %153 = vector.load %arg2[%c13, %c0_47] : memref<288x128xf32, #tpu.memory_space<vmem>>, vector<1x32xf32>
    %c14 = arith.constant 14 : index
    %c0_48 = arith.constant 0 : index
    %154 = vector.load %arg2[%c14, %c0_48] : memref<288x128xf32, #tpu.memory_space<vmem>>, vector<1x32xf32>
    %cst_49 = arith.constant dense<0.000000e+00> : vector<32xf32>
    %155 = vector.multi_reduction <add>, %152, %cst_49 [1] : vector<32x32xf32> to vector<32xf32>
    %156 = vector.shape_cast %155 : vector<32xf32> to vector<32x1xf32>
    %cst_50 = arith.constant 3.200000e+01 : f32
    %157 = vector.broadcast %cst_50 : f32 to vector<32x1xf32>
    %158 = arith.divf %156, %157 : vector<32x1xf32>
    %159 = vector.broadcast %158 : vector<32x1xf32> to vector<32x32xf32>
    %160 = arith.subf %152, %159 : vector<32x32xf32>
    %161 = arith.mulf %160, %160 : vector<32x32xf32>
    %cst_51 = arith.constant dense<0.000000e+00> : vector<32xf32>
    %162 = vector.multi_reduction <add>, %161, %cst_51 [1] : vector<32x32xf32> to vector<32xf32>
    %163 = vector.shape_cast %162 : vector<32xf32> to vector<32x1xf32>
    %cst_52 = arith.constant 3.200000e+01 : f32
    %164 = vector.broadcast %cst_52 : f32 to vector<32x1xf32>
    %165 = arith.divf %163, %164 : vector<32x1xf32>
    %166 = vector.broadcast %158 : vector<32x1xf32> to vector<32x32xf32>
    %167 = arith.subf %152, %166 : vector<32x32xf32>
    %cst_53 = arith.constant 9.99999974E-6 : f32
    %168 = vector.broadcast %cst_53 : f32 to vector<32x1xf32>
    %169 = arith.addf %165, %168 : vector<32x1xf32>
    %170 = math.rsqrt %169 : vector<32x1xf32>
    %171 = vector.broadcast %170 : vector<32x1xf32> to vector<32x32xf32>
    %172 = arith.mulf %167, %171 : vector<32x32xf32>
    %173 = vector.broadcast %153 : vector<1x32xf32> to vector<32x32xf32>
    %174 = arith.mulf %172, %173 : vector<32x32xf32>
    %175 = vector.broadcast %154 : vector<1x32xf32> to vector<32x32xf32>
    %176 = arith.addf %174, %175 : vector<32x32xf32>
    %c160_54 = arith.constant 160 : index
    %c0_55 = arith.constant 0 : index
    %177 = vector.load %arg1[%c160_54, %c0_55] : memref<480x128xbf16, #tpu.memory_space<vmem>>, vector<32x64xbf16>
    %178 = arith.truncf %176 : vector<32x32xf32> to vector<32x32xbf16>
    %cst_56 = arith.constant dense<0.000000e+00> : vector<32x64xf32>
    %179 = tpu.matmul %178, %177, %cst_56 {dimension_numbers = #tpu.dot_dimension_numbers<[1], [0], [0], [1], [0, 0, 1, 1], [], []>} : vector<32x32xbf16>, vector<32x64xbf16>, vector<32x64xf32> -> vector<32x64xf32>
    %c15 = arith.constant 15 : index
    %c0_57 = arith.constant 0 : index
    %180 = vector.load %arg2[%c15, %c0_57] : memref<288x128xf32, #tpu.memory_space<vmem>>, vector<1x64xf32>
    %181 = vector.broadcast %180 : vector<1x64xf32> to vector<32x64xf32>
    %182 = arith.addf %179, %181 : vector<32x64xf32>
    %cst_58 = arith.constant 0.000000e+00 : f32
    %183 = vector.broadcast %cst_58 : f32 to vector<32x64xf32>
    %184 = arith.maximumf %182, %183 : vector<32x64xf32>
    %c192 = arith.constant 192 : index
    %c0_59 = arith.constant 0 : index
    %185 = vector.load %arg1[%c192, %c0_59] : memref<480x128xbf16, #tpu.memory_space<vmem>>, vector<64x32xbf16>
    %186 = arith.truncf %184 : vector<32x64xf32> to vector<32x64xbf16>
    %cst_60 = arith.constant dense<0.000000e+00> : vector<32x32xf32>
    %187 = tpu.matmul %186, %185, %cst_60 {dimension_numbers = #tpu.dot_dimension_numbers<[1], [0], [0], [1], [0, 0, 1, 1], [], []>} : vector<32x64xbf16>, vector<64x32xbf16>, vector<32x32xf32> -> vector<32x32xf32>
    %c16 = arith.constant 16 : index
    %c0_61 = arith.constant 0 : index
    %188 = vector.load %arg2[%c16, %c0_61] : memref<288x128xf32, #tpu.memory_space<vmem>>, vector<1x32xf32>
    %189 = vector.broadcast %188 : vector<1x32xf32> to vector<32x32xf32>
    %190 = arith.addf %187, %189 : vector<32x32xf32>
    %191 = arith.addf %152, %190 : vector<32x32xf32>
    %c17 = arith.constant 17 : index
    %c0_62 = arith.constant 0 : index
    %192 = vector.load %arg2[%c17, %c0_62] : memref<288x128xf32, #tpu.memory_space<vmem>>, vector<1x32xf32>
    %c18 = arith.constant 18 : index
    %c0_63 = arith.constant 0 : index
    %193 = vector.load %arg2[%c18, %c0_63] : memref<288x128xf32, #tpu.memory_space<vmem>>, vector<1x32xf32>
    %cst_64 = arith.constant dense<0.000000e+00> : vector<32xf32>
    %194 = vector.multi_reduction <add>, %191, %cst_64 [1] : vector<32x32xf32> to vector<32xf32>
    %195 = vector.shape_cast %194 : vector<32xf32> to vector<32x1xf32>
    %cst_65 = arith.constant 3.200000e+01 : f32
    %196 = vector.broadcast %cst_65 : f32 to vector<32x1xf32>
    %197 = arith.divf %195, %196 : vector<32x1xf32>
    %198 = vector.broadcast %197 : vector<32x1xf32> to vector<32x32xf32>
    %199 = arith.subf %191, %198 : vector<32x32xf32>
    %200 = arith.mulf %199, %199 : vector<32x32xf32>
    %cst_66 = arith.constant dense<0.000000e+00> : vector<32xf32>
    %201 = vector.multi_reduction <add>, %200, %cst_66 [1] : vector<32x32xf32> to vector<32xf32>
    %202 = vector.shape_cast %201 : vector<32xf32> to vector<32x1xf32>
    %cst_67 = arith.constant 3.200000e+01 : f32
    %203 = vector.broadcast %cst_67 : f32 to vector<32x1xf32>
    %204 = arith.divf %202, %203 : vector<32x1xf32>
    %205 = vector.broadcast %197 : vector<32x1xf32> to vector<32x32xf32>
    %206 = arith.subf %191, %205 : vector<32x32xf32>
    %cst_68 = arith.constant 9.99999974E-6 : f32
    %207 = vector.broadcast %cst_68 : f32 to vector<32x1xf32>
    %208 = arith.addf %204, %207 : vector<32x1xf32>
    %209 = math.rsqrt %208 : vector<32x1xf32>
    %210 = vector.broadcast %209 : vector<32x1xf32> to vector<32x32xf32>
    %211 = arith.mulf %206, %210 : vector<32x32xf32>
    %212 = vector.broadcast %192 : vector<1x32xf32> to vector<32x32xf32>
    %213 = arith.mulf %211, %212 : vector<32x32xf32>
    %214 = vector.broadcast %193 : vector<1x32xf32> to vector<32x32xf32>
    %215 = arith.addf %213, %214 : vector<32x32xf32>
    %c256 = arith.constant 256 : index
    %c0_69 = arith.constant 0 : index
    %216 = vector.load %arg1[%c256, %c0_69] : memref<480x128xbf16, #tpu.memory_space<vmem>>, vector<32x96xbf16>
    %217 = arith.truncf %215 : vector<32x32xf32> to vector<32x32xbf16>
    %cst_70 = arith.constant dense<0.000000e+00> : vector<32x96xf32>
    %218 = tpu.matmul %217, %216, %cst_70 {dimension_numbers = #tpu.dot_dimension_numbers<[1], [0], [0], [1], [0, 0, 1, 1], [], []>} : vector<32x32xbf16>, vector<32x96xbf16>, vector<32x96xf32> -> vector<32x96xf32>
    %c19 = arith.constant 19 : index
    %c0_71 = arith.constant 0 : index
    %219 = vector.load %arg2[%c19, %c0_71] : memref<288x128xf32, #tpu.memory_space<vmem>>, vector<1x96xf32>
    %220 = vector.broadcast %219 : vector<1x96xf32> to vector<32x96xf32>
    %221 = arith.addf %218, %220 : vector<32x96xf32>
    %222 = vector.extract_strided_slice %221 {offsets = [0, 0], sizes = [32, 32], strides = [1, 1]} : vector<32x96xf32> to vector<32x32xf32>
    %223 = tpu.concatenate %222, %222, %222, %222 in 0 : vector<32x32xf32>, vector<32x32xf32>, vector<32x32xf32>, vector<32x32xf32> -> vector<128x32xf32>
    %224 = arith.mulf %223, %25 : vector<128x32xf32>
    %225 = vector.extract_strided_slice %221 {offsets = [0, 32], sizes = [32, 32], strides = [1, 1]} : vector<32x96xf32> to vector<32x32xf32>
    %226 = tpu.concatenate %225, %225, %225, %225 in 0 : vector<32x32xf32>, vector<32x32xf32>, vector<32x32xf32>, vector<32x32xf32> -> vector<128x32xf32>
    %227 = vector.extract_strided_slice %221 {offsets = [0, 64], sizes = [32, 32], strides = [1, 1]} : vector<32x96xf32> to vector<32x32xf32>
    %228 = tpu.concatenate %227, %227, %227, %227 in 0 : vector<32x32xf32>, vector<32x32xf32>, vector<32x32xf32>, vector<32x32xf32> -> vector<128x32xf32>
    %229 = arith.mulf %228, %25 : vector<128x32xf32>
    %230 = arith.truncf %224 : vector<128x32xf32> to vector<128x32xbf16>
    %231 = arith.truncf %226 : vector<128x32xf32> to vector<128x32xbf16>
    %cst_72 = arith.constant dense<0.000000e+00> : vector<128x128xf32>
    %232 = tpu.matmul %230, %231, %cst_72 {dimension_numbers = #tpu.dot_dimension_numbers<[1], [1], [0], [0], [0, 0, 1, 0], [], []>} : vector<128x32xbf16>, vector<128x32xbf16>, vector<128x128xf32> -> vector<128x128xf32>
    %233 = arith.truncf %224 : vector<128x32xf32> to vector<128x32xbf16>
    %cst_73 = arith.constant dense<0.000000e+00> : vector<128x32xf32>
    %234 = tpu.matmul %233, %27, %cst_73 {dimension_numbers = #tpu.dot_dimension_numbers<[1], [0], [0], [1], [0, 0, 1, 1], [], []>} : vector<128x32xbf16>, vector<32x32xbf16>, vector<128x32xf32> -> vector<128x32xf32>
    %c31_i32_74 = arith.constant 31 : i32
    %235 = tpu.dynamic_rotate %234 by %c31_i32_74 dim 1 : vector<128x32xf32>, i32 -> vector<128x32xf32>
    %236 = arith.select %52, %235, %234 : vector<128x32xi1>, vector<128x32xf32>
    %c30_i32_75 = arith.constant 30 : i32
    %237 = tpu.dynamic_rotate %236 by %c30_i32_75 dim 1 : vector<128x32xf32>, i32 -> vector<128x32xf32>
    %238 = arith.select %58, %237, %236 : vector<128x32xi1>, vector<128x32xf32>
    %c28_i32_76 = arith.constant 28 : i32
    %239 = tpu.dynamic_rotate %238 by %c28_i32_76 dim 1 : vector<128x32xf32>, i32 -> vector<128x32xf32>
    %240 = arith.select %64, %239, %238 : vector<128x32xi1>, vector<128x32xf32>
    %c24_i32_77 = arith.constant 24 : i32
    %241 = tpu.dynamic_rotate %240 by %c24_i32_77 dim 1 : vector<128x32xf32>, i32 -> vector<128x32xf32>
    %242 = arith.select %70, %241, %240 : vector<128x32xi1>, vector<128x32xf32>
    %243 = vector.extract_strided_slice %242 {offsets = [0, 0], sizes = [128, 16], strides = [1, 1]} : vector<128x32xf32> to vector<128x16xf32>
    %244 = tpu.concatenate %243, %243, %243, %243, %243, %243, %243, %243 in 1 : vector<128x16xf32>, vector<128x16xf32>, vector<128x16xf32>, vector<128x16xf32>, vector<128x16xf32>, vector<128x16xf32>, vector<128x16xf32>, vector<128x16xf32> -> vector<128x128xf32>
    %245 = arith.addf %232, %244 : vector<128x128xf32>
    %246 = arith.addf %245, %26 : vector<128x128xf32>
    %cst_78 = arith.constant dense<0xFF800000> : vector<128xf32>
    %247 = vector.multi_reduction <maximumf>, %246, %cst_78 [1] : vector<128x128xf32> to vector<128xf32>
    %248 = vector.shape_cast %247 : vector<128xf32> to vector<128x1xf32>
    %249 = vector.broadcast %248 : vector<128x1xf32> to vector<128x128xf32>
    %250 = arith.subf %246, %249 : vector<128x128xf32>
    %251 = math.exp %250 : vector<128x128xf32>
    %cst_79 = arith.constant dense<0.000000e+00> : vector<128xf32>
    %252 = vector.multi_reduction <add>, %251, %cst_79 [1] : vector<128x128xf32> to vector<128xf32>
    %253 = vector.shape_cast %252 : vector<128xf32> to vector<128x1xf32>
    %254 = tpu.reciprocal %253 {approx = true} : vector<128x1xf32> -> vector<128x1xf32>
    %255 = vector.broadcast %254 : vector<128x1xf32> to vector<128x128xf32>
    %256 = arith.mulf %251, %255 : vector<128x128xf32>
    %257 = arith.truncf %256 : vector<128x128xf32> to vector<128x128xbf16>
    %258 = arith.truncf %229 : vector<128x32xf32> to vector<128x32xbf16>
    %cst_80 = arith.constant dense<0.000000e+00> : vector<128x32xf32>
    %259 = tpu.matmul %257, %258, %cst_80 {dimension_numbers = #tpu.dot_dimension_numbers<[1], [0], [0], [1], [0, 0, 1, 1], [], []>} : vector<128x128xbf16>, vector<128x32xbf16>, vector<128x32xf32> -> vector<128x32xf32>
    %260 = vector.extract_strided_slice %259 {offsets = [0, 0], sizes = [32, 32], strides = [1, 1]} : vector<128x32xf32> to vector<32x32xf32>
    %261 = vector.extract_strided_slice %259 {offsets = [32, 0], sizes = [32, 32], strides = [1, 1]} : vector<128x32xf32> to vector<32x32xf32>
    %262 = arith.addf %260, %261 : vector<32x32xf32>
    %263 = vector.extract_strided_slice %259 {offsets = [64, 0], sizes = [32, 32], strides = [1, 1]} : vector<128x32xf32> to vector<32x32xf32>
    %264 = arith.addf %262, %263 : vector<32x32xf32>
    %265 = vector.extract_strided_slice %259 {offsets = [96, 0], sizes = [32, 32], strides = [1, 1]} : vector<128x32xf32> to vector<32x32xf32>
    %266 = arith.addf %264, %265 : vector<32x32xf32>
    %c288 = arith.constant 288 : index
    %c0_81 = arith.constant 0 : index
    %267 = vector.load %arg1[%c288, %c0_81] : memref<480x128xbf16, #tpu.memory_space<vmem>>, vector<32x32xbf16>
    %268 = arith.truncf %266 : vector<32x32xf32> to vector<32x32xbf16>
    %cst_82 = arith.constant dense<0.000000e+00> : vector<32x32xf32>
    %269 = tpu.matmul %268, %267, %cst_82 {dimension_numbers = #tpu.dot_dimension_numbers<[1], [0], [0], [1], [0, 0, 1, 1], [], []>} : vector<32x32xbf16>, vector<32x32xbf16>, vector<32x32xf32> -> vector<32x32xf32>
    %c20 = arith.constant 20 : index
    %c0_83 = arith.constant 0 : index
    %270 = vector.load %arg2[%c20, %c0_83] : memref<288x128xf32, #tpu.memory_space<vmem>>, vector<1x32xf32>
    %271 = vector.broadcast %270 : vector<1x32xf32> to vector<32x32xf32>
    %272 = arith.addf %269, %271 : vector<32x32xf32>
    %273 = arith.addf %191, %272 : vector<32x32xf32>
    %c21 = arith.constant 21 : index
    %c0_84 = arith.constant 0 : index
    %274 = vector.load %arg2[%c21, %c0_84] : memref<288x128xf32, #tpu.memory_space<vmem>>, vector<1x32xf32>
    %c22 = arith.constant 22 : index
    %c0_85 = arith.constant 0 : index
    %275 = vector.load %arg2[%c22, %c0_85] : memref<288x128xf32, #tpu.memory_space<vmem>>, vector<1x32xf32>
    %cst_86 = arith.constant dense<0.000000e+00> : vector<32xf32>
    %276 = vector.multi_reduction <add>, %273, %cst_86 [1] : vector<32x32xf32> to vector<32xf32>
    %277 = vector.shape_cast %276 : vector<32xf32> to vector<32x1xf32>
    %cst_87 = arith.constant 3.200000e+01 : f32
    %278 = vector.broadcast %cst_87 : f32 to vector<32x1xf32>
    %279 = arith.divf %277, %278 : vector<32x1xf32>
    %280 = vector.broadcast %279 : vector<32x1xf32> to vector<32x32xf32>
    %281 = arith.subf %273, %280 : vector<32x32xf32>
    %282 = arith.mulf %281, %281 : vector<32x32xf32>
    %cst_88 = arith.constant dense<0.000000e+00> : vector<32xf32>
    %283 = vector.multi_reduction <add>, %282, %cst_88 [1] : vector<32x32xf32> to vector<32xf32>
    %284 = vector.shape_cast %283 : vector<32xf32> to vector<32x1xf32>
    %cst_89 = arith.constant 3.200000e+01 : f32
    %285 = vector.broadcast %cst_89 : f32 to vector<32x1xf32>
    %286 = arith.divf %284, %285 : vector<32x1xf32>
    %287 = vector.broadcast %279 : vector<32x1xf32> to vector<32x32xf32>
    %288 = arith.subf %273, %287 : vector<32x32xf32>
    %cst_90 = arith.constant 9.99999974E-6 : f32
    %289 = vector.broadcast %cst_90 : f32 to vector<32x1xf32>
    %290 = arith.addf %286, %289 : vector<32x1xf32>
    %291 = math.rsqrt %290 : vector<32x1xf32>
    %292 = vector.broadcast %291 : vector<32x1xf32> to vector<32x32xf32>
    %293 = arith.mulf %288, %292 : vector<32x32xf32>
    %294 = vector.broadcast %274 : vector<1x32xf32> to vector<32x32xf32>
    %295 = arith.mulf %293, %294 : vector<32x32xf32>
    %296 = vector.broadcast %275 : vector<1x32xf32> to vector<32x32xf32>
    %297 = arith.addf %295, %296 : vector<32x32xf32>
    %c320 = arith.constant 320 : index
    %c0_91 = arith.constant 0 : index
    %298 = vector.load %arg1[%c320, %c0_91] : memref<480x128xbf16, #tpu.memory_space<vmem>>, vector<32x64xbf16>
    %299 = arith.truncf %297 : vector<32x32xf32> to vector<32x32xbf16>
    %cst_92 = arith.constant dense<0.000000e+00> : vector<32x64xf32>
    %300 = tpu.matmul %299, %298, %cst_92 {dimension_numbers = #tpu.dot_dimension_numbers<[1], [0], [0], [1], [0, 0, 1, 1], [], []>} : vector<32x32xbf16>, vector<32x64xbf16>, vector<32x64xf32> -> vector<32x64xf32>
    %c23 = arith.constant 23 : index
    %c0_93 = arith.constant 0 : index
    %301 = vector.load %arg2[%c23, %c0_93] : memref<288x128xf32, #tpu.memory_space<vmem>>, vector<1x64xf32>
    %302 = vector.broadcast %301 : vector<1x64xf32> to vector<32x64xf32>
    %303 = arith.addf %300, %302 : vector<32x64xf32>
    %cst_94 = arith.constant 0.000000e+00 : f32
    %304 = vector.broadcast %cst_94 : f32 to vector<32x64xf32>
    %305 = arith.maximumf %303, %304 : vector<32x64xf32>
    %c352 = arith.constant 352 : index
    %c0_95 = arith.constant 0 : index
    %306 = vector.load %arg1[%c352, %c0_95] : memref<480x128xbf16, #tpu.memory_space<vmem>>, vector<64x32xbf16>
    %307 = arith.truncf %305 : vector<32x64xf32> to vector<32x64xbf16>
    %cst_96 = arith.constant dense<0.000000e+00> : vector<32x32xf32>
    %308 = tpu.matmul %307, %306, %cst_96 {dimension_numbers = #tpu.dot_dimension_numbers<[1], [0], [0], [1], [0, 0, 1, 1], [], []>} : vector<32x64xbf16>, vector<64x32xbf16>, vector<32x32xf32> -> vector<32x32xf32>
    %c24 = arith.constant 24 : index
    %c0_97 = arith.constant 0 : index
    %309 = vector.load %arg2[%c24, %c0_97] : memref<288x128xf32, #tpu.memory_space<vmem>>, vector<1x32xf32>
    %310 = vector.broadcast %309 : vector<1x32xf32> to vector<32x32xf32>
    %311 = arith.addf %308, %310 : vector<32x32xf32>
    %312 = arith.addf %273, %311 : vector<32x32xf32>
    %c5 = arith.constant 5 : index
    %c0_98 = arith.constant 0 : index
    %313 = vector.load %arg2[%c5, %c0_98] : memref<288x128xf32, #tpu.memory_space<vmem>>, vector<1x32xf32>
    %c6 = arith.constant 6 : index
    %c0_99 = arith.constant 0 : index
    %314 = vector.load %arg2[%c6, %c0_99] : memref<288x128xf32, #tpu.memory_space<vmem>>, vector<1x32xf32>
    %cst_100 = arith.constant dense<0.000000e+00> : vector<32xf32>
    %315 = vector.multi_reduction <add>, %312, %cst_100 [1] : vector<32x32xf32> to vector<32xf32>
    %316 = vector.shape_cast %315 : vector<32xf32> to vector<32x1xf32>
    %cst_101 = arith.constant 3.200000e+01 : f32
    %317 = vector.broadcast %cst_101 : f32 to vector<32x1xf32>
    %318 = arith.divf %316, %317 : vector<32x1xf32>
    %319 = vector.broadcast %318 : vector<32x1xf32> to vector<32x32xf32>
    %320 = arith.subf %312, %319 : vector<32x32xf32>
    %321 = arith.mulf %320, %320 : vector<32x32xf32>
    %cst_102 = arith.constant dense<0.000000e+00> : vector<32xf32>
    %322 = vector.multi_reduction <add>, %321, %cst_102 [1] : vector<32x32xf32> to vector<32xf32>
    %323 = vector.shape_cast %322 : vector<32xf32> to vector<32x1xf32>
    %cst_103 = arith.constant 3.200000e+01 : f32
    %324 = vector.broadcast %cst_103 : f32 to vector<32x1xf32>
    %325 = arith.divf %323, %324 : vector<32x1xf32>
    %326 = vector.broadcast %318 : vector<32x1xf32> to vector<32x32xf32>
    %327 = arith.subf %312, %326 : vector<32x32xf32>
    %cst_104 = arith.constant 9.99999974E-6 : f32
    %328 = vector.broadcast %cst_104 : f32 to vector<32x1xf32>
    %329 = arith.addf %325, %328 : vector<32x1xf32>
    %330 = math.rsqrt %329 : vector<32x1xf32>
    %331 = vector.broadcast %330 : vector<32x1xf32> to vector<32x32xf32>
    %332 = arith.mulf %327, %331 : vector<32x32xf32>
    %333 = vector.broadcast %313 : vector<1x32xf32> to vector<32x32xf32>
    %334 = arith.mulf %332, %333 : vector<32x32xf32>
    %335 = vector.broadcast %314 : vector<1x32xf32> to vector<32x32xf32>
    %336 = arith.addf %334, %335 : vector<32x32xf32>
    %c416 = arith.constant 416 : index
    %c0_105 = arith.constant 0 : index
    %337 = vector.load %arg1[%c416, %c0_105] : memref<480x128xbf16, #tpu.memory_space<vmem>>, vector<32x32xbf16>
    %338 = arith.truncf %336 : vector<32x32xf32> to vector<32x32xbf16>
    %cst_106 = arith.constant dense<0.000000e+00> : vector<32x32xf32>
    %339 = tpu.matmul %338, %337, %cst_106 {dimension_numbers = #tpu.dot_dimension_numbers<[1], [0], [0], [1], [0, 0, 1, 1], [], []>} : vector<32x32xbf16>, vector<32x32xbf16>, vector<32x32xf32> -> vector<32x32xf32>
    %c7 = arith.constant 7 : index
    %c0_107 = arith.constant 0 : index
    %340 = vector.load %arg2[%c7, %c0_107] : memref<288x128xf32, #tpu.memory_space<vmem>>, vector<1x32xf32>
    %341 = vector.broadcast %340 : vector<1x32xf32> to vector<32x32xf32>
    %342 = arith.addf %339, %341 : vector<32x32xf32>
    %c4 = arith.constant 4 : index
    %c0_108 = arith.constant 0 : index
    %343 = vector.load %arg2[%c4, %c0_108] : memref<288x128xf32, #tpu.memory_space<vmem>>, vector<1x32xf32>
    %cst_109 = arith.constant 0.000000e+00 : f32
    %344 = vector.broadcast %cst_109 : f32 to vector<32x32xf32>
    %345 = arith.cmpf ogt, %342, %344 : vector<32x32xf32>
    %346 = vector.broadcast %343 : vector<1x32xf32> to vector<32x32xf32>
    %347 = arith.mulf %346, %342 : vector<32x32xf32>
    %348 = arith.select %345, %342, %347 : vector<32x32xi1>, vector<32x32xf32>
    %c448 = arith.constant 448 : index
    %c0_110 = arith.constant 0 : index
    %349 = vector.load %arg1[%c448, %c0_110] : memref<480x128xbf16, #tpu.memory_space<vmem>>, vector<32x16xbf16>
    %350 = arith.truncf %348 : vector<32x32xf32> to vector<32x32xbf16>
    %cst_111 = arith.constant dense<0.000000e+00> : vector<32x16xf32>
    %351 = tpu.matmul %350, %349, %cst_111 {dimension_numbers = #tpu.dot_dimension_numbers<[1], [0], [0], [1], [0, 0, 1, 1], [], []>} : vector<32x32xbf16>, vector<32x16xbf16>, vector<32x16xf32> -> vector<32x16xf32>
    %c8 = arith.constant 8 : index
    %c0_112 = arith.constant 0 : index
    %352 = vector.load %arg2[%c8, %c0_112] : memref<288x128xf32, #tpu.memory_space<vmem>>, vector<1x16xf32>
    %353 = vector.broadcast %352 : vector<1x16xf32> to vector<32x16xf32>
    %354 = arith.addf %351, %353 : vector<32x16xf32>
    %355 = vector.extract_strided_slice %0 {offsets = [0, 0], sizes = [32, 16], strides = [1, 1]} : vector<32x32xf32> to vector<32x16xf32>
    %356 = vector.extract_strided_slice %0 {offsets = [0, 16], sizes = [32, 16], strides = [1, 1]} : vector<32x32xf32> to vector<32x16xf32>
    %357 = arith.mulf %356, %355 : vector<32x16xf32>
    %cst_113 = arith.constant 1.000000e+00 : f32
    %358 = vector.broadcast %cst_113 : f32 to vector<32x16xf32>
    %359 = arith.subf %358, %356 : vector<32x16xf32>
    %360 = arith.mulf %359, %354 : vector<32x16xf32>
    %361 = arith.addf %357, %360 : vector<32x16xf32>
    %cst_114 = arith.constant 0.000000e+00 : f32
    %362 = vector.broadcast %cst_114 : f32 to vector<32x16xf32>
    %363 = arith.subf %362, %354 : vector<32x16xf32>
    %364 = math.exp %363 : vector<32x16xf32>
    %cst_115 = arith.constant 1.000000e+00 : f32
    %365 = vector.broadcast %cst_115 : f32 to vector<32x16xf32>
    %366 = arith.addf %365, %364 : vector<32x16xf32>
    %367 = tpu.reciprocal %366 {approx = true} : vector<32x16xf32> -> vector<32x16xf32>
    %368 = tpu.iota {dimensions = array<i32: 1>} : vector<32x16xi32>
    %c6_i32 = arith.constant 6 : i32
    %369 = vector.broadcast %c6_i32 : i32 to vector<32x16xi32>
    %370 = arith.cmpi slt, %368, %369 : vector<32x16xi32>
    %371 = arith.select %370, %361, %367 : vector<32x16xi1>, vector<32x16xf32>
    %c0_116 = arith.constant 0 : index
    %c0_117 = arith.constant 0 : index
    %372 = vector.load %arg3[%c0_116, %c0_117] : memref<32x16xf32, #tpu.memory_space<vmem>>, vector<32x16xf32>
    tpu.vector_store %arg3[%c0_116, %c0_117], %371 {strides = array<i32>} : memref<32x16xf32, #tpu.memory_space<vmem>>, vector<32x16xf32>,
    return
  }
}

</mosaic_0001>

<llo_original>
// kernel: tpu_custom_call.1
$region0: #{tpu_custom_call.1}
  #allocation0 [shape = 'u32[]', space=smem, size = 0x4, offset = 0x4, fixed_abs, tag = 'smem constant byte address 0x4 - core index']
  #allocation1 [shape = 'u32[144,128]{1,0:T(1,128)}', space=vmem, size = 0x12000, scoped, tag = 'internal scratch']
  %s0 = inlined_call_operand.hbm [shape: f32[32,32], index: 0, kind: input, shape index: {}]
  %s1 = inlined_call_operand.hbm [shape: bf16[480,128], index: 1, kind: input, shape index: {}]
  %s2 = inlined_call_operand.hbm [shape: f32[288,128], index: 2, kind: input, shape index: {}]
  %s3 = inlined_call_operand.vmem [shape: f32[32,16], index: 3, kind: output, shape index: {}]
  %s4 = sld [smem:[#allocation0]]
  $region34: #{tpu_custom_call.1} parent=0
    _
  %s6 = ssub.s32 1, %s4
  %s7 = scalar_select 0, %s6, %s4
  $region1: #{tpu_custom_call.1} parent=0
    #allocation2 [shape = 'u8[16384]{0}', space=vmem, size = 0x4000, scoped, tag = 'input window, operand 0, single buffered']
    #allocation3 [shape = 's32[1]{0}', space=sflag, size = 0x4, scoped, tag = 'scoped memory for tpu_custom_call.1']
    #allocation4 [shape = 'u8[122880]{0}', space=vmem, size = 0x1e000, scoped, tag = 'input window, operand 1, single buffered']
    #allocation5 [shape = 's32[1]{0}', space=sflag, size = 0x4, scoped, tag = 'scoped memory for tpu_custom_call.1']
    #allocation6 [shape = 'u8[147456]{0}', space=vmem, size = 0x24000, scoped, tag = 'input window, operand 2, single buffered']
    %8 = vsyncpa [#allocation3], 0
    %9 = vsyncpa [#allocation5], 0
    // Predicated region
    $region2: #{tpu_custom_call.1} parent=1 // pred_check
      _
    $region3: #{tpu_custom_call.1} parent=1 // pred_check_branch
      %11 = sbr.rel (0) target = $region5
    $region4: #{tpu_custom_call.1} parent=1 // pred_region
      %s13 = ssub.s32 512, 512
      %14 = vsyncadd [#allocation3], %s13
      %s15 = sshll.u32 [#allocation2], 4
      %s16 = int_to_ptr.vmem [resolvable:$true] %s15
      %21 = dma.hbm_to_vmem [thread:$0]  %s0, 512, %s16, [#allocation3], 128, 128, 8
    $region5: #{tpu_custom_call.1} parent=1 // pred_fallthru
      _
    // Predicated region
    $region6: #{tpu_custom_call.1} parent=1 // pred_check
      _
    $region7: #{tpu_custom_call.1} parent=1 // pred_check_branch
      %23 = sbr.rel (0) target = $region9
    $region8: #{tpu_custom_call.1} parent=1 // pred_region
      %s25 = ssub.s32 3840, 3840
      %26 = vsyncadd [#allocation5], %s25
      %s27 = sshll.u32 [#allocation4], 4
      %s28 = int_to_ptr.vmem [resolvable:$true] %s27
      %33 = dma.hbm_to_vmem [thread:$0]  %s1, 3840, %s28, [#allocation5], 64, 64, 4
    $region9: #{tpu_custom_call.1} parent=1 // pred_fallthru
      _
    // Predicated region
    $region10: #{tpu_custom_call.1} parent=1 // pred_check
      _
    $region11: #{tpu_custom_call.1} parent=1 // pred_check_branch
      %35 = sbr.rel (0) target = $region13
    $region12: #{tpu_custom_call.1} parent=1 // pred_region
      %s37 = ssub.s32 4608, 4608
      %38 = vsyncadd [#allocation5], %s37
      %s39 = sshll.u32 [#allocation6], 4
      %s40 = int_to_ptr.vmem [resolvable:$true] %s39
      %45 = dma.hbm_to_vmem [thread:$0]  %s2, 4608, %s40, [#allocation5], 128, 128, 8
    $region13: #{tpu_custom_call.1} parent=1 // pred_fallthru
      _
    // Predicated region
    $region14: #{tpu_custom_call.1} parent=1 // pred_check
      _
    $region15: #{tpu_custom_call.1} parent=1 // pred_check_branch
      %47 = sbr.rel (0) target = $region17
    $region16: #{tpu_custom_call.1} parent=1 // pred_region
      %48 = dma.done [#allocation3], 512
    $region17: #{tpu_custom_call.1} parent=1 // pred_fallthru
      _
    // Predicated region
    $region18: #{tpu_custom_call.1} parent=1 // pred_check
      _
    $region19: #{tpu_custom_call.1} parent=1 // pred_check_branch
      %50 = sbr.rel (0) target = $region21
    $region20: #{tpu_custom_call.1} parent=1 // pred_region
      %51 = dma.done [#allocation5], 3840
    $region21: #{tpu_custom_call.1} parent=1 // pred_fallthru
      _
    // Predicated region
    $region22: #{tpu_custom_call.1} parent=1 // pred_check
      _
    $region23: #{tpu_custom_call.1} parent=1 // pred_check_branch
      %53 = sbr.rel (0) target = $region25
    $region24: #{tpu_custom_call.1} parent=1 // pred_region
      %54 = dma.done [#allocation5], 4608
    $region25: #{tpu_custom_call.1} parent=1 // pred_fallthru
      _
    %v56 = vld [vmem:[#allocation2] sm:$0xff]
    %v57 = vld [vmem:[#allocation2 + $0x8] sm:$0xff]
    %v58 = vld [vmem:[#allocation2 + $0x10] sm:$0xff]
    %v59 = vld [vmem:[#allocation2 + $0x18] sm:$0xff]
    %v60 = vld [vmem:[#allocation4] sm:$0xf]
    %v61 = vld [vmem:[#allocation4 + $0x4] sm:$0xf]
    %v62 = vld [vmem:[#allocation4 + $0x8] sm:$0xf]
    %v63 = vld [vmem:[#allocation4 + $0xc] sm:$0xf]
    %v64 = vpack.c.bf16 %v57, %v56
    %v65 = vpack.c.bf16 %v59, %v58
    %v66 = vld [vmem:[#allocation6] sm:$0x1]
    %v67 = vlaneseq
    %v68 = vshrl.u32 %v67, 7
    %v69 = vsub.s32 0, %v68
    %v70 = vrot.slane %v66, %v69
    %v75 = vunpack.c.l.b16 %v60
    %v76 = vunpack.c.l.b16 %v61
    %v77 = vunpack.c.l.b16 %v62
    %v78 = vunpack.c.l.b16 %v63
    %v79 = vpack.c.b16 %v76, %v75
    %v80 = vpack.c.b16 %v78, %v77
    %vm83 = vcmask 261120
    %v85 = vsel %vm83, %v64, 0
    %v88 = vsel %vm83, %v65, 0
    %90 = vmatprep.subr.bf16.mxu0 0
    %91 = vmatpush1.bf16.msra.mxu0 0
    %92 = vmatprep.subr.bf16.mxu0 0
    %93 = vmatpush1.bf16.msra.mxu0 0
    %94 = vmatprep.subr.bf16.mxu0 0
    %95 = vmatpush1.bf16.msra.mxu0 0
    %96 = vmatprep.subr.bf16.mxu0 0
    %97 = vmatpush1.bf16.msra.mxu0 0
    %98 = vmatprep.subr.bf16.mxu0 0
    %99 = vmatpush1.bf16.msra.mxu0 0
    %100 = vmatprep.subr.bf16.mxu0 0
    %101 = vmatpush1.bf16.msra.mxu0 0
    %102 = vmatprep.subr.bf16.mxu0 0
    %103 = vmatpush1.bf16.msra.mxu0 %v80
    %104 = vmatprep.subr.bf16.mxu0 0
    %105 = vmatpush1.bf16.msra.mxu0 %v79
    %106 = vmatprep.subr.bf16.mxu0 0
    %107 = vmatpush2.bf16.msra.mxu0 0
    %108 = vmatprep.subr.bf16.mxu0 0
    %109 = vmatpush2.bf16.msra.mxu0 0
    %110 = vmatprep.subr.bf16.mxu0 0
    %111 = vmatpush2.bf16.msra.mxu0 0
    %112 = vmatprep.subr.bf16.mxu0 0
    %113 = vmatpush2.bf16.msra.mxu0 0
    %114 = vmatprep.subr.bf16.mxu0 0
    %115 = vmatpush2.bf16.msra.mxu0 0
    %116 = vmatprep.subr.bf16.mxu0 0
    %117 = vmatpush2.bf16.msra.mxu0 0
    %118 = vmatprep.subr.bf16.mxu0 0
    %119 = vmatpush2.bf16.msra.mxu0 0
    %120 = vmatprep.subr.bf16.mxu0 0
    %121 = vmatpush2.bf16.msra.mxu0 0
    %122 = vmatprep.mubr.bf16.mxu0 0
    %123 = vmatmul.mubr.bf16.gmra.mxu0 %v85
    %v124 = vpop.f32.mrf.mxu0
    %v125 = vadd.f32 %v70, %v124
    %v126 = vpop.f32.mrf.mxu0
    %v127 = vpop.f32.mrf.mxu0
    %v128 = vadd.f32 %v70, %v127
    %v129 = vpop.f32.mrf.mxu0
    %130 = vmatprep.mubr.bf16.mxu0 0
    %131 = vmatmul.mubr.bf16.gmra.mxu0 %v88
    %v132 = vpop.f32.mrf.mxu0
    %v133 = vadd.f32 %v70, %v132
    %v134 = vpop.f32.mrf.mxu0
    %v135 = vpop.f32.mrf.mxu0
    %v136 = vadd.f32 %v70, %v135
    %v137 = vpop.f32.mrf.mxu0
    %138 = vdwg.mxu0
    %v139 = vld [vmem:[#allocation6 + $0x2] sm:$0x1]
    %vm140 = vcmp.gt.f32.partialorder %v125, 0.0
    %vm141 = vcmp.gt.f32.partialorder %v128, 0.0
    %vm142 = vcmp.gt.f32.partialorder %v133, 0.0
    %vm143 = vcmp.gt.f32.partialorder %v136, 0.0
    %v144 = vlaneseq
    %v145 = vshrl.u32 %v144, 7
    %v146 = vsub.s32 0, %v145
    %v147 = vrot.slane %v139, %v146
    %v148 = vmul.f32 %v147, %v125
    %v149 = vmul.f32 %v147, %v128
    %v150 = vmul.f32 %v147, %v133
    %v151 = vmul.f32 %v147, %v136
    %v152 = vsel %vm140, %v125, %v148
    %v153 = vsel %vm141, %v128, %v149
    %v154 = vsel %vm142, %v133, %v150
    %v155 = vsel %vm143, %v136, %v151
    %v156 = vld [vmem:[#allocation4 + $0x10] sm:$0xf]
    %v157 = vld [vmem:[#allocation4 + $0x14] sm:$0xf]
    %v158 = vld [vmem:[#allocation4 + $0x18] sm:$0xf]
    %v159 = vld [vmem:[#allocation4 + $0x1c] sm:$0xf]
    %v160 = vpack.c.bf16 %v153, %v152
    %v161 = vpack.c.bf16 %v155, %v154
    %v162 = vld [vmem:[#allocation6 + $0x1] sm:$0x1]
    %v163 = vlaneseq
    %v164 = vshrl.u32 %v163, 7
    %v165 = vsub.s32 0, %v164
    %v166 = vrot.slane %v162, %v165
    %v171 = vunpack.c.l.b16 %v156
    %v172 = vunpack.c.l.b16 %v157
    %v173 = vunpack.c.l.b16 %v158
    %v174 = vunpack.c.l.b16 %v159
    %v175 = vpack.c.b16 %v172, %v171
    %v176 = vpack.c.b16 %v174, %v173
    %v180 = vsel %vm83, %v160, 0
    %v183 = vsel %vm83, %v161, 0
    %185 = vmatprep.subr.bf16.mxu0 0
    %186 = vmatpush1.bf16.msra.mxu0 0
    %187 = vmatprep.subr.bf16.mxu0 0
    %188 = vmatpush1.bf16.msra.mxu0 0
    %189 = vmatprep.subr.bf16.mxu0 0
    %190 = vmatpush1.bf16.msra.mxu0 0
    %191 = vmatprep.subr.bf16.mxu0 0
    %192 = vmatpush1.bf16.msra.mxu0 0
    %193 = vmatprep.subr.bf16.mxu0 0
    %194 = vmatpush1.bf16.msra.mxu0 0
    %195 = vmatprep.subr.bf16.mxu0 0
    %196 = vmatpush1.bf16.msra.mxu0 0
    %197 = vmatprep.subr.bf16.mxu0 0
    %198 = vmatpush1.bf16.msra.mxu0 %v176
    %199 = vmatprep.subr.bf16.mxu0 0
    %200 = vmatpush1.bf16.msra.mxu0 %v175
    %201 = vmatprep.subr.bf16.mxu0 0
    %202 = vmatpush2.bf16.msra.mxu0 0
    %203 = vmatprep.subr.bf16.mxu0 0
    %204 = vmatpush2.bf16.msra.mxu0 0
    %205 = vmatprep.subr.bf16.mxu0 0
    %206 = vmatpush2.bf16.msra.mxu0 0
    %207 = vmatprep.subr.bf16.mxu0 0
    %208 = vmatpush2.bf16.msra.mxu0 0
    %209 = vmatprep.subr.bf16.mxu0 0
    %210 = vmatpush2.bf16.msra.mxu0 0
    %211 = vmatprep.subr.bf16.mxu0 0
    %212 = vmatpush2.bf16.msra.mxu0 0
    %213 = vmatprep.subr.bf16.mxu0 0
    %214 = vmatpush2.bf16.msra.mxu0 0
    %215 = vmatprep.subr.bf16.mxu0 0
    %216 = vmatpush2.bf16.msra.mxu0 0
    %217 = vmatprep.mubr.bf16.mxu0 0
    %218 = vmatmul.mubr.bf16.gmra.mxu0 %v180
    %v219 = vpop.f32.mrf.mxu0
    %v220 = vadd.f32 %v166, %v219
    %v221 = vpop.f32.mrf.mxu0
    %v222 = vpop.f32.mrf.mxu0
    %v223 = vadd.f32 %v166, %v222
    %v224 = vpop.f32.mrf.mxu0
    %225 = vmatprep.mubr.bf16.mxu0 0
    %226 = vmatmul.mubr.bf16.gmra.mxu0 %v183
    %v227 = vpop.f32.mrf.mxu0
    %v228 = vadd.f32 %v166, %v227
    %v229 = vpop.f32.mrf.mxu0
    %v230 = vpop.f32.mrf.mxu0
    %v231 = vadd.f32 %v166, %v230
    %v232 = vpop.f32.mrf.mxu0
    %233 = vdwg.mxu0
    %v234 = vld [vmem:[#allocation6 + $0x3] sm:$0x1]
    %vm235 = vcmp.gt.f32.partialorder %v220, 0.0
    %vm236 = vcmp.gt.f32.partialorder %v223, 0.0
    %vm237 = vcmp.gt.f32.partialorder %v228, 0.0
    %vm238 = vcmp.gt.f32.partialorder %v231, 0.0
    %v239 = vlaneseq
    %v240 = vshrl.u32 %v239, 7
    %v241 = vsub.s32 0, %v240
    %v242 = vrot.slane %v234, %v241
    %v243 = vmul.f32 %v242, %v220
    %v244 = vmul.f32 %v242, %v223
    %v245 = vmul.f32 %v242, %v228
    %v246 = vmul.f32 %v242, %v231
    %v247 = vsel %vm235, %v220, %v243
    %v248 = vsel %vm236, %v223, %v244
    %v249 = vsel %vm237, %v228, %v245
    %v250 = vsel %vm238, %v231, %v246
    %v251 = vld [vmem:[#allocation6 + $0x20] sm:$0xff]
    %v252 = vld [vmem:[#allocation6 + $0x28] sm:$0xff]
    %v253 = vld [vmem:[#allocation6 + $0x30] sm:$0xff]
    %v254 = vld [vmem:[#allocation6 + $0x38] sm:$0xff]
    %v255 = vld [vmem:[#allocation6 + $0x40] sm:$0xff]
    %v256 = vld [vmem:[#allocation6 + $0x48] sm:$0xff]
    %v257 = vld [vmem:[#allocation6 + $0x50] sm:$0xff]
    %v258 = vld [vmem:[#allocation6 + $0x58] sm:$0xff]
    %v259 = vld [vmem:[#allocation6 + $0x60] sm:$0xff]
    %v260 = vld [vmem:[#allocation6 + $0x68] sm:$0xff]
    %v261 = vld [vmem:[#allocation6 + $0x70] sm:$0xff]
    %v262 = vld [vmem:[#allocation6 + $0x78] sm:$0xff]
    %v263 = vld [vmem:[#allocation6 + $0x80] sm:$0xff]
    %v264 = vld [vmem:[#allocation6 + $0x88] sm:$0xff]
    %v265 = vld [vmem:[#allocation6 + $0x90] sm:$0xff]
    %v266 = vld [vmem:[#allocation6 + $0x98] sm:$0xff]
    %v267 = vld [vmem:[#allocation6 + $0xa0] sm:$0xff]
    %v268 = vld [vmem:[#allocation6 + $0xa8] sm:$0xff]
    %v269 = vld [vmem:[#allocation6 + $0xb0] sm:$0xff]
    %v270 = vld [vmem:[#allocation6 + $0xb8] sm:$0xff]
    %v271 = vld [vmem:[#allocation6 + $0xc0] sm:$0xff]
    %v272 = vld [vmem:[#allocation6 + $0xc8] sm:$0xff]
    %v273 = vld [vmem:[#allocation6 + $0xd0] sm:$0xff]
    %v274 = vld [vmem:[#allocation6 + $0xd8] sm:$0xff]
    %v275 = vld [vmem:[#allocation6 + $0xe0] sm:$0xff]
    %v276 = vld [vmem:[#allocation6 + $0xe8] sm:$0xff]
    %v277 = vld [vmem:[#allocation6 + $0xf0] sm:$0xff]
    %v278 = vld [vmem:[#allocation6 + $0xf8] sm:$0xff]
    %v279 = vld [vmem:[#allocation6 + $0x100] sm:$0xff]
    %v280 = vld [vmem:[#allocation6 + $0x108] sm:$0xff]
    %v281 = vld [vmem:[#allocation6 + $0x110] sm:$0xff]
    %v282 = vld [vmem:[#allocation6 + $0x118] sm:$0xff]
    %v283 = vld [vmem:[#allocation4 + $0x20] sm:$0xf]
    %v284 = vld [vmem:[#allocation4 + $0x24] sm:$0xf]
    %v285 = vld [vmem:[#allocation4 + $0x28] sm:$0xf]
    %v286 = vld [vmem:[#allocation4 + $0x2c] sm:$0xf]
    %v287 = vlaneseq
    %v288 = vshrl.u32 %v287, 7
    %v289 = vadd.s32 %v288, 8
    %v290 = vadd.s32 %v288, 16
    %v291 = vadd.s32 %v288, 24
    %v292 = vadd.s32 %v288, 32
    %v293 = vadd.s32 %v288, 40
    %v294 = vadd.s32 %v288, 48
    %v295 = vadd.s32 %v288, 56
    %v296 = vadd.s32 %v288, 64
    %v297 = vadd.s32 %v288, 72
    %v298 = vadd.s32 %v288, 80
    %v299 = vadd.s32 %v288, 88
    %v300 = vadd.s32 %v288, 96
    %v301 = vadd.s32 %v288, 104
    %v302 = vadd.s32 %v288, 112
    %v303 = vadd.s32 %v288, 120
    %vm304 = vcmp.lt.s32.totalorder %v288, 0
    %v305 = vsub.s32 0, %v288
    %v306 = vsel %vm304, %v305, %v288
    %v307 = vshrl.u32 %v306, 4
    %v308 = vand.u32 %v306, 15
    %v309 = vsub.s32 0, %v308
    %v310 = vsel %vm304, %v309, %v308
    %vm311 = vcmp.lt.s32.totalorder %v289, 0
    %v312 = vsub.s32 0, %v289
    %v313 = vsel %vm311, %v312, %v289
    %v314 = vshrl.u32 %v313, 4
    %v315 = vand.u32 %v313, 15
    %v316 = vsub.s32 0, %v315
    %v317 = vsel %vm311, %v316, %v315
    %vm318 = vcmp.lt.s32.totalorder %v290, 0
    %v319 = vsub.s32 0, %v290
    %v320 = vsel %vm318, %v319, %v290
    %v321 = vshrl.u32 %v320, 4
    %v322 = vand.u32 %v320, 15
    %v323 = vsub.s32 0, %v322
    %v324 = vsel %vm318, %v323, %v322
    %vm325 = vcmp.lt.s32.totalorder %v291, 0
    %v326 = vsub.s32 0, %v291
    %v327 = vsel %vm325, %v326, %v291
    %v328 = vshrl.u32 %v327, 4
    %v329 = vand.u32 %v327, 15
    %v330 = vsub.s32 0, %v329
    %v331 = vsel %vm325, %v330, %v329
    %vm332 = vcmp.lt.s32.totalorder %v292, 0
    %v333 = vsub.s32 0, %v292
    %v334 = vsel %vm332, %v333, %v292
    %v335 = vshrl.u32 %v334, 4
    %v336 = vand.u32 %v334, 15
    %v337 = vsub.s32 0, %v336
    %v338 = vsel %vm332, %v337, %v336
    %vm339 = vcmp.lt.s32.totalorder %v293, 0
    %v340 = vsub.s32 0, %v293
    %v341 = vsel %vm339, %v340, %v293
    %v342 = vshrl.u32 %v341, 4
    %v343 = vand.u32 %v341, 15
    %v344 = vsub.s32 0, %v343
    %v345 = vsel %vm339, %v344, %v343
    %vm346 = vcmp.lt.s32.totalorder %v294, 0
    %v347 = vsub.s32 0, %v294
    %v348 = vsel %vm346, %v347, %v294
    %v349 = vshrl.u32 %v348, 4
    %v350 = vand.u32 %v348, 15
    %v351 = vsub.s32 0, %v350
    %v352 = vsel %vm346, %v351, %v350
    %vm353 = vcmp.lt.s32.totalorder %v295, 0
    %v354 = vsub.s32 0, %v295
    %v355 = vsel %vm353, %v354, %v295
    %v356 = vshrl.u32 %v355, 4
    %v357 = vand.u32 %v355, 15
    %v358 = vsub.s32 0, %v357
    %v359 = vsel %vm353, %v358, %v357
    %vm360 = vcmp.lt.s32.totalorder %v296, 0
    %v361 = vsub.s32 0, %v296
    %v362 = vsel %vm360, %v361, %v296
    %v363 = vshrl.u32 %v362, 4
    %v364 = vand.u32 %v362, 15
    %v365 = vsub.s32 0, %v364
    %v366 = vsel %vm360, %v365, %v364
    %vm367 = vcmp.lt.s32.totalorder %v297, 0
    %v368 = vsub.s32 0, %v297
    %v369 = vsel %vm367, %v368, %v297
    %v370 = vshrl.u32 %v369, 4
    %v371 = vand.u32 %v369, 15
    %v372 = vsub.s32 0, %v371
    %v373 = vsel %vm367, %v372, %v371
    %vm374 = vcmp.lt.s32.totalorder %v298, 0
    %v375 = vsub.s32 0, %v298
    %v376 = vsel %vm374, %v375, %v298
    %v377 = vshrl.u32 %v376, 4
    %v378 = vand.u32 %v376, 15
    %v379 = vsub.s32 0, %v378
    %v380 = vsel %vm374, %v379, %v378
    %vm381 = vcmp.lt.s32.totalorder %v299, 0
    %v382 = vsub.s32 0, %v299
    %v383 = vsel %vm381, %v382, %v299
    %v384 = vshrl.u32 %v383, 4
    %v385 = vand.u32 %v383, 15
    %v386 = vsub.s32 0, %v385
    %v387 = vsel %vm381, %v386, %v385
    %vm388 = vcmp.lt.s32.totalorder %v300, 0
    %v389 = vsub.s32 0, %v300
    %v390 = vsel %vm388, %v389, %v300
    %v391 = vshrl.u32 %v390, 4
    %v392 = vand.u32 %v390, 15
    %v393 = vsub.s32 0, %v392
    %v394 = vsel %vm388, %v393, %v392
    %vm395 = vcmp.lt.s32.totalorder %v301, 0
    %v396 = vsub.s32 0, %v301
    %v397 = vsel %vm395, %v396, %v301
    %v398 = vshrl.u32 %v397, 4
    %v399 = vand.u32 %v397, 15
    %v400 = vsub.s32 0, %v399
    %v401 = vsel %vm395, %v400, %v399
    %vm402 = vcmp.lt.s32.totalorder %v302, 0
    %v403 = vsub.s32 0, %v302
    %v404 = vsel %vm402, %v403, %v302
    %v405 = vshrl.u32 %v404, 4
    %v406 = vand.u32 %v404, 15
    %v407 = vsub.s32 0, %v406
    %v408 = vsel %vm402, %v407, %v406
    %vm409 = vcmp.lt.s32.totalorder %v303, 0
    %v410 = vsub.s32 0, %v303
    %v411 = vsel %vm409, %v410, %v303
    %v412 = vshrl.u32 %v411, 4
    %v413 = vand.u32 %v411, 15
    %v414 = vsub.s32 0, %v413
    %v415 = vsel %vm409, %v414, %v413
    %vm416 = vcmp.ne.s32.totalorder %v310, 0
    %vm417 = vcmp.ne.s32.totalorder %v317, 0
    %vm418 = vcmp.ne.s32.totalorder %v324, 0
    %vm419 = vcmp.ne.s32.totalorder %v331, 0
    %vm420 = vcmp.ne.s32.totalorder %v338, 0
    %vm421 = vcmp.ne.s32.totalorder %v345, 0
    %vm422 = vcmp.ne.s32.totalorder %v352, 0
    %vm423 = vcmp.ne.s32.totalorder %v359, 0
    %vm424 = vcmp.ne.s32.totalorder %v366, 0
    %vm425 = vcmp.ne.s32.totalorder %v373, 0
    %vm426 = vcmp.ne.s32.totalorder %v380, 0
    %vm427 = vcmp.ne.s32.totalorder %v387, 0
    %vm428 = vcmp.ne.s32.totalorder %v394, 0
    %vm429 = vcmp.ne.s32.totalorder %v401, 0
    %vm430 = vcmp.ne.s32.totalorder %v408, 0
    %vm431 = vcmp.ne.s32.totalorder %v415, 0
    %vm432 = vcmp.lt.s32.totalorder %v310, 0
    %vm433 = vcmp.lt.s32.totalorder %v317, 0
    %vm434 = vcmp.lt.s32.totalorder %v324, 0
    %vm435 = vcmp.lt.s32.totalorder %v331, 0
    %vm436 = vcmp.lt.s32.totalorder %v338, 0
    %vm437 = vcmp.lt.s32.totalorder %v345, 0
    %vm438 = vcmp.lt.s32.totalorder %v352, 0
    %vm439 = vcmp.lt.s32.totalorder %v359, 0
    %vm440 = vcmp.lt.s32.totalorder %v366, 0
    %vm441 = vcmp.lt.s32.totalorder %v373, 0
    %vm442 = vcmp.lt.s32.totalorder %v380, 0
    %vm443 = vcmp.lt.s32.totalorder %v387, 0
    %vm444 = vcmp.lt.s32.totalorder %v394, 0
    %vm445 = vcmp.lt.s32.totalorder %v401, 0
    %vm446 = vcmp.lt.s32.totalorder %v408, 0
    %vm447 = vcmp.lt.s32.totalorder %v415, 0
    %vm448 = vmand %vm432, %vm416
    %vm449 = vmand %vm433, %vm417
    %vm450 = vmand %vm434, %vm418
    %vm451 = vmand %vm435, %vm419
    %vm452 = vmand %vm436, %vm420
    %vm453 = vmand %vm437, %vm421
    %vm454 = vmand %vm438, %vm422
    %vm455 = vmand %vm439, %vm423
    %vm456 = vmand %vm440, %vm424
    %vm457 = vmand %vm441, %vm425
    %vm458 = vmand %vm442, %vm426
    %vm459 = vmand %vm443, %vm427
    %vm460 = vmand %vm444, %vm428
    %vm461 = vmand %vm445, %vm429
    %vm462 = vmand %vm446, %vm430
    %vm463 = vmand %vm447, %vm431
    %v464 = vadd.s32 %v310, 16
    %v465 = vadd.s32 %v317, 16
    %v466 = vadd.s32 %v324, 16
    %v467 = vadd.s32 %v331, 16
    %v468 = vadd.s32 %v338, 16
    %v469 = vadd.s32 %v345, 16
    %v470 = vadd.s32 %v352, 16
    %v471 = vadd.s32 %v359, 16
    %v472 = vadd.s32 %v366, 16
    %v473 = vadd.s32 %v373, 16
    %v474 = vadd.s32 %v380, 16
    %v475 = vadd.s32 %v387, 16
    %v476 = vadd.s32 %v394, 16
    %v477 = vadd.s32 %v401, 16
    %v478 = vadd.s32 %v408, 16
    %v479 = vadd.s32 %v415, 16
    %v480 = vsel %vm448, %v464, %v310
    %v481 = vsel %vm449, %v465, %v317
    %v482 = vsel %vm450, %v466, %v324
    %v483 = vsel %vm451, %v467, %v331
    %v484 = vsel %vm452, %v468, %v338
    %v485 = vsel %vm453, %v469, %v345
    %v486 = vsel %vm454, %v470, %v352
    %v487 = vsel %vm455, %v471, %v359
    %v488 = vsel %vm456, %v472, %v366
    %v489 = vsel %vm457, %v473, %v373
    %v490 = vsel %vm458, %v474, %v380
    %v491 = vsel %vm459, %v475, %v387
    %v492 = vsel %vm460, %v476, %v394
    %v493 = vsel %vm461, %v477, %v401
    %v494 = vsel %vm462, %v478, %v408
    %v495 = vsel %vm463, %v479, %v415
    %v496 = vsub.s32 15, %v480
    %v497 = vsub.s32 15, %v481
    %v498 = vsub.s32 15, %v482
    %v499 = vsub.s32 15, %v483
    %v500 = vsub.s32 15, %v484
    %v501 = vsub.s32 15, %v485
    %v502 = vsub.s32 15, %v486
    %v503 = vsub.s32 15, %v487
    %v504 = vsub.s32 15, %v488
    %v505 = vsub.s32 15, %v489
    %v506 = vsub.s32 15, %v490
    %v507 = vsub.s32 15, %v491
    %v508 = vsub.s32 15, %v492
    %v509 = vsub.s32 15, %v493
    %v510 = vsub.s32 15, %v494
    %v511 = vsub.s32 15, %v495
    %v512 = vand.u32 %v496, 1
    %v513 = vand.u32 %v497, 1
    %v514 = vand.u32 %v498, 1
    %v515 = vand.u32 %v499, 1
    %v516 = vand.u32 %v500, 1
    %v517 = vand.u32 %v501, 1
    %v518 = vand.u32 %v502, 1
    %v519 = vand.u32 %v503, 1
    %v520 = vand.u32 %v504, 1
    %v521 = vand.u32 %v505, 1
    %v522 = vand.u32 %v506, 1
    %v523 = vand.u32 %v507, 1
    %v524 = vand.u32 %v508, 1
    %v525 = vand.u32 %v509, 1
    %v526 = vand.u32 %v510, 1
    %v527 = vand.u32 %v511, 1
    %vm528 = vcmp.eq.s32.totalorder %v512, 1
    %vm529 = vcmp.eq.s32.totalorder %v513, 1
    %vm530 = vcmp.eq.s32.totalorder %v514, 1
    %vm531 = vcmp.eq.s32.totalorder %v515, 1
    %vm532 = vcmp.eq.s32.totalorder %v516, 1
    %vm533 = vcmp.eq.s32.totalorder %v517, 1
    %vm534 = vcmp.eq.s32.totalorder %v518, 1
    %vm535 = vcmp.eq.s32.totalorder %v519, 1
    %vm536 = vcmp.eq.s32.totalorder %v520, 1
    %vm537 = vcmp.eq.s32.totalorder %v521, 1
    %vm538 = vcmp.eq.s32.totalorder %v522, 1
    %vm539 = vcmp.eq.s32.totalorder %v523, 1
    %vm540 = vcmp.eq.s32.totalorder %v524, 1
    %vm541 = vcmp.eq.s32.totalorder %v525, 1
    %vm542 = vcmp.eq.s32.totalorder %v526, 1
    %vm543 = vcmp.eq.s32.totalorder %v527, 1
    %v544 = vshra.s32 %v496, 1
    %v545 = vshra.s32 %v497, 1
    %v546 = vshra.s32 %v498, 1
    %v547 = vshra.s32 %v499, 1
    %v548 = vshra.s32 %v500, 1
    %v549 = vshra.s32 %v501, 1
    %v550 = vshra.s32 %v502, 1
    %v551 = vshra.s32 %v503, 1
    %v552 = vshra.s32 %v504, 1
    %v553 = vshra.s32 %v505, 1
    %v554 = vshra.s32 %v506, 1
    %v555 = vshra.s32 %v507, 1
    %v556 = vshra.s32 %v508, 1
    %v557 = vshra.s32 %v509, 1
    %v558 = vshra.s32 %v510, 1
    %v559 = vshra.s32 %v511, 1
    %v560 = vand.u32 %v544, 1
    %v561 = vand.u32 %v545, 1
    %v562 = vand.u32 %v546, 1
    %v563 = vand.u32 %v547, 1
    %v564 = vand.u32 %v548, 1
    %v565 = vand.u32 %v549, 1
    %v566 = vand.u32 %v550, 1
    %v567 = vand.u32 %v551, 1
    %v568 = vand.u32 %v552, 1
    %v569 = vand.u32 %v553, 1
    %v570 = vand.u32 %v554, 1
    %v571 = vand.u32 %v555, 1
    %v572 = vand.u32 %v556, 1
    %v573 = vand.u32 %v557, 1
    %v574 = vand.u32 %v558, 1
    %v575 = vand.u32 %v559, 1
    %vm576 = vcmp.eq.s32.totalorder %v560, 1
    %vm577 = vcmp.eq.s32.totalorder %v561, 1
    %vm578 = vcmp.eq.s32.totalorder %v562, 1
    %vm579 = vcmp.eq.s32.totalorder %v563, 1
    %vm580 = vcmp.eq.s32.totalorder %v564, 1
    %vm581 = vcmp.eq.s32.totalorder %v565, 1
    %vm582 = vcmp.eq.s32.totalorder %v566, 1
    %vm583 = vcmp.eq.s32.totalorder %v567, 1
    %vm584 = vcmp.eq.s32.totalorder %v568, 1
    %vm585 = vcmp.eq.s32.totalorder %v569, 1
    %vm586 = vcmp.eq.s32.totalorder %v570, 1
    %vm587 = vcmp.eq.s32.totalorder %v571, 1
    %vm588 = vcmp.eq.s32.totalorder %v572, 1
    %vm589 = vcmp.eq.s32.totalorder %v573, 1
    %vm590 = vcmp.eq.s32.totalorder %v574, 1
    %vm591 = vcmp.eq.s32.totalorder %v575, 1
    %v592 = vshra.s32 %v496, 2
    %v593 = vshra.s32 %v497, 2
    %v594 = vshra.s32 %v498, 2
    %v595 = vshra.s32 %v499, 2
    %v596 = vshra.s32 %v500, 2
    %v597 = vshra.s32 %v501, 2
    %v598 = vshra.s32 %v502, 2
    %v599 = vshra.s32 %v503, 2
    %v600 = vshra.s32 %v504, 2
    %v601 = vshra.s32 %v505, 2
    %v602 = vshra.s32 %v506, 2
    %v603 = vshra.s32 %v507, 2
    %v604 = vshra.s32 %v508, 2
    %v605 = vshra.s32 %v509, 2
    %v606 = vshra.s32 %v510, 2
    %v607 = vshra.s32 %v511, 2
    %v608 = vand.u32 %v592, 1
    %v609 = vand.u32 %v593, 1
    %v610 = vand.u32 %v594, 1
    %v611 = vand.u32 %v595, 1
    %v612 = vand.u32 %v596, 1
    %v613 = vand.u32 %v597, 1
    %v614 = vand.u32 %v598, 1
    %v615 = vand.u32 %v599, 1
    %v616 = vand.u32 %v600, 1
    %v617 = vand.u32 %v601, 1
    %v618 = vand.u32 %v602, 1
    %v619 = vand.u32 %v603, 1
    %v620 = vand.u32 %v604, 1
    %v621 = vand.u32 %v605, 1
    %v622 = vand.u32 %v606, 1
    %v623 = vand.u32 %v607, 1
    %vm624 = vcmp.eq.s32.totalorder %v608, 1
    %vm625 = vcmp.eq.s32.totalorder %v609, 1
    %vm626 = vcmp.eq.s32.totalorder %v610, 1
    %vm627 = vcmp.eq.s32.totalorder %v611, 1
    %vm628 = vcmp.eq.s32.totalorder %v612, 1
    %vm629 = vcmp.eq.s32.totalorder %v613, 1
    %vm630 = vcmp.eq.s32.totalorder %v614, 1
    %vm631 = vcmp.eq.s32.totalorder %v615, 1
    %vm632 = vcmp.eq.s32.totalorder %v616, 1
    %vm633 = vcmp.eq.s32.totalorder %v617, 1
    %vm634 = vcmp.eq.s32.totalorder %v618, 1
    %vm635 = vcmp.eq.s32.totalorder %v619, 1
    %vm636 = vcmp.eq.s32.totalorder %v620, 1
    %vm637 = vcmp.eq.s32.totalorder %v621, 1
    %vm638 = vcmp.eq.s32.totalorder %v622, 1
    %vm639 = vcmp.eq.s32.totalorder %v623, 1
    %v640 = vshra.s32 %v496, 3
    %v641 = vshra.s32 %v497, 3
    %v642 = vshra.s32 %v498, 3
    %v643 = vshra.s32 %v499, 3
    %v644 = vshra.s32 %v500, 3
    %v645 = vshra.s32 %v501, 3
    %v646 = vshra.s32 %v502, 3
    %v647 = vshra.s32 %v503, 3
    %v648 = vshra.s32 %v504, 3
    %v649 = vshra.s32 %v505, 3
    %v650 = vshra.s32 %v506, 3
    %v651 = vshra.s32 %v507, 3
    %v652 = vshra.s32 %v508, 3
    %v653 = vshra.s32 %v509, 3
    %v654 = vshra.s32 %v510, 3
    %v655 = vshra.s32 %v511, 3
    %v656 = vand.u32 %v640, 1
    %v657 = vand.u32 %v641, 1
    %v658 = vand.u32 %v642, 1
    %v659 = vand.u32 %v643, 1
    %v660 = vand.u32 %v644, 1
    %v661 = vand.u32 %v645, 1
    %v662 = vand.u32 %v646, 1
    %v663 = vand.u32 %v647, 1
    %v664 = vand.u32 %v648, 1
    %v665 = vand.u32 %v649, 1
    %v666 = vand.u32 %v650, 1
    %v667 = vand.u32 %v651, 1
    %v668 = vand.u32 %v652, 1
    %v669 = vand.u32 %v653, 1
    %v670 = vand.u32 %v654, 1
    %v671 = vand.u32 %v655, 1
    %vm672 = vcmp.eq.s32.totalorder %v656, 1
    %vm673 = vcmp.eq.s32.totalorder %v657, 1
    %vm674 = vcmp.eq.s32.totalorder %v658, 1
    %vm675 = vcmp.eq.s32.totalorder %v659, 1
    %vm676 = vcmp.eq.s32.totalorder %v660, 1
    %vm677 = vcmp.eq.s32.totalorder %v661, 1
    %vm678 = vcmp.eq.s32.totalorder %v662, 1
    %vm679 = vcmp.eq.s32.totalorder %v663, 1
    %vm680 = vcmp.eq.s32.totalorder %v664, 1
    %vm681 = vcmp.eq.s32.totalorder %v665, 1
    %vm682 = vcmp.eq.s32.totalorder %v666, 1
    %vm683 = vcmp.eq.s32.totalorder %v667, 1
    %vm684 = vcmp.eq.s32.totalorder %v668, 1
    %vm685 = vcmp.eq.s32.totalorder %v669, 1
    %vm686 = vcmp.eq.s32.totalorder %v670, 1
    %vm687 = vcmp.eq.s32.totalorder %v671, 1
    %v688 = vld [vmem:[#allocation6 + $0x9] sm:$0x1]
    %v689 = vld [vmem:[#allocation6 + $0xa] sm:$0x1]
    %v690 = vsel %vm83, %v247, 0.0
    %691 = vadd.xlane.f32.xlu0 %v690
    %v692 = vpop.xlane.xlu0 %691
    %v693 = vsel %vm83, %v248, 0.0
    %694 = vadd.xlane.f32.xlu0 %v693
    %v695 = vpop.xlane.xlu0 %694
    %v696 = vsel %vm83, %v249, 0.0
    %697 = vadd.xlane.f32.xlu0 %v696
    %v698 = vpop.xlane.xlu0 %697
    %v699 = vsel %vm83, %v250, 0.0
    %700 = vadd.xlane.f32.xlu0 %v699
    %v701 = vpop.xlane.xlu0 %700
    %v702 = vrcp.pop 32.0
    %v703 = vmul.f32 %v692, %v702
    %v704 = vmul.f32 %v695, %v702
    %v705 = vmul.f32 %v698, %v702
    %v706 = vmul.f32 %v701, %v702
    %v707 = vsub.f32 %v247, %v703
    %v708 = vsub.f32 %v248, %v704
    %v709 = vsub.f32 %v249, %v705
    %v710 = vsub.f32 %v250, %v706
    %v711 = vmul.f32 %v707, %v707
    %v712 = vmul.f32 %v708, %v708
    %v713 = vmul.f32 %v709, %v709
    %v714 = vmul.f32 %v710, %v710
    %v715 = vsel %vm83, %v711, 0.0
    %716 = vadd.xlane.f32.xlu0 %v715
    %v717 = vpop.xlane.xlu0 %716
    %v718 = vsel %vm83, %v712, 0.0
    %719 = vadd.xlane.f32.xlu0 %v718
    %v720 = vpop.xlane.xlu0 %719
    %v721 = vsel %vm83, %v713, 0.0
    %722 = vadd.xlane.f32.xlu0 %v721
    %v723 = vpop.xlane.xlu0 %722
    %v724 = vsel %vm83, %v714, 0.0
    %725 = vadd.xlane.f32.xlu0 %v724
    %v726 = vpop.xlane.xlu0 %725
    %v727 = vmul.f32 %v717, %v702
    %v728 = vmul.f32 %v720, %v702
    %v729 = vmul.f32 %v723, %v702
    %v730 = vmul.f32 %v726, %v702
    %v731 = vadd.f32 %v727, 1e-05
    %v732 = vadd.f32 %v728, 1e-05
    %v733 = vadd.f32 %v729, 1e-05
    %v734 = vadd.f32 %v730, 1e-05
    %v735 = vrsqrt.pop %v731
    %v736 = vrsqrt.pop %v732
    %v737 = vrsqrt.pop %v733
    %v738 = vrsqrt.pop %v734
    %v739 = vmul.f32 %v707, %v735
    %v740 = vmul.f32 %v708, %v736
    %v741 = vmul.f32 %v709, %v737
    %v742 = vmul.f32 %v710, %v738
    %v743 = vlaneseq
    %v744 = vshrl.u32 %v743, 7
    %v745 = vsub.s32 0, %v744
    %v746 = vrot.slane %v688, %v745
    %v747 = vmul.f32 %v739, %v746
    %v748 = vmul.f32 %v740, %v746
    %v749 = vmul.f32 %v741, %v746
    %v750 = vmul.f32 %v742, %v746
    %v751 = vlaneseq
    %v752 = vshrl.u32 %v751, 7
    %v753 = vsub.s32 0, %v752
    %v754 = vrot.slane %v689, %v753
    %v755 = vadd.f32 %v747, %v754
    %v756 = vadd.f32 %v748, %v754
    %v757 = vadd.f32 %v749, %v754
    %v758 = vadd.f32 %v750, %v754
    %v759 = vld [vmem:[#allocation4 + $0x30] sm:$0xf]
    %v760 = vld [vmem:[#allocation4 + $0x34] sm:$0xf]
    %v761 = vld [vmem:[#allocation4 + $0x38] sm:$0xf]
    %v762 = vld [vmem:[#allocation4 + $0x3c] sm:$0xf]
    %v763 = vpack.c.bf16 %v756, %v755
    %v764 = vpack.c.bf16 %v758, %v757
    %v765 = vld [vmem:[#allocation6 + $0xb] sm:$0x1]
    %v766 = vlaneseq
    %v767 = vshrl.u32 %v766, 7
    %v768 = vsub.s32 0, %v767
    %v769 = vrot.slane %v765, %v768
    %v774 = vunpack.c.l.b16 %v759
    %v775 = vunpack.c.l.b16 %v760
    %v776 = vunpack.c.l.b16 %v761
    %v777 = vunpack.c.l.b16 %v762
    %v778 = vpack.c.b16 %v775, %v774
    %v779 = vpack.c.b16 %v777, %v776
    %v783 = vsel %vm83, %v763, 0
    %v786 = vsel %vm83, %v764, 0
    %788 = vmatprep.subr.bf16.mxu0 0
    %789 = vmatpush1.bf16.msra.mxu0 0
    %790 = vmatprep.subr.bf16.mxu0 0
    %791 = vmatpush1.bf16.msra.mxu0 0
    %792 = vmatprep.subr.bf16.mxu0 0
    %793 = vmatpush1.bf16.msra.mxu0 0
    %794 = vmatprep.subr.bf16.mxu0 0
    %795 = vmatpush1.bf16.msra.mxu0 0
    %796 = vmatprep.subr.bf16.mxu0 0
    %797 = vmatpush1.bf16.msra.mxu0 0
    %798 = vmatprep.subr.bf16.mxu0 0
    %799 = vmatpush1.bf16.msra.mxu0 0
    %800 = vmatprep.subr.bf16.mxu0 0
    %801 = vmatpush1.bf16.msra.mxu0 %v779
    %802 = vmatprep.subr.bf16.mxu0 0
    %803 = vmatpush1.bf16.msra.mxu0 %v778
    %804 = vmatprep.subr.bf16.mxu0 0
    %805 = vmatpush2.bf16.msra.mxu0 0
    %806 = vmatprep.subr.bf16.mxu0 0
    %807 = vmatpush2.bf16.msra.mxu0 0
    %808 = vmatprep.subr.bf16.mxu0 0
    %809 = vmatpush2.bf16.msra.mxu0 0
    %810 = vmatprep.subr.bf16.mxu0 0
    %811 = vmatpush2.bf16.msra.mxu0 0
    %812 = vmatprep.subr.bf16.mxu0 0
    %813 = vmatpush2.bf16.msra.mxu0 0
    %814 = vmatprep.subr.bf16.mxu0 0
    %815 = vmatpush2.bf16.msra.mxu0 0
    %816 = vmatprep.subr.bf16.mxu0 0
    %817 = vmatpush2.bf16.msra.mxu0 0
    %818 = vmatprep.subr.bf16.mxu0 0
    %819 = vmatpush2.bf16.msra.mxu0 0
    %820 = vmatprep.mubr.bf16.mxu0 0
    %821 = vmatmul.mubr.bf16.gmra.mxu0 %v783
    %v822 = vpop.f32.mrf.mxu0
    %v823 = vadd.f32 %v769, %v822
    %v824 = vpop.f32.mrf.mxu0
    %v825 = vpop.f32.mrf.mxu0
    %v826 = vadd.f32 %v769, %v825
    %v827 = vpop.f32.mrf.mxu0
    %828 = vmatprep.mubr.bf16.mxu0 0
    %829 = vmatmul.mubr.bf16.gmra.mxu0 %v786
    %v830 = vpop.f32.mrf.mxu0
    %v831 = vadd.f32 %v769, %v830
    %v832 = vpop.f32.mrf.mxu0
    %v833 = vpop.f32.mrf.mxu0
    %v834 = vadd.f32 %v769, %v833
    %v835 = vpop.f32.mrf.mxu0
    %836 = vdwg.mxu0
    %v837 = vmul.f32 %v823, %v251
    %v838 = vmul.f32 %v826, %v252
    %v839 = vmul.f32 %v831, %v253
    %v840 = vmul.f32 %v834, %v254
    %v841 = vmul.f32 %v823, %v255
    %v842 = vmul.f32 %v826, %v256
    %v843 = vmul.f32 %v831, %v257
    %v844 = vmul.f32 %v834, %v258
    %v845 = vmul.f32 %v823, %v259
    %v846 = vmul.f32 %v826, %v260
    %v847 = vmul.f32 %v831, %v261
    %v848 = vmul.f32 %v834, %v262
    %v849 = vmul.f32 %v823, %v263
    %v850 = vmul.f32 %v826, %v264
    %v851 = vmul.f32 %v831, %v265
    %v852 = vmul.f32 %v834, %v266
    %869 = vrot.lane.b32.xlu0 %v251, 64
    %v870 = vpop.permute.xlu0 %869
    %871 = vrot.lane.b32.xlu0 %v252, 64
    %v872 = vpop.permute.xlu0 %871
    %873 = vrot.lane.b32.xlu0 %v253, 64
    %v874 = vpop.permute.xlu0 %873
    %875 = vrot.lane.b32.xlu0 %v254, 64
    %v876 = vpop.permute.xlu0 %875
    %877 = vrot.lane.b32.xlu0 %v255, 64
    %v878 = vpop.permute.xlu0 %877
    %879 = vrot.lane.b32.xlu0 %v256, 64
    %v880 = vpop.permute.xlu0 %879
    %881 = vrot.lane.b32.xlu0 %v257, 64
    %v882 = vpop.permute.xlu0 %881
    %883 = vrot.lane.b32.xlu0 %v258, 64
    %v884 = vpop.permute.xlu0 %883
    %885 = vrot.lane.b32.xlu0 %v259, 64
    %v886 = vpop.permute.xlu0 %885
    %887 = vrot.lane.b32.xlu0 %v260, 64
    %v888 = vpop.permute.xlu0 %887
    %889 = vrot.lane.b32.xlu0 %v261, 64
    %v890 = vpop.permute.xlu0 %889
    %891 = vrot.lane.b32.xlu0 %v262, 64
    %v892 = vpop.permute.xlu0 %891
    %893 = vrot.lane.b32.xlu0 %v263, 64
    %v894 = vpop.permute.xlu0 %893
    %895 = vrot.lane.b32.xlu0 %v264, 64
    %v896 = vpop.permute.xlu0 %895
    %897 = vrot.lane.b32.xlu0 %v265, 64
    %v898 = vpop.permute.xlu0 %897
    %899 = vrot.lane.b32.xlu0 %v266, 64
    %v900 = vpop.permute.xlu0 %899
    %v917 = vmul.f32 %v823, %v870
    %v918 = vmul.f32 %v826, %v872
    %v919 = vmul.f32 %v831, %v874
    %v920 = vmul.f32 %v834, %v876
    %v921 = vmul.f32 %v823, %v878
    %v922 = vmul.f32 %v826, %v880
    %v923 = vmul.f32 %v831, %v882
    %v924 = vmul.f32 %v834, %v884
    %v925 = vmul.f32 %v823, %v886
    %v926 = vmul.f32 %v826, %v888
    %v927 = vmul.f32 %v831, %v890
    %v928 = vmul.f32 %v834, %v892
    %v929 = vmul.f32 %v823, %v894
    %v930 = vmul.f32 %v826, %v896
    %v931 = vmul.f32 %v831, %v898
    %v932 = vmul.f32 %v834, %v900
    %v933 = vpack.c.bf16 %v838, %v837
    %v934 = vpack.c.bf16 %v840, %v839
    %v935 = vpack.c.bf16 %v842, %v841
    %v936 = vpack.c.bf16 %v844, %v843
    %v937 = vpack.c.bf16 %v846, %v845
    %v938 = vpack.c.bf16 %v848, %v847
    %v939 = vpack.c.bf16 %v850, %v849
    %v940 = vpack.c.bf16 %v852, %v851
    %v941 = vpack.c.bf16 %v826, %v823
    %v942 = vpack.c.bf16 %v834, %v831
    %v947 = vunpack.c.l.b16 %v283
    %v948 = vunpack.c.l.b16 %v284
    %v949 = vunpack.c.l.b16 %v285
    %v950 = vunpack.c.l.b16 %v286
    %v951 = vpack.c.b16 %v948, %v947
    %v952 = vpack.c.b16 %v950, %v949
    %v956 = vsel %vm83, %v933, 0
    %v959 = vsel %vm83, %v934, 0
    %v962 = vsel %vm83, %v935, 0
    %v965 = vsel %vm83, %v936, 0
    %v968 = vsel %vm83, %v937, 0
    %v971 = vsel %vm83, %v938, 0
    %v974 = vsel %vm83, %v939, 0
    %v977 = vsel %vm83, %v940, 0
    %979 = vmatprep.subr.bf16.mxu0 0
    %980 = vmatpush1.bf16.msra.mxu0 0
    %981 = vmatprep.subr.bf16.mxu0 0
    %982 = vmatpush1.bf16.msra.mxu0 0
    %983 = vmatprep.subr.bf16.mxu0 0
    %984 = vmatpush1.bf16.msra.mxu0 0
    %985 = vmatprep.subr.bf16.mxu0 0
    %986 = vmatpush1.bf16.msra.mxu0 0
    %987 = vmatprep.subr.bf16.mxu0 0
    %988 = vmatpush1.bf16.msra.mxu0 0
    %989 = vmatprep.subr.bf16.mxu0 0
    %990 = vmatpush1.bf16.msra.mxu0 0
    %991 = vmatprep.subr.bf16.mxu0 0
    %992 = vmatpush1.bf16.msra.mxu0 %v952
    %993 = vmatprep.subr.bf16.mxu0 0
    %994 = vmatpush1.bf16.msra.mxu0 %v951
    %995 = vmatprep.subr.bf16.mxu0 0
    %996 = vmatpush2.bf16.msra.mxu0 0
    %997 = vmatprep.subr.bf16.mxu0 0
    %998 = vmatpush2.bf16.msra.mxu0 0
    %999 = vmatprep.subr.bf16.mxu0 0
    %1000 = vmatpush2.bf16.msra.mxu0 0
    %1001 = vmatprep.subr.bf16.mxu0 0
    %1002 = vmatpush2.bf16.msra.mxu0 0
    %1003 = vmatprep.subr.bf16.mxu0 0
    %1004 = vmatpush2.bf16.msra.mxu0 0
    %1005 = vmatprep.subr.bf16.mxu0 0
    %1006 = vmatpush2.bf16.msra.mxu0 0
    %1007 = vmatprep.subr.bf16.mxu0 0
    %1008 = vmatpush2.bf16.msra.mxu0 0
    %1009 = vmatprep.subr.bf16.mxu0 0
    %1010 = vmatpush2.bf16.msra.mxu0 0
    %1011 = vmatprep.mubr.bf16.mxu0 0
    %1012 = vmatmul.mubr.bf16.gmra.mxu0 %v956
    %v1013 = vpop.f32.mrf.mxu0
    %v1014 = vadd.f32 0.0, %v1013
    %v1015 = vpop.f32.mrf.mxu0
    %v1016 = vpop.f32.mrf.mxu0
    %v1017 = vadd.f32 0.0, %v1016
    %v1018 = vpop.f32.mrf.mxu0
    %1019 = vmatprep.mubr.bf16.mxu0 0
    %1020 = vmatmul.mubr.bf16.gmra.mxu0 %v959
    %v1021 = vpop.f32.mrf.mxu0
    %v1022 = vadd.f32 0.0, %v1021
    %v1023 = vpop.f32.mrf.mxu0
    %v1024 = vpop.f32.mrf.mxu0
    %v1025 = vadd.f32 0.0, %v1024
    %v1026 = vpop.f32.mrf.mxu0
    %1027 = vmatprep.mubr.bf16.mxu0 0
    %1028 = vmatmul.mubr.bf16.gmra.mxu0 %v962
    %v1029 = vpop.f32.mrf.mxu0
    %v1030 = vadd.f32 0.0, %v1029
    %v1031 = vpop.f32.mrf.mxu0
    %v1032 = vpop.f32.mrf.mxu0
    %v1033 = vadd.f32 0.0, %v1032
    %v1034 = vpop.f32.mrf.mxu0
    %1035 = vmatprep.mubr.bf16.mxu0 0
    %1036 = vmatmul.mubr.bf16.gmra.mxu0 %v965
    %v1037 = vpop.f32.mrf.mxu0
    %v1038 = vadd.f32 0.0, %v1037
    %v1039 = vpop.f32.mrf.mxu0
    %v1040 = vpop.f32.mrf.mxu0
    %v1041 = vadd.f32 0.0, %v1040
    %v1042 = vpop.f32.mrf.mxu0
    %1043 = vmatprep.mubr.bf16.mxu0 0
    %1044 = vmatmul.mubr.bf16.gmra.mxu0 %v968
    %v1045 = vpop.f32.mrf.mxu0
    %v1046 = vadd.f32 0.0, %v1045
    %v1047 = vpop.f32.mrf.mxu0
    %v1048 = vpop.f32.mrf.mxu0
    %v1049 = vadd.f32 0.0, %v1048
    %v1050 = vpop.f32.mrf.mxu0
    %1051 = vmatprep.mubr.bf16.mxu0 0
    %1052 = vmatmul.mubr.bf16.gmra.mxu0 %v971
    %v1053 = vpop.f32.mrf.mxu0
    %v1054 = vadd.f32 0.0, %v1053
    %v1055 = vpop.f32.mrf.mxu0
    %v1056 = vpop.f32.mrf.mxu0
    %v1057 = vadd.f32 0.0, %v1056
    %v1058 = vpop.f32.mrf.mxu0
    %1059 = vmatprep.mubr.bf16.mxu0 0
    %1060 = vmatmul.mubr.bf16.gmra.mxu0 %v974
    %v1061 = vpop.f32.mrf.mxu0
    %v1062 = vadd.f32 0.0, %v1061
    %v1063 = vpop.f32.mrf.mxu0
    %v1064 = vpop.f32.mrf.mxu0
    %v1065 = vadd.f32 0.0, %v1064
    %v1066 = vpop.f32.mrf.mxu0
    %1067 = vmatprep.mubr.bf16.mxu0 0
    %1068 = vmatmul.mubr.bf16.gmra.mxu0 %v977
    %v1069 = vpop.f32.mrf.mxu0
    %v1070 = vadd.f32 0.0, %v1069
    %v1071 = vpop.f32.mrf.mxu0
    %v1072 = vpop.f32.mrf.mxu0
    %v1073 = vadd.f32 0.0, %v1072
    %v1074 = vpop.f32.mrf.mxu0
    %1075 = vdwg.mxu0
    %vm1076 = vcmask 1047808
    %1077 = vrot.lane.b32.xlu0 %v1014, 32
    %v1078 = vpop.permute.xlu0 %1077
    %v1079 = vsel %vm1076, %v1078, %v1014
    %1080 = vrot.lane.b32.xlu0 %v1017, 32
    %v1081 = vpop.permute.xlu0 %1080
    %v1082 = vsel %vm1076, %v1081, %v1017
    %1083 = vrot.lane.b32.xlu0 %v1022, 32
    %v1084 = vpop.permute.xlu0 %1083
    %v1085 = vsel %vm1076, %v1084, %v1022
    %1086 = vrot.lane.b32.xlu0 %v1025, 32
    %v1087 = vpop.permute.xlu0 %1086
    %v1088 = vsel %vm1076, %v1087, %v1025
    %1089 = vrot.lane.b32.xlu0 %v1030, 32
    %v1090 = vpop.permute.xlu0 %1089
    %v1091 = vsel %vm1076, %v1090, %v1030
    %1092 = vrot.lane.b32.xlu0 %v1033, 32
    %v1093 = vpop.permute.xlu0 %1092
    %v1094 = vsel %vm1076, %v1093, %v1033
    %1095 = vrot.lane.b32.xlu0 %v1038, 32
    %v1096 = vpop.permute.xlu0 %1095
    %v1097 = vsel %vm1076, %v1096, %v1038
    %1098 = vrot.lane.b32.xlu0 %v1041, 32
    %v1099 = vpop.permute.xlu0 %1098
    %v1100 = vsel %vm1076, %v1099, %v1041
    %1101 = vrot.lane.b32.xlu0 %v1046, 32
    %v1102 = vpop.permute.xlu0 %1101
    %v1103 = vsel %vm1076, %v1102, %v1046
    %1104 = vrot.lane.b32.xlu0 %v1049, 32
    %v1105 = vpop.permute.xlu0 %1104
    %v1106 = vsel %vm1076, %v1105, %v1049
    %1107 = vrot.lane.b32.xlu0 %v1054, 32
    %v1108 = vpop.permute.xlu0 %1107
    %v1109 = vsel %vm1076, %v1108, %v1054
    %1110 = vrot.lane.b32.xlu0 %v1057, 32
    %v1111 = vpop.permute.xlu0 %1110
    %v1112 = vsel %vm1076, %v1111, %v1057
    %1113 = vrot.lane.b32.xlu0 %v1062, 32
    %v1114 = vpop.permute.xlu0 %1113
    %v1115 = vsel %vm1076, %v1114, %v1062
    %1116 = vrot.lane.b32.xlu0 %v1065, 32
    %v1117 = vpop.permute.xlu0 %1116
    %v1118 = vsel %vm1076, %v1117, %v1065
    %1119 = vrot.lane.b32.xlu0 %v1070, 32
    %v1120 = vpop.permute.xlu0 %1119
    %v1121 = vsel %vm1076, %v1120, %v1070
    %1122 = vrot.lane.b32.xlu0 %v1073, 32
    %v1123 = vpop.permute.xlu0 %1122
    %v1124 = vsel %vm1076, %v1123, %v1073
    %1125 = vrot.lane.b32.xlu0 %v1079, 32
    %v1126 = vpop.permute.xlu0 %1125
    %1127 = vrot.lane.b32.xlu0 %v1082, 32
    %v1128 = vpop.permute.xlu0 %1127
    %1129 = vrot.lane.b32.xlu0 %v1085, 32
    %v1130 = vpop.permute.xlu0 %1129
    %1131 = vrot.lane.b32.xlu0 %v1088, 32
    %v1132 = vpop.permute.xlu0 %1131
    %1133 = vrot.lane.b32.xlu0 %v1091, 32
    %v1134 = vpop.permute.xlu0 %1133
    %1135 = vrot.lane.b32.xlu0 %v1094, 32
    %v1136 = vpop.permute.xlu0 %1135
    %1137 = vrot.lane.b32.xlu0 %v1097, 32
    %v1138 = vpop.permute.xlu0 %1137
    %1139 = vrot.lane.b32.xlu0 %v1100, 32
    %v1140 = vpop.permute.xlu0 %1139
    %1141 = vrot.lane.b32.xlu0 %v1103, 32
    %v1142 = vpop.permute.xlu0 %1141
    %1143 = vrot.lane.b32.xlu0 %v1106, 32
    %v1144 = vpop.permute.xlu0 %1143
    %1145 = vrot.lane.b32.xlu0 %v1109, 32
    %v1146 = vpop.permute.xlu0 %1145
    %1147 = vrot.lane.b32.xlu0 %v1112, 32
    %v1148 = vpop.permute.xlu0 %1147
    %1149 = vrot.lane.b32.xlu0 %v1115, 32
    %v1150 = vpop.permute.xlu0 %1149
    %1151 = vrot.lane.b32.xlu0 %v1118, 32
    %v1152 = vpop.permute.xlu0 %1151
    %1153 = vrot.lane.b32.xlu0 %v1121, 32
    %v1154 = vpop.permute.xlu0 %1153
    %1155 = vrot.lane.b32.xlu0 %v1124, 32
    %v1156 = vpop.permute.xlu0 %1155
    %v1157 = vsel %vm1076, %v1126, %v1014
    %v1158 = vsel %vm1076, %v1128, %v1017
    %v1159 = vsel %vm1076, %v1130, %v1022
    %v1160 = vsel %vm1076, %v1132, %v1025
    %v1161 = vsel %vm1076, %v1134, %v1030
    %v1162 = vsel %vm1076, %v1136, %v1033
    %v1163 = vsel %vm1076, %v1138, %v1038
    %v1164 = vsel %vm1076, %v1140, %v1041
    %v1165 = vsel %vm1076, %v1142, %v1046
    %v1166 = vsel %vm1076, %v1144, %v1049
    %v1167 = vsel %vm1076, %v1146, %v1054
    %v1168 = vsel %vm1076, %v1148, %v1057
    %v1169 = vsel %vm1076, %v1150, %v1062
    %v1170 = vsel %vm1076, %v1152, %v1065
    %v1171 = vsel %vm1076, %v1154, %v1070
    %v1172 = vsel %vm1076, %v1156, %v1073
    %1189 = vrot.lane.b32.xlu0 %v1014, 1
    %v1190 = vpop.permute.xlu0 %1189
    %1191 = vrot.lane.b32.xlu0 %v1017, 1
    %v1192 = vpop.permute.xlu0 %1191
    %1193 = vrot.lane.b32.xlu0 %v1022, 1
    %v1194 = vpop.permute.xlu0 %1193
    %1195 = vrot.lane.b32.xlu0 %v1025, 1
    %v1196 = vpop.permute.xlu0 %1195
    %1197 = vrot.lane.b32.xlu0 %v1030, 1
    %v1198 = vpop.permute.xlu0 %1197
    %1199 = vrot.lane.b32.xlu0 %v1033, 1
    %v1200 = vpop.permute.xlu0 %1199
    %1201 = vrot.lane.b32.xlu0 %v1038, 1
    %v1202 = vpop.permute.xlu0 %1201
    %1203 = vrot.lane.b32.xlu0 %v1041, 1
    %v1204 = vpop.permute.xlu0 %1203
    %1205 = vrot.lane.b32.xlu0 %v1046, 1
    %v1206 = vpop.permute.xlu0 %1205
    %1207 = vrot.lane.b32.xlu0 %v1049, 1
    %v1208 = vpop.permute.xlu0 %1207
    %1209 = vrot.lane.b32.xlu0 %v1054, 1
    %v1210 = vpop.permute.xlu0 %1209
    %1211 = vrot.lane.b32.xlu0 %v1057, 1
    %v1212 = vpop.permute.xlu0 %1211
    %1213 = vrot.lane.b32.xlu0 %v1062, 1
    %v1214 = vpop.permute.xlu0 %1213
    %1215 = vrot.lane.b32.xlu0 %v1065, 1
    %v1216 = vpop.permute.xlu0 %1215
    %1217 = vrot.lane.b32.xlu0 %v1070, 1
    %v1218 = vpop.permute.xlu0 %1217
    %1219 = vrot.lane.b32.xlu0 %v1073, 1
    %v1220 = vpop.permute.xlu0 %1219
    %v1237 = vsel %vm528, %v1157, %v1190
    %v1238 = vsel %vm529, %v1158, %v1192
    %v1239 = vsel %vm530, %v1159, %v1194
    %v1240 = vsel %vm531, %v1160, %v1196
    %v1241 = vsel %vm532, %v1161, %v1198
    %v1242 = vsel %vm533, %v1162, %v1200
    %v1243 = vsel %vm534, %v1163, %v1202
    %v1244 = vsel %vm535, %v1164, %v1204
    %v1245 = vsel %vm536, %v1165, %v1206
    %v1246 = vsel %vm537, %v1166, %v1208
    %v1247 = vsel %vm538, %v1167, %v1210
    %v1248 = vsel %vm539, %v1168, %v1212
    %v1249 = vsel %vm540, %v1169, %v1214
    %v1250 = vsel %vm541, %v1170, %v1216
    %v1251 = vsel %vm542, %v1171, %v1218
    %v1252 = vsel %vm543, %v1172, %v1220
    %1269 = vrot.lane.b32.xlu0 %v1237, 127
    %v1270 = vpop.permute.xlu0 %1269
    %1271 = vrot.lane.b32.xlu0 %v1238, 127
    %v1272 = vpop.permute.xlu0 %1271
    %1273 = vrot.lane.b32.xlu0 %v1239, 127
    %v1274 = vpop.permute.xlu0 %1273
    %1275 = vrot.lane.b32.xlu0 %v1240, 127
    %v1276 = vpop.permute.xlu0 %1275
    %1277 = vrot.lane.b32.xlu0 %v1241, 127
    %v1278 = vpop.permute.xlu0 %1277
    %1279 = vrot.lane.b32.xlu0 %v1242, 127
    %v1280 = vpop.permute.xlu0 %1279
    %1281 = vrot.lane.b32.xlu0 %v1243, 127
    %v1282 = vpop.permute.xlu0 %1281
    %1283 = vrot.lane.b32.xlu0 %v1244, 127
    %v1284 = vpop.permute.xlu0 %1283
    %1285 = vrot.lane.b32.xlu0 %v1245, 127
    %v1286 = vpop.permute.xlu0 %1285
    %1287 = vrot.lane.b32.xlu0 %v1246, 127
    %v1288 = vpop.permute.xlu0 %1287
    %1289 = vrot.lane.b32.xlu0 %v1247, 127
    %v1290 = vpop.permute.xlu0 %1289
    %1291 = vrot.lane.b32.xlu0 %v1248, 127
    %v1292 = vpop.permute.xlu0 %1291
    %1293 = vrot.lane.b32.xlu0 %v1249, 127
    %v1294 = vpop.permute.xlu0 %1293
    %1295 = vrot.lane.b32.xlu0 %v1250, 127
    %v1296 = vpop.permute.xlu0 %1295
    %1297 = vrot.lane.b32.xlu0 %v1251, 127
    %v1298 = vpop.permute.xlu0 %1297
    %1299 = vrot.lane.b32.xlu0 %v1252, 127
    %v1300 = vpop.permute.xlu0 %1299
    %1317 = vrot.lane.b32.xlu0 %v1270, 32
    %v1318 = vpop.permute.xlu0 %1317
    %v1319 = vsel %vm1076, %v1318, %v1270
    %1320 = vrot.lane.b32.xlu0 %v1272, 32
    %v1321 = vpop.permute.xlu0 %1320
    %v1322 = vsel %vm1076, %v1321, %v1272
    %1323 = vrot.lane.b32.xlu0 %v1274, 32
    %v1324 = vpop.permute.xlu0 %1323
    %v1325 = vsel %vm1076, %v1324, %v1274
    %1326 = vrot.lane.b32.xlu0 %v1276, 32
    %v1327 = vpop.permute.xlu0 %1326
    %v1328 = vsel %vm1076, %v1327, %v1276
    %1329 = vrot.lane.b32.xlu0 %v1278, 32
    %v1330 = vpop.permute.xlu0 %1329
    %v1331 = vsel %vm1076, %v1330, %v1278
    %1332 = vrot.lane.b32.xlu0 %v1280, 32
    %v1333 = vpop.permute.xlu0 %1332
    %v1334 = vsel %vm1076, %v1333, %v1280
    %1335 = vrot.lane.b32.xlu0 %v1282, 32
    %v1336 = vpop.permute.xlu0 %1335
    %v1337 = vsel %vm1076, %v1336, %v1282
    %1338 = vrot.lane.b32.xlu0 %v1284, 32
    %v1339 = vpop.permute.xlu0 %1338
    %v1340 = vsel %vm1076, %v1339, %v1284
    %1341 = vrot.lane.b32.xlu0 %v1286, 32
    %v1342 = vpop.permute.xlu0 %1341
    %v1343 = vsel %vm1076, %v1342, %v1286
    %1344 = vrot.lane.b32.xlu0 %v1288, 32
    %v1345 = vpop.permute.xlu0 %1344
    %v1346 = vsel %vm1076, %v1345, %v1288
    %1347 = vrot.lane.b32.xlu0 %v1290, 32
    %v1348 = vpop.permute.xlu0 %1347
    %v1349 = vsel %vm1076, %v1348, %v1290
    %1350 = vrot.lane.b32.xlu0 %v1292, 32
    %v1351 = vpop.permute.xlu0 %1350
    %v1352 = vsel %vm1076, %v1351, %v1292
    %1353 = vrot.lane.b32.xlu0 %v1294, 32
    %v1354 = vpop.permute.xlu0 %1353
    %v1355 = vsel %vm1076, %v1354, %v1294
    %1356 = vrot.lane.b32.xlu0 %v1296, 32
    %v1357 = vpop.permute.xlu0 %1356
    %v1358 = vsel %vm1076, %v1357, %v1296
    %1359 = vrot.lane.b32.xlu0 %v1298, 32
    %v1360 = vpop.permute.xlu0 %1359
    %v1361 = vsel %vm1076, %v1360, %v1298
    %1362 = vrot.lane.b32.xlu0 %v1300, 32
    %v1363 = vpop.permute.xlu0 %1362
    %v1364 = vsel %vm1076, %v1363, %v1300
    %1365 = vrot.lane.b32.xlu0 %v1319, 32
    %v1366 = vpop.permute.xlu0 %1365
    %1367 = vrot.lane.b32.xlu0 %v1322, 32
    %v1368 = vpop.permute.xlu0 %1367
    %1369 = vrot.lane.b32.xlu0 %v1325, 32
    %v1370 = vpop.permute.xlu0 %1369
    %1371 = vrot.lane.b32.xlu0 %v1328, 32
    %v1372 = vpop.permute.xlu0 %1371
    %1373 = vrot.lane.b32.xlu0 %v1331, 32
    %v1374 = vpop.permute.xlu0 %1373
    %1375 = vrot.lane.b32.xlu0 %v1334, 32
    %v1376 = vpop.permute.xlu0 %1375
    %1377 = vrot.lane.b32.xlu0 %v1337, 32
    %v1378 = vpop.permute.xlu0 %1377
    %1379 = vrot.lane.b32.xlu0 %v1340, 32
    %v1380 = vpop.permute.xlu0 %1379
    %1381 = vrot.lane.b32.xlu0 %v1343, 32
    %v1382 = vpop.permute.xlu0 %1381
    %1383 = vrot.lane.b32.xlu0 %v1346, 32
    %v1384 = vpop.permute.xlu0 %1383
    %1385 = vrot.lane.b32.xlu0 %v1349, 32
    %v1386 = vpop.permute.xlu0 %1385
    %1387 = vrot.lane.b32.xlu0 %v1352, 32
    %v1388 = vpop.permute.xlu0 %1387
    %1389 = vrot.lane.b32.xlu0 %v1355, 32
    %v1390 = vpop.permute.xlu0 %1389
    %1391 = vrot.lane.b32.xlu0 %v1358, 32
    %v1392 = vpop.permute.xlu0 %1391
    %1393 = vrot.lane.b32.xlu0 %v1361, 32
    %v1394 = vpop.permute.xlu0 %1393
    %1395 = vrot.lane.b32.xlu0 %v1364, 32
    %v1396 = vpop.permute.xlu0 %1395
    %v1397 = vsel %vm1076, %v1366, %v1270
    %v1398 = vsel %vm1076, %v1368, %v1272
    %v1399 = vsel %vm1076, %v1370, %v1274
    %v1400 = vsel %vm1076, %v1372, %v1276
    %v1401 = vsel %vm1076, %v1374, %v1278
    %v1402 = vsel %vm1076, %v1376, %v1280
    %v1403 = vsel %vm1076, %v1378, %v1282
    %v1404 = vsel %vm1076, %v1380, %v1284
    %v1405 = vsel %vm1076, %v1382, %v1286
    %v1406 = vsel %vm1076, %v1384, %v1288
    %v1407 = vsel %vm1076, %v1386, %v1290
    %v1408 = vsel %vm1076, %v1388, %v1292
    %v1409 = vsel %vm1076, %v1390, %v1294
    %v1410 = vsel %vm1076, %v1392, %v1296
    %v1411 = vsel %vm1076, %v1394, %v1298
    %v1412 = vsel %vm1076, %v1396, %v1300
    %1413 = vrot.lane.b32.xlu0 %v1237, 1
    %v1414 = vpop.permute.xlu0 %1413
    %1415 = vrot.lane.b32.xlu0 %v1238, 1
    %v1416 = vpop.permute.xlu0 %1415
    %1417 = vrot.lane.b32.xlu0 %v1239, 1
    %v1418 = vpop.permute.xlu0 %1417
    %1419 = vrot.lane.b32.xlu0 %v1240, 1
    %v1420 = vpop.permute.xlu0 %1419
    %1421 = vrot.lane.b32.xlu0 %v1241, 1
    %v1422 = vpop.permute.xlu0 %1421
    %1423 = vrot.lane.b32.xlu0 %v1242, 1
    %v1424 = vpop.permute.xlu0 %1423
    %1425 = vrot.lane.b32.xlu0 %v1243, 1
    %v1426 = vpop.permute.xlu0 %1425
    %1427 = vrot.lane.b32.xlu0 %v1244, 1
    %v1428 = vpop.permute.xlu0 %1427
    %1429 = vrot.lane.b32.xlu0 %v1245, 1
    %v1430 = vpop.permute.xlu0 %1429
    %1431 = vrot.lane.b32.xlu0 %v1246, 1
    %v1432 = vpop.permute.xlu0 %1431
    %1433 = vrot.lane.b32.xlu0 %v1247, 1
    %v1434 = vpop.permute.xlu0 %1433
    %1435 = vrot.lane.b32.xlu0 %v1248, 1
    %v1436 = vpop.permute.xlu0 %1435
    %1437 = vrot.lane.b32.xlu0 %v1249, 1
    %v1438 = vpop.permute.xlu0 %1437
    %1439 = vrot.lane.b32.xlu0 %v1250, 1
    %v1440 = vpop.permute.xlu0 %1439
    %1441 = vrot.lane.b32.xlu0 %v1251, 1
    %v1442 = vpop.permute.xlu0 %1441
    %1443 = vrot.lane.b32.xlu0 %v1252, 1
    %v1444 = vpop.permute.xlu0 %1443
    %v1461 = vsel %vm576, %v1397, %v1414
    %v1462 = vsel %vm577, %v1398, %v1416
    %v1463 = vsel %vm578, %v1399, %v1418
    %v1464 = vsel %vm579, %v1400, %v1420
    %v1465 = vsel %vm580, %v1401, %v1422
    %v1466 = vsel %vm581, %v1402, %v1424
    %v1467 = vsel %vm582, %v1403, %v1426
    %v1468 = vsel %vm583, %v1404, %v1428
    %v1469 = vsel %vm584, %v1405, %v1430
    %v1470 = vsel %vm585, %v1406, %v1432
    %v1471 = vsel %vm586, %v1407, %v1434
    %v1472 = vsel %vm587, %v1408, %v1436
    %v1473 = vsel %vm588, %v1409, %v1438
    %v1474 = vsel %vm589, %v1410, %v1440
    %v1475 = vsel %vm590, %v1411, %v1442
    %v1476 = vsel %vm591, %v1412, %v1444
    %1493 = vrot.lane.b32.xlu0 %v1461, 126
    %v1494 = vpop.permute.xlu0 %1493
    %1495 = vrot.lane.b32.xlu0 %v1462, 126
    %v1496 = vpop.permute.xlu0 %1495
    %1497 = vrot.lane.b32.xlu0 %v1463, 126
    %v1498 = vpop.permute.xlu0 %1497
    %1499 = vrot.lane.b32.xlu0 %v1464, 126
    %v1500 = vpop.permute.xlu0 %1499
    %1501 = vrot.lane.b32.xlu0 %v1465, 126
    %v1502 = vpop.permute.xlu0 %1501
    %1503 = vrot.lane.b32.xlu0 %v1466, 126
    %v1504 = vpop.permute.xlu0 %1503
    %1505 = vrot.lane.b32.xlu0 %v1467, 126
    %v1506 = vpop.permute.xlu0 %1505
    %1507 = vrot.lane.b32.xlu0 %v1468, 126
    %v1508 = vpop.permute.xlu0 %1507
    %1509 = vrot.lane.b32.xlu0 %v1469, 126
    %v1510 = vpop.permute.xlu0 %1509
    %1511 = vrot.lane.b32.xlu0 %v1470, 126
    %v1512 = vpop.permute.xlu0 %1511
    %1513 = vrot.lane.b32.xlu0 %v1471, 126
    %v1514 = vpop.permute.xlu0 %1513
    %1515 = vrot.lane.b32.xlu0 %v1472, 126
    %v1516 = vpop.permute.xlu0 %1515
    %1517 = vrot.lane.b32.xlu0 %v1473, 126
    %v1518 = vpop.permute.xlu0 %1517
    %1519 = vrot.lane.b32.xlu0 %v1474, 126
    %v1520 = vpop.permute.xlu0 %1519
    %1521 = vrot.lane.b32.xlu0 %v1475, 126
    %v1522 = vpop.permute.xlu0 %1521
    %1523 = vrot.lane.b32.xlu0 %v1476, 126
    %v1524 = vpop.permute.xlu0 %1523
    %1541 = vrot.lane.b32.xlu0 %v1494, 32
    %v1542 = vpop.permute.xlu0 %1541
    %v1543 = vsel %vm1076, %v1542, %v1494
    %1544 = vrot.lane.b32.xlu0 %v1496, 32
    %v1545 = vpop.permute.xlu0 %1544
    %v1546 = vsel %vm1076, %v1545, %v1496
    %1547 = vrot.lane.b32.xlu0 %v1498, 32
    %v1548 = vpop.permute.xlu0 %1547
    %v1549 = vsel %vm1076, %v1548, %v1498
    %1550 = vrot.lane.b32.xlu0 %v1500, 32
    %v1551 = vpop.permute.xlu0 %1550
    %v1552 = vsel %vm1076, %v1551, %v1500
    %1553 = vrot.lane.b32.xlu0 %v1502, 32
    %v1554 = vpop.permute.xlu0 %1553
    %v1555 = vsel %vm1076, %v1554, %v1502
    %1556 = vrot.lane.b32.xlu0 %v1504, 32
    %v1557 = vpop.permute.xlu0 %1556
    %v1558 = vsel %vm1076, %v1557, %v1504
    %1559 = vrot.lane.b32.xlu0 %v1506, 32
    %v1560 = vpop.permute.xlu0 %1559
    %v1561 = vsel %vm1076, %v1560, %v1506
    %1562 = vrot.lane.b32.xlu0 %v1508, 32
    %v1563 = vpop.permute.xlu0 %1562
    %v1564 = vsel %vm1076, %v1563, %v1508
    %1565 = vrot.lane.b32.xlu0 %v1510, 32
    %v1566 = vpop.permute.xlu0 %1565
    %v1567 = vsel %vm1076, %v1566, %v1510
    %1568 = vrot.lane.b32.xlu0 %v1512, 32
    %v1569 = vpop.permute.xlu0 %1568
    %v1570 = vsel %vm1076, %v1569, %v1512
    %1571 = vrot.lane.b32.xlu0 %v1514, 32
    %v1572 = vpop.permute.xlu0 %1571
    %v1573 = vsel %vm1076, %v1572, %v1514
    %1574 = vrot.lane.b32.xlu0 %v1516, 32
    %v1575 = vpop.permute.xlu0 %1574
    %v1576 = vsel %vm1076, %v1575, %v1516
    %1577 = vrot.lane.b32.xlu0 %v1518, 32
    %v1578 = vpop.permute.xlu0 %1577
    %v1579 = vsel %vm1076, %v1578, %v1518
    %1580 = vrot.lane.b32.xlu0 %v1520, 32
    %v1581 = vpop.permute.xlu0 %1580
    %v1582 = vsel %vm1076, %v1581, %v1520
    %1583 = vrot.lane.b32.xlu0 %v1522, 32
    %v1584 = vpop.permute.xlu0 %1583
    %v1585 = vsel %vm1076, %v1584, %v1522
    %1586 = vrot.lane.b32.xlu0 %v1524, 32
    %v1587 = vpop.permute.xlu0 %1586
    %v1588 = vsel %vm1076, %v1587, %v1524
    %1589 = vrot.lane.b32.xlu0 %v1543, 32
    %v1590 = vpop.permute.xlu0 %1589
    %1591 = vrot.lane.b32.xlu0 %v1546, 32
    %v1592 = vpop.permute.xlu0 %1591
    %1593 = vrot.lane.b32.xlu0 %v1549, 32
    %v1594 = vpop.permute.xlu0 %1593
    %1595 = vrot.lane.b32.xlu0 %v1552, 32
    %v1596 = vpop.permute.xlu0 %1595
    %1597 = vrot.lane.b32.xlu0 %v1555, 32
    %v1598 = vpop.permute.xlu0 %1597
    %1599 = vrot.lane.b32.xlu0 %v1558, 32
    %v1600 = vpop.permute.xlu0 %1599
    %1601 = vrot.lane.b32.xlu0 %v1561, 32
    %v1602 = vpop.permute.xlu0 %1601
    %1603 = vrot.lane.b32.xlu0 %v1564, 32
    %v1604 = vpop.permute.xlu0 %1603
    %1605 = vrot.lane.b32.xlu0 %v1567, 32
    %v1606 = vpop.permute.xlu0 %1605
    %1607 = vrot.lane.b32.xlu0 %v1570, 32
    %v1608 = vpop.permute.xlu0 %1607
    %1609 = vrot.lane.b32.xlu0 %v1573, 32
    %v1610 = vpop.permute.xlu0 %1609
    %1611 = vrot.lane.b32.xlu0 %v1576, 32
    %v1612 = vpop.permute.xlu0 %1611
    %1613 = vrot.lane.b32.xlu0 %v1579, 32
    %v1614 = vpop.permute.xlu0 %1613
    %1615 = vrot.lane.b32.xlu0 %v1582, 32
    %v1616 = vpop.permute.xlu0 %1615
    %1617 = vrot.lane.b32.xlu0 %v1585, 32
    %v1618 = vpop.permute.xlu0 %1617
    %1619 = vrot.lane.b32.xlu0 %v1588, 32
    %v1620 = vpop.permute.xlu0 %1619
    %v1621 = vsel %vm1076, %v1590, %v1494
    %v1622 = vsel %vm1076, %v1592, %v1496
    %v1623 = vsel %vm1076, %v1594, %v1498
    %v1624 = vsel %vm1076, %v1596, %v1500
    %v1625 = vsel %vm1076, %v1598, %v1502
    %v1626 = vsel %vm1076, %v1600, %v1504
    %v1627 = vsel %vm1076, %v1602, %v1506
    %v1628 = vsel %vm1076, %v1604, %v1508
    %v1629 = vsel %vm1076, %v1606, %v1510
    %v1630 = vsel %vm1076, %v1608, %v1512
    %v1631 = vsel %vm1076, %v1610, %v1514
    %v1632 = vsel %vm1076, %v1612, %v1516
    %v1633 = vsel %vm1076, %v1614, %v1518
    %v1634 = vsel %vm1076, %v1616, %v1520
    %v1635 = vsel %vm1076, %v1618, %v1522
    %v1636 = vsel %vm1076, %v1620, %v1524
    %1637 = vrot.lane.b32.xlu0 %v1461, 2
    %v1638 = vpop.permute.xlu0 %1637
    %1639 = vrot.lane.b32.xlu0 %v1462, 2
    %v1640 = vpop.permute.xlu0 %1639
    %1641 = vrot.lane.b32.xlu0 %v1463, 2
    %v1642 = vpop.permute.xlu0 %1641
    %1643 = vrot.lane.b32.xlu0 %v1464, 2
    %v1644 = vpop.permute.xlu0 %1643
    %1645 = vrot.lane.b32.xlu0 %v1465, 2
    %v1646 = vpop.permute.xlu0 %1645
    %1647 = vrot.lane.b32.xlu0 %v1466, 2
    %v1648 = vpop.permute.xlu0 %1647
    %1649 = vrot.lane.b32.xlu0 %v1467, 2
    %v1650 = vpop.permute.xlu0 %1649
    %1651 = vrot.lane.b32.xlu0 %v1468, 2
    %v1652 = vpop.permute.xlu0 %1651
    %1653 = vrot.lane.b32.xlu0 %v1469, 2
    %v1654 = vpop.permute.xlu0 %1653
    %1655 = vrot.lane.b32.xlu0 %v1470, 2
    %v1656 = vpop.permute.xlu0 %1655
    %1657 = vrot.lane.b32.xlu0 %v1471, 2
    %v1658 = vpop.permute.xlu0 %1657
    %1659 = vrot.lane.b32.xlu0 %v1472, 2
    %v1660 = vpop.permute.xlu0 %1659
    %1661 = vrot.lane.b32.xlu0 %v1473, 2
    %v1662 = vpop.permute.xlu0 %1661
    %1663 = vrot.lane.b32.xlu0 %v1474, 2
    %v1664 = vpop.permute.xlu0 %1663
    %1665 = vrot.lane.b32.xlu0 %v1475, 2
    %v1666 = vpop.permute.xlu0 %1665
    %1667 = vrot.lane.b32.xlu0 %v1476, 2
    %v1668 = vpop.permute.xlu0 %1667
    %v1685 = vsel %vm624, %v1621, %v1638
    %v1686 = vsel %vm625, %v1622, %v1640
    %v1687 = vsel %vm626, %v1623, %v1642
    %v1688 = vsel %vm627, %v1624, %v1644
    %v1689 = vsel %vm628, %v1625, %v1646
    %v1690 = vsel %vm629, %v1626, %v1648
    %v1691 = vsel %vm630, %v1627, %v1650
    %v1692 = vsel %vm631, %v1628, %v1652
    %v1693 = vsel %vm632, %v1629, %v1654
    %v1694 = vsel %vm633, %v1630, %v1656
    %v1695 = vsel %vm634, %v1631, %v1658
    %v1696 = vsel %vm635, %v1632, %v1660
    %v1697 = vsel %vm636, %v1633, %v1662
    %v1698 = vsel %vm637, %v1634, %v1664
    %v1699 = vsel %vm638, %v1635, %v1666
    %v1700 = vsel %vm639, %v1636, %v1668
    %1717 = vrot.lane.b32.xlu0 %v1685, 124
    %v1718 = vpop.permute.xlu0 %1717
    %1719 = vrot.lane.b32.xlu0 %v1686, 124
    %v1720 = vpop.permute.xlu0 %1719
    %1721 = vrot.lane.b32.xlu0 %v1687, 124
    %v1722 = vpop.permute.xlu0 %1721
    %1723 = vrot.lane.b32.xlu0 %v1688, 124
    %v1724 = vpop.permute.xlu0 %1723
    %1725 = vrot.lane.b32.xlu0 %v1689, 124
    %v1726 = vpop.permute.xlu0 %1725
    %1727 = vrot.lane.b32.xlu0 %v1690, 124
    %v1728 = vpop.permute.xlu0 %1727
    %1729 = vrot.lane.b32.xlu0 %v1691, 124
    %v1730 = vpop.permute.xlu0 %1729
    %1731 = vrot.lane.b32.xlu0 %v1692, 124
    %v1732 = vpop.permute.xlu0 %1731
    %1733 = vrot.lane.b32.xlu0 %v1693, 124
    %v1734 = vpop.permute.xlu0 %1733
    %1735 = vrot.lane.b32.xlu0 %v1694, 124
    %v1736 = vpop.permute.xlu0 %1735
    %1737 = vrot.lane.b32.xlu0 %v1695, 124
    %v1738 = vpop.permute.xlu0 %1737
    %1739 = vrot.lane.b32.xlu0 %v1696, 124
    %v1740 = vpop.permute.xlu0 %1739
    %1741 = vrot.lane.b32.xlu0 %v1697, 124
    %v1742 = vpop.permute.xlu0 %1741
    %1743 = vrot.lane.b32.xlu0 %v1698, 124
    %v1744 = vpop.permute.xlu0 %1743
    %1745 = vrot.lane.b32.xlu0 %v1699, 124
    %v1746 = vpop.permute.xlu0 %1745
    %1747 = vrot.lane.b32.xlu0 %v1700, 124
    %v1748 = vpop.permute.xlu0 %1747
    %1765 = vrot.lane.b32.xlu0 %v1718, 32
    %v1766 = vpop.permute.xlu0 %1765
    %v1767 = vsel %vm1076, %v1766, %v1718
    %1768 = vrot.lane.b32.xlu0 %v1720, 32
    %v1769 = vpop.permute.xlu0 %1768
    %v1770 = vsel %vm1076, %v1769, %v1720
    %1771 = vrot.lane.b32.xlu0 %v1722, 32
    %v1772 = vpop.permute.xlu0 %1771
    %v1773 = vsel %vm1076, %v1772, %v1722
    %1774 = vrot.lane.b32.xlu0 %v1724, 32
    %v1775 = vpop.permute.xlu0 %1774
    %v1776 = vsel %vm1076, %v1775, %v1724
    %1777 = vrot.lane.b32.xlu0 %v1726, 32
    %v1778 = vpop.permute.xlu0 %1777
    %v1779 = vsel %vm1076, %v1778, %v1726
    %1780 = vrot.lane.b32.xlu0 %v1728, 32
    %v1781 = vpop.permute.xlu0 %1780
    %v1782 = vsel %vm1076, %v1781, %v1728
    %1783 = vrot.lane.b32.xlu0 %v1730, 32
    %v1784 = vpop.permute.xlu0 %1783
    %v1785 = vsel %vm1076, %v1784, %v1730
    %1786 = vrot.lane.b32.xlu0 %v1732, 32
    %v1787 = vpop.permute.xlu0 %1786
    %v1788 = vsel %vm1076, %v1787, %v1732
    %1789 = vrot.lane.b32.xlu0 %v1734, 32
    %v1790 = vpop.permute.xlu0 %1789
    %v1791 = vsel %vm1076, %v1790, %v1734
    %1792 = vrot.lane.b32.xlu0 %v1736, 32
    %v1793 = vpop.permute.xlu0 %1792
    %v1794 = vsel %vm1076, %v1793, %v1736
    %1795 = vrot.lane.b32.xlu0 %v1738, 32
    %v1796 = vpop.permute.xlu0 %1795
    %v1797 = vsel %vm1076, %v1796, %v1738
    %1798 = vrot.lane.b32.xlu0 %v1740, 32
    %v1799 = vpop.permute.xlu0 %1798
    %v1800 = vsel %vm1076, %v1799, %v1740
    %1801 = vrot.lane.b32.xlu0 %v1742, 32
    %v1802 = vpop.permute.xlu0 %1801
    %v1803 = vsel %vm1076, %v1802, %v1742
    %1804 = vrot.lane.b32.xlu0 %v1744, 32
    %v1805 = vpop.permute.xlu0 %1804
    %v1806 = vsel %vm1076, %v1805, %v1744
    %1807 = vrot.lane.b32.xlu0 %v1746, 32
    %v1808 = vpop.permute.xlu0 %1807
    %v1809 = vsel %vm1076, %v1808, %v1746
    %1810 = vrot.lane.b32.xlu0 %v1748, 32
    %v1811 = vpop.permute.xlu0 %1810
    %v1812 = vsel %vm1076, %v1811, %v1748
    %1813 = vrot.lane.b32.xlu0 %v1767, 32
    %v1814 = vpop.permute.xlu0 %1813
    %1815 = vrot.lane.b32.xlu0 %v1770, 32
    %v1816 = vpop.permute.xlu0 %1815
    %1817 = vrot.lane.b32.xlu0 %v1773, 32
    %v1818 = vpop.permute.xlu0 %1817
    %1819 = vrot.lane.b32.xlu0 %v1776, 32
    %v1820 = vpop.permute.xlu0 %1819
    %1821 = vrot.lane.b32.xlu0 %v1779, 32
    %v1822 = vpop.permute.xlu0 %1821
    %1823 = vrot.lane.b32.xlu0 %v1782, 32
    %v1824 = vpop.permute.xlu0 %1823
    %1825 = vrot.lane.b32.xlu0 %v1785, 32
    %v1826 = vpop.permute.xlu0 %1825
    %1827 = vrot.lane.b32.xlu0 %v1788, 32
    %v1828 = vpop.permute.xlu0 %1827
    %1829 = vrot.lane.b32.xlu0 %v1791, 32
    %v1830 = vpop.permute.xlu0 %1829
    %1831 = vrot.lane.b32.xlu0 %v1794, 32
    %v1832 = vpop.permute.xlu0 %1831
    %1833 = vrot.lane.b32.xlu0 %v1797, 32
    %v1834 = vpop.permute.xlu0 %1833
    %1835 = vrot.lane.b32.xlu0 %v1800, 32
    %v1836 = vpop.permute.xlu0 %1835
    %1837 = vrot.lane.b32.xlu0 %v1803, 32
    %v1838 = vpop.permute.xlu0 %1837
    %1839 = vrot.lane.b32.xlu0 %v1806, 32
    %v1840 = vpop.permute.xlu0 %1839
    %1841 = vrot.lane.b32.xlu0 %v1809, 32
    %v1842 = vpop.permute.xlu0 %1841
    %1843 = vrot.lane.b32.xlu0 %v1812, 32
    %v1844 = vpop.permute.xlu0 %1843
    %v1845 = vsel %vm1076, %v1814, %v1718
    %v1846 = vsel %vm1076, %v1816, %v1720
    %v1847 = vsel %vm1076, %v1818, %v1722
    %v1848 = vsel %vm1076, %v1820, %v1724
    %v1849 = vsel %vm1076, %v1822, %v1726
    %v1850 = vsel %vm1076, %v1824, %v1728
    %v1851 = vsel %vm1076, %v1826, %v1730
    %v1852 = vsel %vm1076, %v1828, %v1732
    %v1853 = vsel %vm1076, %v1830, %v1734
    %v1854 = vsel %vm1076, %v1832, %v1736
    %v1855 = vsel %vm1076, %v1834, %v1738
    %v1856 = vsel %vm1076, %v1836, %v1740
    %v1857 = vsel %vm1076, %v1838, %v1742
    %v1858 = vsel %vm1076, %v1840, %v1744
    %v1859 = vsel %vm1076, %v1842, %v1746
    %v1860 = vsel %vm1076, %v1844, %v1748
    %1861 = vrot.lane.b32.xlu0 %v1685, 4
    %v1862 = vpop.permute.xlu0 %1861
    %1863 = vrot.lane.b32.xlu0 %v1686, 4
    %v1864 = vpop.permute.xlu0 %1863
    %1865 = vrot.lane.b32.xlu0 %v1687, 4
    %v1866 = vpop.permute.xlu0 %1865
    %1867 = vrot.lane.b32.xlu0 %v1688, 4
    %v1868 = vpop.permute.xlu0 %1867
    %1869 = vrot.lane.b32.xlu0 %v1689, 4
    %v1870 = vpop.permute.xlu0 %1869
    %1871 = vrot.lane.b32.xlu0 %v1690, 4
    %v1872 = vpop.permute.xlu0 %1871
    %1873 = vrot.lane.b32.xlu0 %v1691, 4
    %v1874 = vpop.permute.xlu0 %1873
    %1875 = vrot.lane.b32.xlu0 %v1692, 4
    %v1876 = vpop.permute.xlu0 %1875
    %1877 = vrot.lane.b32.xlu0 %v1693, 4
    %v1878 = vpop.permute.xlu0 %1877
    %1879 = vrot.lane.b32.xlu0 %v1694, 4
    %v1880 = vpop.permute.xlu0 %1879
    %1881 = vrot.lane.b32.xlu0 %v1695, 4
    %v1882 = vpop.permute.xlu0 %1881
    %1883 = vrot.lane.b32.xlu0 %v1696, 4
    %v1884 = vpop.permute.xlu0 %1883
    %1885 = vrot.lane.b32.xlu0 %v1697, 4
    %v1886 = vpop.permute.xlu0 %1885
    %1887 = vrot.lane.b32.xlu0 %v1698, 4
    %v1888 = vpop.permute.xlu0 %1887
    %1889 = vrot.lane.b32.xlu0 %v1699, 4
    %v1890 = vpop.permute.xlu0 %1889
    %1891 = vrot.lane.b32.xlu0 %v1700, 4
    %v1892 = vpop.permute.xlu0 %1891
    %v1909 = vsel %vm672, %v1845, %v1862
    %v1910 = vsel %vm673, %v1846, %v1864
    %v1911 = vsel %vm674, %v1847, %v1866
    %v1912 = vsel %vm675, %v1848, %v1868
    %v1913 = vsel %vm676, %v1849, %v1870
    %v1914 = vsel %vm677, %v1850, %v1872
    %v1915 = vsel %vm678, %v1851, %v1874
    %v1916 = vsel %vm679, %v1852, %v1876
    %v1917 = vsel %vm680, %v1853, %v1878
    %v1918 = vsel %vm681, %v1854, %v1880
    %v1919 = vsel %vm682, %v1855, %v1882
    %v1920 = vsel %vm683, %v1856, %v1884
    %v1921 = vsel %vm684, %v1857, %v1886
    %v1922 = vsel %vm685, %v1858, %v1888
    %v1923 = vsel %vm686, %v1859, %v1890
    %v1924 = vsel %vm687, %v1860, %v1892
    %1941 = vrot.lane.b32.xlu0 %v1909, 120
    %v1942 = vpop.permute.xlu0 %1941
    %1943 = vrot.lane.b32.xlu0 %v1910, 120
    %v1944 = vpop.permute.xlu0 %1943
    %1945 = vrot.lane.b32.xlu0 %v1911, 120
    %v1946 = vpop.permute.xlu0 %1945
    %1947 = vrot.lane.b32.xlu0 %v1912, 120
    %v1948 = vpop.permute.xlu0 %1947
    %1949 = vrot.lane.b32.xlu0 %v1913, 120
    %v1950 = vpop.permute.xlu0 %1949
    %1951 = vrot.lane.b32.xlu0 %v1914, 120
    %v1952 = vpop.permute.xlu0 %1951
    %1953 = vrot.lane.b32.xlu0 %v1915, 120
    %v1954 = vpop.permute.xlu0 %1953
    %1955 = vrot.lane.b32.xlu0 %v1916, 120
    %v1956 = vpop.permute.xlu0 %1955
    %1957 = vrot.lane.b32.xlu0 %v1917, 120
    %v1958 = vpop.permute.xlu0 %1957
    %1959 = vrot.lane.b32.xlu0 %v1918, 120
    %v1960 = vpop.permute.xlu0 %1959
    %1961 = vrot.lane.b32.xlu0 %v1919, 120
    %v1962 = vpop.permute.xlu0 %1961
    %1963 = vrot.lane.b32.xlu0 %v1920, 120
    %v1964 = vpop.permute.xlu0 %1963
    %1965 = vrot.lane.b32.xlu0 %v1921, 120
    %v1966 = vpop.permute.xlu0 %1965
    %1967 = vrot.lane.b32.xlu0 %v1922, 120
    %v1968 = vpop.permute.xlu0 %1967
    %1969 = vrot.lane.b32.xlu0 %v1923, 120
    %v1970 = vpop.permute.xlu0 %1969
    %1971 = vrot.lane.b32.xlu0 %v1924, 120
    %v1972 = vpop.permute.xlu0 %1971
    %1989 = vrot.lane.b32.xlu0 %v1909, 8
    %v1990 = vpop.permute.xlu0 %1989
    %1991 = vrot.lane.b32.xlu0 %v1910, 8
    %v1992 = vpop.permute.xlu0 %1991
    %1993 = vrot.lane.b32.xlu0 %v1911, 8
    %v1994 = vpop.permute.xlu0 %1993
    %1995 = vrot.lane.b32.xlu0 %v1912, 8
    %v1996 = vpop.permute.xlu0 %1995
    %1997 = vrot.lane.b32.xlu0 %v1913, 8
    %v1998 = vpop.permute.xlu0 %1997
    %1999 = vrot.lane.b32.xlu0 %v1914, 8
    %v2000 = vpop.permute.xlu0 %1999
    %2001 = vrot.lane.b32.xlu0 %v1915, 8
    %v2002 = vpop.permute.xlu0 %2001
    %2003 = vrot.lane.b32.xlu0 %v1916, 8
    %v2004 = vpop.permute.xlu0 %2003
    %2005 = vrot.lane.b32.xlu0 %v1917, 8
    %v2006 = vpop.permute.xlu0 %2005
    %2007 = vrot.lane.b32.xlu0 %v1918, 8
    %v2008 = vpop.permute.xlu0 %2007
    %2009 = vrot.lane.b32.xlu0 %v1919, 8
    %v2010 = vpop.permute.xlu0 %2009
    %2011 = vrot.lane.b32.xlu0 %v1920, 8
    %v2012 = vpop.permute.xlu0 %2011
    %2013 = vrot.lane.b32.xlu0 %v1921, 8
    %v2014 = vpop.permute.xlu0 %2013
    %2015 = vrot.lane.b32.xlu0 %v1922, 8
    %v2016 = vpop.permute.xlu0 %2015
    %2017 = vrot.lane.b32.xlu0 %v1923, 8
    %v2018 = vpop.permute.xlu0 %2017
    %2019 = vrot.lane.b32.xlu0 %v1924, 8
    %v2020 = vpop.permute.xlu0 %2019
    %2037 = vrot.lane.b32.xlu0 %v1909, 24
    %v2038 = vpop.permute.xlu0 %2037
    %2039 = vrot.lane.b32.xlu0 %v1910, 24
    %v2040 = vpop.permute.xlu0 %2039
    %2041 = vrot.lane.b32.xlu0 %v1911, 24
    %v2042 = vpop.permute.xlu0 %2041
    %2043 = vrot.lane.b32.xlu0 %v1912, 24
    %v2044 = vpop.permute.xlu0 %2043
    %2045 = vrot.lane.b32.xlu0 %v1913, 24
    %v2046 = vpop.permute.xlu0 %2045
    %2047 = vrot.lane.b32.xlu0 %v1914, 24
    %v2048 = vpop.permute.xlu0 %2047
    %2049 = vrot.lane.b32.xlu0 %v1915, 24
    %v2050 = vpop.permute.xlu0 %2049
    %2051 = vrot.lane.b32.xlu0 %v1916, 24
    %v2052 = vpop.permute.xlu0 %2051
    %2053 = vrot.lane.b32.xlu0 %v1917, 24
    %v2054 = vpop.permute.xlu0 %2053
    %2055 = vrot.lane.b32.xlu0 %v1918, 24
    %v2056 = vpop.permute.xlu0 %2055
    %2057 = vrot.lane.b32.xlu0 %v1919, 24
    %v2058 = vpop.permute.xlu0 %2057
    %2059 = vrot.lane.b32.xlu0 %v1920, 24
    %v2060 = vpop.permute.xlu0 %2059
    %2061 = vrot.lane.b32.xlu0 %v1921, 24
    %v2062 = vpop.permute.xlu0 %2061
    %2063 = vrot.lane.b32.xlu0 %v1922, 24
    %v2064 = vpop.permute.xlu0 %2063
    %2065 = vrot.lane.b32.xlu0 %v1923, 24
    %v2066 = vpop.permute.xlu0 %2065
    %2067 = vrot.lane.b32.xlu0 %v1924, 24
    %v2068 = vpop.permute.xlu0 %2067
    %2085 = vrot.lane.b32.xlu0 %v1909, 40
    %v2086 = vpop.permute.xlu0 %2085
    %2087 = vrot.lane.b32.xlu0 %v1910, 40
    %v2088 = vpop.permute.xlu0 %2087
    %2089 = vrot.lane.b32.xlu0 %v1911, 40
    %v2090 = vpop.permute.xlu0 %2089
    %2091 = vrot.lane.b32.xlu0 %v1912, 40
    %v2092 = vpop.permute.xlu0 %2091
    %2093 = vrot.lane.b32.xlu0 %v1913, 40
    %v2094 = vpop.permute.xlu0 %2093
    %2095 = vrot.lane.b32.xlu0 %v1914, 40
    %v2096 = vpop.permute.xlu0 %2095
    %2097 = vrot.lane.b32.xlu0 %v1915, 40
    %v2098 = vpop.permute.xlu0 %2097
    %2099 = vrot.lane.b32.xlu0 %v1916, 40
    %v2100 = vpop.permute.xlu0 %2099
    %2101 = vrot.lane.b32.xlu0 %v1917, 40
    %v2102 = vpop.permute.xlu0 %2101
    %2103 = vrot.lane.b32.xlu0 %v1918, 40
    %v2104 = vpop.permute.xlu0 %2103
    %2105 = vrot.lane.b32.xlu0 %v1919, 40
    %v2106 = vpop.permute.xlu0 %2105
    %2107 = vrot.lane.b32.xlu0 %v1920, 40
    %v2108 = vpop.permute.xlu0 %2107
    %2109 = vrot.lane.b32.xlu0 %v1921, 40
    %v2110 = vpop.permute.xlu0 %2109
    %2111 = vrot.lane.b32.xlu0 %v1922, 40
    %v2112 = vpop.permute.xlu0 %2111
    %2113 = vrot.lane.b32.xlu0 %v1923, 40
    %v2114 = vpop.permute.xlu0 %2113
    %2115 = vrot.lane.b32.xlu0 %v1924, 40
    %v2116 = vpop.permute.xlu0 %2115
    %2133 = vrot.lane.b32.xlu0 %v1909, 56
    %v2134 = vpop.permute.xlu0 %2133
    %2135 = vrot.lane.b32.xlu0 %v1910, 56
    %v2136 = vpop.permute.xlu0 %2135
    %2137 = vrot.lane.b32.xlu0 %v1911, 56
    %v2138 = vpop.permute.xlu0 %2137
    %2139 = vrot.lane.b32.xlu0 %v1912, 56
    %v2140 = vpop.permute.xlu0 %2139
    %2141 = vrot.lane.b32.xlu0 %v1913, 56
    %v2142 = vpop.permute.xlu0 %2141
    %2143 = vrot.lane.b32.xlu0 %v1914, 56
    %v2144 = vpop.permute.xlu0 %2143
    %2145 = vrot.lane.b32.xlu0 %v1915, 56
    %v2146 = vpop.permute.xlu0 %2145
    %2147 = vrot.lane.b32.xlu0 %v1916, 56
    %v2148 = vpop.permute.xlu0 %2147
    %2149 = vrot.lane.b32.xlu0 %v1917, 56
    %v2150 = vpop.permute.xlu0 %2149
    %2151 = vrot.lane.b32.xlu0 %v1918, 56
    %v2152 = vpop.permute.xlu0 %2151
    %2153 = vrot.lane.b32.xlu0 %v1919, 56
    %v2154 = vpop.permute.xlu0 %2153
    %2155 = vrot.lane.b32.xlu0 %v1920, 56
    %v2156 = vpop.permute.xlu0 %2155
    %2157 = vrot.lane.b32.xlu0 %v1921, 56
    %v2158 = vpop.permute.xlu0 %2157
    %2159 = vrot.lane.b32.xlu0 %v1922, 56
    %v2160 = vpop.permute.xlu0 %2159
    %2161 = vrot.lane.b32.xlu0 %v1923, 56
    %v2162 = vpop.permute.xlu0 %2161
    %2163 = vrot.lane.b32.xlu0 %v1924, 56
    %v2164 = vpop.permute.xlu0 %2163
    %2181 = vrot.lane.b32.xlu0 %v1909, 72
    %v2182 = vpop.permute.xlu0 %2181
    %2183 = vrot.lane.b32.xlu0 %v1910, 72
    %v2184 = vpop.permute.xlu0 %2183
    %2185 = vrot.lane.b32.xlu0 %v1911, 72
    %v2186 = vpop.permute.xlu0 %2185
    %2187 = vrot.lane.b32.xlu0 %v1912, 72
    %v2188 = vpop.permute.xlu0 %2187
    %2189 = vrot.lane.b32.xlu0 %v1913, 72
    %v2190 = vpop.permute.xlu0 %2189
    %2191 = vrot.lane.b32.xlu0 %v1914, 72
    %v2192 = vpop.permute.xlu0 %2191
    %2193 = vrot.lane.b32.xlu0 %v1915, 72
    %v2194 = vpop.permute.xlu0 %2193
    %2195 = vrot.lane.b32.xlu0 %v1916, 72
    %v2196 = vpop.permute.xlu0 %2195
    %2197 = vrot.lane.b32.xlu0 %v1917, 72
    %v2198 = vpop.permute.xlu0 %2197
    %2199 = vrot.lane.b32.xlu0 %v1918, 72
    %v2200 = vpop.permute.xlu0 %2199
    %2201 = vrot.lane.b32.xlu0 %v1919, 72
    %v2202 = vpop.permute.xlu0 %2201
    %2203 = vrot.lane.b32.xlu0 %v1920, 72
    %v2204 = vpop.permute.xlu0 %2203
    %2205 = vrot.lane.b32.xlu0 %v1921, 72
    %v2206 = vpop.permute.xlu0 %2205
    %2207 = vrot.lane.b32.xlu0 %v1922, 72
    %v2208 = vpop.permute.xlu0 %2207
    %2209 = vrot.lane.b32.xlu0 %v1923, 72
    %v2210 = vpop.permute.xlu0 %2209
    %2211 = vrot.lane.b32.xlu0 %v1924, 72
    %v2212 = vpop.permute.xlu0 %2211
    %2229 = vrot.lane.b32.xlu0 %v1909, 88
    %v2230 = vpop.permute.xlu0 %2229
    %2231 = vrot.lane.b32.xlu0 %v1910, 88
    %v2232 = vpop.permute.xlu0 %2231
    %2233 = vrot.lane.b32.xlu0 %v1911, 88
    %v2234 = vpop.permute.xlu0 %2233
    %2235 = vrot.lane.b32.xlu0 %v1912, 88
    %v2236 = vpop.permute.xlu0 %2235
    %2237 = vrot.lane.b32.xlu0 %v1913, 88
    %v2238 = vpop.permute.xlu0 %2237
    %2239 = vrot.lane.b32.xlu0 %v1914, 88
    %v2240 = vpop.permute.xlu0 %2239
    %2241 = vrot.lane.b32.xlu0 %v1915, 88
    %v2242 = vpop.permute.xlu0 %2241
    %2243 = vrot.lane.b32.xlu0 %v1916, 88
    %v2244 = vpop.permute.xlu0 %2243
    %2245 = vrot.lane.b32.xlu0 %v1917, 88
    %v2246 = vpop.permute.xlu0 %2245
    %2247 = vrot.lane.b32.xlu0 %v1918, 88
    %v2248 = vpop.permute.xlu0 %2247
    %2249 = vrot.lane.b32.xlu0 %v1919, 88
    %v2250 = vpop.permute.xlu0 %2249
    %2251 = vrot.lane.b32.xlu0 %v1920, 88
    %v2252 = vpop.permute.xlu0 %2251
    %2253 = vrot.lane.b32.xlu0 %v1921, 88
    %v2254 = vpop.permute.xlu0 %2253
    %2255 = vrot.lane.b32.xlu0 %v1922, 88
    %v2256 = vpop.permute.xlu0 %2255
    %2257 = vrot.lane.b32.xlu0 %v1923, 88
    %v2258 = vpop.permute.xlu0 %2257
    %2259 = vrot.lane.b32.xlu0 %v1924, 88
    %v2260 = vpop.permute.xlu0 %2259
    %2277 = vrot.lane.b32.xlu0 %v1909, 104
    %v2278 = vpop.permute.xlu0 %2277
    %2279 = vrot.lane.b32.xlu0 %v1910, 104
    %v2280 = vpop.permute.xlu0 %2279
    %2281 = vrot.lane.b32.xlu0 %v1911, 104
    %v2282 = vpop.permute.xlu0 %2281
    %2283 = vrot.lane.b32.xlu0 %v1912, 104
    %v2284 = vpop.permute.xlu0 %2283
    %2285 = vrot.lane.b32.xlu0 %v1913, 104
    %v2286 = vpop.permute.xlu0 %2285
    %2287 = vrot.lane.b32.xlu0 %v1914, 104
    %v2288 = vpop.permute.xlu0 %2287
    %2289 = vrot.lane.b32.xlu0 %v1915, 104
    %v2290 = vpop.permute.xlu0 %2289
    %2291 = vrot.lane.b32.xlu0 %v1916, 104
    %v2292 = vpop.permute.xlu0 %2291
    %2293 = vrot.lane.b32.xlu0 %v1917, 104
    %v2294 = vpop.permute.xlu0 %2293
    %2295 = vrot.lane.b32.xlu0 %v1918, 104
    %v2296 = vpop.permute.xlu0 %2295
    %2297 = vrot.lane.b32.xlu0 %v1919, 104
    %v2298 = vpop.permute.xlu0 %2297
    %2299 = vrot.lane.b32.xlu0 %v1920, 104
    %v2300 = vpop.permute.xlu0 %2299
    %2301 = vrot.lane.b32.xlu0 %v1921, 104
    %v2302 = vpop.permute.xlu0 %2301
    %2303 = vrot.lane.b32.xlu0 %v1922, 104
    %v2304 = vpop.permute.xlu0 %2303
    %2305 = vrot.lane.b32.xlu0 %v1923, 104
    %v2306 = vpop.permute.xlu0 %2305
    %2307 = vrot.lane.b32.xlu0 %v1924, 104
    %v2308 = vpop.permute.xlu0 %2307
    %vm2325 = vcmask 130048
    %v2326 = vsel %vm2325, %v1942, %v1990
    %v2327 = vsel %vm2325, %v1944, %v1992
    %v2328 = vsel %vm2325, %v1946, %v1994
    %v2329 = vsel %vm2325, %v1948, %v1996
    %v2330 = vsel %vm2325, %v1950, %v1998
    %v2331 = vsel %vm2325, %v1952, %v2000
    %v2332 = vsel %vm2325, %v1954, %v2002
    %v2333 = vsel %vm2325, %v1956, %v2004
    %v2334 = vsel %vm2325, %v1958, %v2006
    %v2335 = vsel %vm2325, %v1960, %v2008
    %v2336 = vsel %vm2325, %v1962, %v2010
    %v2337 = vsel %vm2325, %v1964, %v2012
    %v2338 = vsel %vm2325, %v1966, %v2014
    %v2339 = vsel %vm2325, %v1968, %v2016
    %v2340 = vsel %vm2325, %v1970, %v2018
    %v2341 = vsel %vm2325, %v1972, %v2020
    %v2342 = vsel %vm83, %v2326, %v2038
    %v2343 = vsel %vm83, %v2327, %v2040
    %v2344 = vsel %vm83, %v2328, %v2042
    %v2345 = vsel %vm83, %v2329, %v2044
    %v2346 = vsel %vm83, %v2330, %v2046
    %v2347 = vsel %vm83, %v2331, %v2048
    %v2348 = vsel %vm83, %v2332, %v2050
    %v2349 = vsel %vm83, %v2333, %v2052
    %v2350 = vsel %vm83, %v2334, %v2054
    %v2351 = vsel %vm83, %v2335, %v2056
    %v2352 = vsel %vm83, %v2336, %v2058
    %v2353 = vsel %vm83, %v2337, %v2060
    %v2354 = vsel %vm83, %v2338, %v2062
    %v2355 = vsel %vm83, %v2339, %v2064
    %v2356 = vsel %vm83, %v2340, %v2066
    %v2357 = vsel %vm83, %v2341, %v2068
    %vm2358 = vcmask 392192
    %v2359 = vsel %vm2358, %v2342, %v2086
    %v2360 = vsel %vm2358, %v2343, %v2088
    %v2361 = vsel %vm2358, %v2344, %v2090
    %v2362 = vsel %vm2358, %v2345, %v2092
    %v2363 = vsel %vm2358, %v2346, %v2094
    %v2364 = vsel %vm2358, %v2347, %v2096
    %v2365 = vsel %vm2358, %v2348, %v2098
    %v2366 = vsel %vm2358, %v2349, %v2100
    %v2367 = vsel %vm2358, %v2350, %v2102
    %v2368 = vsel %vm2358, %v2351, %v2104
    %v2369 = vsel %vm2358, %v2352, %v2106
    %v2370 = vsel %vm2358, %v2353, %v2108
    %v2371 = vsel %vm2358, %v2354, %v2110
    %v2372 = vsel %vm2358, %v2355, %v2112
    %v2373 = vsel %vm2358, %v2356, %v2114
    %v2374 = vsel %vm2358, %v2357, %v2116
    %vm2375 = vcmask 523264
    %v2376 = vsel %vm2375, %v2359, %v2134
    %v2377 = vsel %vm2375, %v2360, %v2136
    %v2378 = vsel %vm2375, %v2361, %v2138
    %v2379 = vsel %vm2375, %v2362, %v2140
    %v2380 = vsel %vm2375, %v2363, %v2142
    %v2381 = vsel %vm2375, %v2364, %v2144
    %v2382 = vsel %vm2375, %v2365, %v2146
    %v2383 = vsel %vm2375, %v2366, %v2148
    %v2384 = vsel %vm2375, %v2367, %v2150
    %v2385 = vsel %vm2375, %v2368, %v2152
    %v2386 = vsel %vm2375, %v2369, %v2154
    %v2387 = vsel %vm2375, %v2370, %v2156
    %v2388 = vsel %vm2375, %v2371, %v2158
    %v2389 = vsel %vm2375, %v2372, %v2160
    %v2390 = vsel %vm2375, %v2373, %v2162
    %v2391 = vsel %vm2375, %v2374, %v2164
    %vm2392 = vcmask 654336
    %v2393 = vsel %vm2392, %v2376, %v2182
    %v2394 = vsel %vm2392, %v2377, %v2184
    %v2395 = vsel %vm2392, %v2378, %v2186
    %v2396 = vsel %vm2392, %v2379, %v2188
    %v2397 = vsel %vm2392, %v2380, %v2190
    %v2398 = vsel %vm2392, %v2381, %v2192
    %v2399 = vsel %vm2392, %v2382, %v2194
    %v2400 = vsel %vm2392, %v2383, %v2196
    %v2401 = vsel %vm2392, %v2384, %v2198
    %v2402 = vsel %vm2392, %v2385, %v2200
    %v2403 = vsel %vm2392, %v2386, %v2202
    %v2404 = vsel %vm2392, %v2387, %v2204
    %v2405 = vsel %vm2392, %v2388, %v2206
    %v2406 = vsel %vm2392, %v2389, %v2208
    %v2407 = vsel %vm2392, %v2390, %v2210
    %v2408 = vsel %vm2392, %v2391, %v2212
    %vm2409 = vcmask 785408
    %v2410 = vsel %vm2409, %v2393, %v2230
    %v2411 = vsel %vm2409, %v2394, %v2232
    %v2412 = vsel %vm2409, %v2395, %v2234
    %v2413 = vsel %vm2409, %v2396, %v2236
    %v2414 = vsel %vm2409, %v2397, %v2238
    %v2415 = vsel %vm2409, %v2398, %v2240
    %v2416 = vsel %vm2409, %v2399, %v2242
    %v2417 = vsel %vm2409, %v2400, %v2244
    %v2418 = vsel %vm2409, %v2401, %v2246
    %v2419 = vsel %vm2409, %v2402, %v2248
    %v2420 = vsel %vm2409, %v2403, %v2250
    %v2421 = vsel %vm2409, %v2404, %v2252
    %v2422 = vsel %vm2409, %v2405, %v2254
    %v2423 = vsel %vm2409, %v2406, %v2256
    %v2424 = vsel %vm2409, %v2407, %v2258
    %v2425 = vsel %vm2409, %v2408, %v2260
    %vm2426 = vcmask 916480
    %v2427 = vsel %vm2426, %v2410, %v2278
    %v2428 = vsel %vm2426, %v2411, %v2280
    %v2429 = vsel %vm2426, %v2412, %v2282
    %v2430 = vsel %vm2426, %v2413, %v2284
    %v2431 = vsel %vm2426, %v2414, %v2286
    %v2432 = vsel %vm2426, %v2415, %v2288
    %v2433 = vsel %vm2426, %v2416, %v2290
    %v2434 = vsel %vm2426, %v2417, %v2292
    %v2435 = vsel %vm2426, %v2418, %v2294
    %v2436 = vsel %vm2426, %v2419, %v2296
    %v2437 = vsel %vm2426, %v2420, %v2298
    %v2438 = vsel %vm2426, %v2421, %v2300
    %v2439 = vsel %vm2426, %v2422, %v2302
    %v2440 = vsel %vm2426, %v2423, %v2304
    %v2441 = vsel %vm2426, %v2424, %v2306
    %v2442 = vsel %vm2426, %v2425, %v2308
    %2445 = vrot.lane.b32.xlu0 %v941, 96
    %v2446 = vpop.permute.xlu0 %2445
    %2447 = vrot.lane.b32.xlu0 %v942, 96
    %v2448 = vpop.permute.xlu0 %2447
    %v2450 = vsel %vm83, %v2446, 0
    %v2453 = vsel %vm83, %v2448, 0
    %2455 = vmatprep.subr.bf16.mxu0 0
    %2456 = vmatpush1.bf16.xpose.msra.mxu0 %v2453
    %2457 = vmatprep.subr.bf16.mxu0 0
    %2458 = vmatpush1.bf16.xpose.msra.mxu0 %v2450
    %2459 = vmatprep.subr.bf16.mxu0 0
    %2460 = vmatpush1.bf16.xpose.msra.mxu0 %v2453
    %2461 = vmatprep.subr.bf16.mxu0 0
    %2462 = vmatpush1.bf16.xpose.msra.mxu0 %v2450
    %2463 = vmatprep.subr.bf16.mxu0 0
    %2464 = vmatpush1.bf16.xpose.msra.mxu0 %v2453
    %2465 = vmatprep.subr.bf16.mxu0 0
    %2466 = vmatpush1.bf16.xpose.msra.mxu0 %v2450
    %2467 = vmatprep.subr.bf16.mxu0 0
    %2468 = vmatpush1.bf16.xpose.msra.mxu0 %v2453
    %2469 = vmatprep.subr.bf16.mxu0 0
    %2470 = vmatpush1.bf16.xpose.msra.mxu0 %v2450
    %2471 = vmatprep.subr.bf16.mxu0 0
    %2472 = vmatpush2.bf16.xpose.msra.mxu0 0
    %2473 = vmatprep.subr.bf16.mxu0 0
    %2474 = vmatpush2.bf16.xpose.msra.mxu0 0
    %2475 = vmatprep.subr.bf16.mxu0 0
    %2476 = vmatpush2.bf16.xpose.msra.mxu0 0
    %2477 = vmatprep.subr.bf16.mxu0 0
    %2478 = vmatpush2.bf16.xpose.msra.mxu0 0
    %2479 = vmatprep.subr.bf16.mxu0 0
    %2480 = vmatpush2.bf16.xpose.msra.mxu0 0
    %2481 = vmatprep.subr.bf16.mxu0 0
    %2482 = vmatpush2.bf16.xpose.msra.mxu0 0
    %2483 = vmatprep.subr.bf16.mxu0 0
    %2484 = vmatpush2.bf16.xpose.msra.mxu0 0
    %2485 = vmatprep.subr.bf16.mxu0 0
    %2486 = vmatpush2.bf16.xpose.msra.mxu0 0
    %2487 = vmatprep.mubr.bf16.mxu0 0
    %2488 = vmatmul.mubr.bf16.gmra.mxu0 %v956
    %v2489 = vpop.f32.mrf.mxu0
    %v2490 = vadd.f32 %v2427, %v2489
    %v2491 = vpop.f32.mrf.mxu0
    %v2492 = vpop.f32.mrf.mxu0
    %v2493 = vadd.f32 %v2428, %v2492
    %v2494 = vpop.f32.mrf.mxu0
    %2495 = vmatprep.mubr.bf16.mxu0 0
    %2496 = vmatmul.mubr.bf16.gmra.mxu0 %v959
    %v2497 = vpop.f32.mrf.mxu0
    %v2498 = vadd.f32 %v2429, %v2497
    %v2499 = vpop.f32.mrf.mxu0
    %v2500 = vpop.f32.mrf.mxu0
    %v2501 = vadd.f32 %v2430, %v2500
    %v2502 = vpop.f32.mrf.mxu0
    %2503 = vmatprep.mubr.bf16.mxu0 0
    %2504 = vmatmul.mubr.bf16.gmra.mxu0 %v962
    %v2505 = vpop.f32.mrf.mxu0
    %v2506 = vadd.f32 %v2431, %v2505
    %v2507 = vpop.f32.mrf.mxu0
    %v2508 = vpop.f32.mrf.mxu0
    %v2509 = vadd.f32 %v2432, %v2508
    %v2510 = vpop.f32.mrf.mxu0
    %2511 = vmatprep.mubr.bf16.mxu0 0
    %2512 = vmatmul.mubr.bf16.gmra.mxu0 %v965
    %v2513 = vpop.f32.mrf.mxu0
    %v2514 = vadd.f32 %v2433, %v2513
    %v2515 = vpop.f32.mrf.mxu0
    %v2516 = vpop.f32.mrf.mxu0
    %v2517 = vadd.f32 %v2434, %v2516
    %v2518 = vpop.f32.mrf.mxu0
    %2519 = vmatprep.mubr.bf16.mxu0 0
    %2520 = vmatmul.mubr.bf16.gmra.mxu0 %v968
    %v2521 = vpop.f32.mrf.mxu0
    %v2522 = vadd.f32 %v2435, %v2521
    %v2523 = vpop.f32.mrf.mxu0
    %v2524 = vpop.f32.mrf.mxu0
    %v2525 = vadd.f32 %v2436, %v2524
    %v2526 = vpop.f32.mrf.mxu0
    %2527 = vmatprep.mubr.bf16.mxu0 0
    %2528 = vmatmul.mubr.bf16.gmra.mxu0 %v971
    %v2529 = vpop.f32.mrf.mxu0
    %v2530 = vadd.f32 %v2437, %v2529
    %v2531 = vpop.f32.mrf.mxu0
    %v2532 = vpop.f32.mrf.mxu0
    %v2533 = vadd.f32 %v2438, %v2532
    %v2534 = vpop.f32.mrf.mxu0
    %2535 = vmatprep.mubr.bf16.mxu0 0
    %2536 = vmatmul.mubr.bf16.gmra.mxu0 %v974
    %v2537 = vpop.f32.mrf.mxu0
    %v2538 = vadd.f32 %v2439, %v2537
    %v2539 = vpop.f32.mrf.mxu0
    %v2540 = vpop.f32.mrf.mxu0
    %v2541 = vadd.f32 %v2440, %v2540
    %v2542 = vpop.f32.mrf.mxu0
    %2543 = vmatprep.mubr.bf16.mxu0 0
    %2544 = vmatmul.mubr.bf16.gmra.mxu0 %v977
    %v2545 = vpop.f32.mrf.mxu0
    %v2546 = vadd.f32 %v2441, %v2545
    %v2547 = vpop.f32.mrf.mxu0
    %v2548 = vpop.f32.mrf.mxu0
    %v2549 = vadd.f32 %v2442, %v2548
    %v2550 = vpop.f32.mrf.mxu0
    %2551 = vdwg.mxu0
    %v2552 = vadd.f32 %v2490, %v267
    %v2553 = vadd.f32 %v2493, %v268
    %v2554 = vadd.f32 %v2498, %v269
    %v2555 = vadd.f32 %v2501, %v270
    %v2556 = vadd.f32 %v2506, %v271
    %v2557 = vadd.f32 %v2509, %v272
    %v2558 = vadd.f32 %v2514, %v273
    %v2559 = vadd.f32 %v2517, %v274
    %v2560 = vadd.f32 %v2522, %v275
    %v2561 = vadd.f32 %v2525, %v276
    %v2562 = vadd.f32 %v2530, %v277
    %v2563 = vadd.f32 %v2533, %v278
    %v2564 = vadd.f32 %v2538, %v279
    %v2565 = vadd.f32 %v2541, %v280
    %v2566 = vadd.f32 %v2546, %v281
    %v2567 = vadd.f32 %v2549, %v282
    %2568 = vmax.xlane.f32.xlu0 %v2552
    %v2569 = vpop.xlane.xlu0 %2568
    %2570 = vmax.xlane.f32.xlu0 %v2553
    %v2571 = vpop.xlane.xlu0 %2570
    %2572 = vmax.xlane.f32.xlu0 %v2554
    %v2573 = vpop.xlane.xlu0 %2572
    %2574 = vmax.xlane.f32.xlu0 %v2555
    %v2575 = vpop.xlane.xlu0 %2574
    %2576 = vmax.xlane.f32.xlu0 %v2556
    %v2577 = vpop.xlane.xlu0 %2576
    %2578 = vmax.xlane.f32.xlu0 %v2557
    %v2579 = vpop.xlane.xlu0 %2578
    %2580 = vmax.xlane.f32.xlu0 %v2558
    %v2581 = vpop.xlane.xlu0 %2580
    %2582 = vmax.xlane.f32.xlu0 %v2559
    %v2583 = vpop.xlane.xlu0 %2582
    %2584 = vmax.xlane.f32.xlu0 %v2560
    %v2585 = vpop.xlane.xlu0 %2584
    %2586 = vmax.xlane.f32.xlu0 %v2561
    %v2587 = vpop.xlane.xlu0 %2586
    %2588 = vmax.xlane.f32.xlu0 %v2562
    %v2589 = vpop.xlane.xlu0 %2588
    %2590 = vmax.xlane.f32.xlu0 %v2563
    %v2591 = vpop.xlane.xlu0 %2590
    %2592 = vmax.xlane.f32.xlu0 %v2564
    %v2593 = vpop.xlane.xlu0 %2592
    %2594 = vmax.xlane.f32.xlu0 %v2565
    %v2595 = vpop.xlane.xlu0 %2594
    %2596 = vmax.xlane.f32.xlu0 %v2566
    %v2597 = vpop.xlane.xlu0 %2596
    %2598 = vmax.xlane.f32.xlu0 %v2567
    %v2599 = vpop.xlane.xlu0 %2598
    %v2600 = vsub.f32 %v2552, %v2569
    %v2601 = vsub.f32 %v2553, %v2571
    %v2602 = vsub.f32 %v2554, %v2573
    %v2603 = vsub.f32 %v2555, %v2575
    %v2604 = vsub.f32 %v2556, %v2577
    %v2605 = vsub.f32 %v2557, %v2579
    %v2606 = vsub.f32 %v2558, %v2581
    %v2607 = vsub.f32 %v2559, %v2583
    %v2608 = vsub.f32 %v2560, %v2585
    %v2609 = vsub.f32 %v2561, %v2587
    %v2610 = vsub.f32 %v2562, %v2589
    %v2611 = vsub.f32 %v2563, %v2591
    %v2612 = vsub.f32 %v2564, %v2593
    %v2613 = vsub.f32 %v2565, %v2595
    %v2614 = vsub.f32 %v2566, %v2597
    %v2615 = vsub.f32 %v2567, %v2599
    %v2616 = vmul.f32 %v2600, 1.442695
    %v2617 = vpow.pop %v2616
    %v2618 = vmul.f32 %v2601, 1.442695
    %v2619 = vpow.pop %v2618
    %v2620 = vmul.f32 %v2602, 1.442695
    %v2621 = vpow.pop %v2620
    %v2622 = vmul.f32 %v2603, 1.442695
    %v2623 = vpow.pop %v2622
    %v2624 = vmul.f32 %v2604, 1.442695
    %v2625 = vpow.pop %v2624
    %v2626 = vmul.f32 %v2605, 1.442695
    %v2627 = vpow.pop %v2626
    %v2628 = vmul.f32 %v2606, 1.442695
    %v2629 = vpow.pop %v2628
    %v2630 = vmul.f32 %v2607, 1.442695
    %v2631 = vpow.pop %v2630
    %v2632 = vmul.f32 %v2608, 1.442695
    %v2633 = vpow.pop %v2632
    %v2634 = vmul.f32 %v2609, 1.442695
    %v2635 = vpow.pop %v2634
    %v2636 = vmul.f32 %v2610, 1.442695
    %v2637 = vpow.pop %v2636
    %v2638 = vmul.f32 %v2611, 1.442695
    %v2639 = vpow.pop %v2638
    %v2640 = vmul.f32 %v2612, 1.442695
    %v2641 = vpow.pop %v2640
    %v2642 = vmul.f32 %v2613, 1.442695
    %v2643 = vpow.pop %v2642
    %v2644 = vmul.f32 %v2614, 1.442695
    %v2645 = vpow.pop %v2644
    %v2646 = vmul.f32 %v2615, 1.442695
    %v2647 = vpow.pop %v2646
    %2648 = vadd.xlane.f32.xlu0 %v2617
    %v2649 = vpop.xlane.xlu0 %2648
    %2650 = vadd.xlane.f32.xlu0 %v2619
    %v2651 = vpop.xlane.xlu0 %2650
    %2652 = vadd.xlane.f32.xlu0 %v2621
    %v2653 = vpop.xlane.xlu0 %2652
    %2654 = vadd.xlane.f32.xlu0 %v2623
    %v2655 = vpop.xlane.xlu0 %2654
    %2656 = vadd.xlane.f32.xlu0 %v2625
    %v2657 = vpop.xlane.xlu0 %2656
    %2658 = vadd.xlane.f32.xlu0 %v2627
    %v2659 = vpop.xlane.xlu0 %2658
    %2660 = vadd.xlane.f32.xlu0 %v2629
    %v2661 = vpop.xlane.xlu0 %2660
    %2662 = vadd.xlane.f32.xlu0 %v2631
    %v2663 = vpop.xlane.xlu0 %2662
    %2664 = vadd.xlane.f32.xlu0 %v2633
    %v2665 = vpop.xlane.xlu0 %2664
    %2666 = vadd.xlane.f32.xlu0 %v2635
    %v2667 = vpop.xlane.xlu0 %2666
    %2668 = vadd.xlane.f32.xlu0 %v2637
    %v2669 = vpop.xlane.xlu0 %2668
    %2670 = vadd.xlane.f32.xlu0 %v2639
    %v2671 = vpop.xlane.xlu0 %2670
    %2672 = vadd.xlane.f32.xlu0 %v2641
    %v2673 = vpop.xlane.xlu0 %2672
    %2674 = vadd.xlane.f32.xlu0 %v2643
    %v2675 = vpop.xlane.xlu0 %2674
    %2676 = vadd.xlane.f32.xlu0 %v2645
    %v2677 = vpop.xlane.xlu0 %2676
    %2678 = vadd.xlane.f32.xlu0 %v2647
    %v2679 = vpop.xlane.xlu0 %2678
    %v2680 = vrcp.pop %v2649
    %v2681 = vrcp.pop %v2651
    %v2682 = vrcp.pop %v2653
    %v2683 = vrcp.pop %v2655
    %v2684 = vrcp.pop %v2657
    %v2685 = vrcp.pop %v2659
    %v2686 = vrcp.pop %v2661
    %v2687 = vrcp.pop %v2663
    %v2688 = vrcp.pop %v2665
    %v2689 = vrcp.pop %v2667
    %v2690 = vrcp.pop %v2669
    %v2691 = vrcp.pop %v2671
    %v2692 = vrcp.pop %v2673
    %v2693 = vrcp.pop %v2675
    %v2694 = vrcp.pop %v2677
    %v2695 = vrcp.pop %v2679
    %v2696 = vmul.f32 %v2617, %v2680
    %v2697 = vmul.f32 %v2619, %v2681
    %v2698 = vmul.f32 %v2621, %v2682
    %v2699 = vmul.f32 %v2623, %v2683
    %v2700 = vmul.f32 %v2625, %v2684
    %v2701 = vmul.f32 %v2627, %v2685
    %v2702 = vmul.f32 %v2629, %v2686
    %v2703 = vmul.f32 %v2631, %v2687
    %v2704 = vmul.f32 %v2633, %v2688
    %v2705 = vmul.f32 %v2635, %v2689
    %v2706 = vmul.f32 %v2637, %v2690
    %v2707 = vmul.f32 %v2639, %v2691
    %v2708 = vmul.f32 %v2641, %v2692
    %v2709 = vmul.f32 %v2643, %v2693
    %v2710 = vmul.f32 %v2645, %v2694
    %v2711 = vmul.f32 %v2647, %v2695
    %v2712 = vpack.c.bf16 %v2697, %v2696
    %v2713 = vpack.c.bf16 %v2699, %v2698
    %v2714 = vpack.c.bf16 %v2701, %v2700
    %v2715 = vpack.c.bf16 %v2703, %v2702
    %v2716 = vpack.c.bf16 %v2705, %v2704
    %v2717 = vpack.c.bf16 %v2707, %v2706
    %v2718 = vpack.c.bf16 %v2709, %v2708
    %v2719 = vpack.c.bf16 %v2711, %v2710
    %v2720 = vpack.c.bf16 %v918, %v917
    %v2721 = vpack.c.bf16 %v920, %v919
    %v2722 = vpack.c.bf16 %v922, %v921
    %v2723 = vpack.c.bf16 %v924, %v923
    %v2724 = vpack.c.bf16 %v926, %v925
    %v2725 = vpack.c.bf16 %v928, %v927
    %v2726 = vpack.c.bf16 %v930, %v929
    %v2727 = vpack.c.bf16 %v932, %v931
    %2736 = vrot.lane.b32.xlu0 %v2720, 64
    %v2737 = vpop.permute.xlu0 %2736
    %2738 = vrot.lane.b32.xlu0 %v2721, 64
    %v2739 = vpop.permute.xlu0 %2738
    %2740 = vrot.lane.b32.xlu0 %v2722, 64
    %v2741 = vpop.permute.xlu0 %2740
    %2742 = vrot.lane.b32.xlu0 %v2723, 64
    %v2743 = vpop.permute.xlu0 %2742
    %2744 = vrot.lane.b32.xlu0 %v2724, 64
    %v2745 = vpop.permute.xlu0 %2744
    %2746 = vrot.lane.b32.xlu0 %v2725, 64
    %v2747 = vpop.permute.xlu0 %2746
    %2748 = vrot.lane.b32.xlu0 %v2726, 64
    %v2749 = vpop.permute.xlu0 %2748
    %2750 = vrot.lane.b32.xlu0 %v2727, 64
    %v2751 = vpop.permute.xlu0 %2750
    %2760 = vmatprep.subr.bf16.mxu0 0
    %2761 = vmatpush1.bf16.msra.mxu0 %v2751
    %2762 = vmatprep.subr.bf16.mxu0 0
    %2763 = vmatpush1.bf16.msra.mxu0 %v2749
    %2764 = vmatprep.subr.bf16.mxu0 0
    %2765 = vmatpush1.bf16.msra.mxu0 %v2747
    %2766 = vmatprep.subr.bf16.mxu0 0
    %2767 = vmatpush1.bf16.msra.mxu0 %v2745
    %2768 = vmatprep.subr.bf16.mxu0 0
    %2769 = vmatpush1.bf16.msra.mxu0 %v2743
    %2770 = vmatprep.subr.bf16.mxu0 0
    %2771 = vmatpush1.bf16.msra.mxu0 %v2741
    %2772 = vmatprep.subr.bf16.mxu0 0
    %2773 = vmatpush1.bf16.msra.mxu0 %v2739
    %2774 = vmatprep.subr.bf16.mxu0 0
    %2775 = vmatpush1.bf16.msra.mxu0 %v2737
    %2776 = vmatprep.subr.bf16.mxu0 0
    %2777 = vmatpush2.bf16.msra.mxu0 0
    %2778 = vmatprep.subr.bf16.mxu0 0
    %2779 = vmatpush2.bf16.msra.mxu0 0
    %2780 = vmatprep.subr.bf16.mxu0 0
    %2781 = vmatpush2.bf16.msra.mxu0 0
    %2782 = vmatprep.subr.bf16.mxu0 0
    %2783 = vmatpush2.bf16.msra.mxu0 0
    %2784 = vmatprep.subr.bf16.mxu0 0
    %2785 = vmatpush2.bf16.msra.mxu0 0
    %2786 = vmatprep.subr.bf16.mxu0 0
    %2787 = vmatpush2.bf16.msra.mxu0 0
    %2788 = vmatprep.subr.bf16.mxu0 0
    %2789 = vmatpush2.bf16.msra.mxu0 0
    %2790 = vmatprep.subr.bf16.mxu0 0
    %2791 = vmatpush2.bf16.msra.mxu0 0
    %2792 = vmatprep.mubr.bf16.mxu0 0
    %2793 = vmatmul.mubr.bf16.gmra.mxu0 %v2712
    %v2794 = vpop.f32.mrf.mxu0
    %v2795 = vadd.f32 0.0, %v2794
    %v2796 = vpop.f32.mrf.mxu0
    %v2797 = vpop.f32.mrf.mxu0
    %v2798 = vadd.f32 0.0, %v2797
    %v2799 = vpop.f32.mrf.mxu0
    %2800 = vmatprep.mubr.bf16.mxu0 0
    %2801 = vmatmul.mubr.bf16.gmra.mxu0 %v2713
    %v2802 = vpop.f32.mrf.mxu0
    %v2803 = vadd.f32 0.0, %v2802
    %v2804 = vpop.f32.mrf.mxu0
    %v2805 = vpop.f32.mrf.mxu0
    %v2806 = vadd.f32 0.0, %v2805
    %v2807 = vpop.f32.mrf.mxu0
    %2808 = vmatprep.mubr.bf16.mxu0 0
    %2809 = vmatmul.mubr.bf16.gmra.mxu0 %v2714
    %v2810 = vpop.f32.mrf.mxu0
    %v2811 = vadd.f32 0.0, %v2810
    %v2812 = vpop.f32.mrf.mxu0
    %v2813 = vpop.f32.mrf.mxu0
    %v2814 = vadd.f32 0.0, %v2813
    %v2815 = vpop.f32.mrf.mxu0
    %2816 = vmatprep.mubr.bf16.mxu0 0
    %2817 = vmatmul.mubr.bf16.gmra.mxu0 %v2715
    %v2818 = vpop.f32.mrf.mxu0
    %v2819 = vadd.f32 0.0, %v2818
    %v2820 = vpop.f32.mrf.mxu0
    %v2821 = vpop.f32.mrf.mxu0
    %v2822 = vadd.f32 0.0, %v2821
    %v2823 = vpop.f32.mrf.mxu0
    %2824 = vmatprep.mubr.bf16.mxu0 0
    %2825 = vmatmul.mubr.bf16.gmra.mxu0 %v2716
    %v2826 = vpop.f32.mrf.mxu0
    %v2827 = vadd.f32 0.0, %v2826
    %v2828 = vpop.f32.mrf.mxu0
    %v2829 = vpop.f32.mrf.mxu0
    %v2830 = vadd.f32 0.0, %v2829
    %v2831 = vpop.f32.mrf.mxu0
    %2832 = vmatprep.mubr.bf16.mxu0 0
    %2833 = vmatmul.mubr.bf16.gmra.mxu0 %v2717
    %v2834 = vpop.f32.mrf.mxu0
    %v2835 = vadd.f32 0.0, %v2834
    %v2836 = vpop.f32.mrf.mxu0
    %v2837 = vpop.f32.mrf.mxu0
    %v2838 = vadd.f32 0.0, %v2837
    %v2839 = vpop.f32.mrf.mxu0
    %2840 = vmatprep.mubr.bf16.mxu0 0
    %2841 = vmatmul.mubr.bf16.gmra.mxu0 %v2718
    %v2842 = vpop.f32.mrf.mxu0
    %v2843 = vadd.f32 0.0, %v2842
    %v2844 = vpop.f32.mrf.mxu0
    %v2845 = vpop.f32.mrf.mxu0
    %v2846 = vadd.f32 0.0, %v2845
    %v2847 = vpop.f32.mrf.mxu0
    %2848 = vmatprep.mubr.bf16.mxu0 0
    %2849 = vmatmul.mubr.bf16.gmra.mxu0 %v2719
    %v2850 = vpop.f32.mrf.mxu0
    %v2851 = vadd.f32 0.0, %v2850
    %v2852 = vpop.f32.mrf.mxu0
    %v2853 = vpop.f32.mrf.mxu0
    %v2854 = vadd.f32 0.0, %v2853
    %v2855 = vpop.f32.mrf.mxu0
    %2856 = vdwg.mxu0
    %v2857 = vadd.f32 %v2795, %v2811
    %v2858 = vadd.f32 %v2798, %v2814
    %v2859 = vadd.f32 %v2803, %v2819
    %v2860 = vadd.f32 %v2806, %v2822
    %v2861 = vadd.f32 %v2857, %v2827
    %v2862 = vadd.f32 %v2858, %v2830
    %v2863 = vadd.f32 %v2859, %v2835
    %v2864 = vadd.f32 %v2860, %v2838
    %v2865 = vadd.f32 %v2861, %v2843
    %v2866 = vadd.f32 %v2862, %v2846
    %v2867 = vadd.f32 %v2863, %v2851
    %v2868 = vadd.f32 %v2864, %v2854
    %v2869 = vld [vmem:[#allocation4 + $0x40] sm:$0xf]
    %v2870 = vld [vmem:[#allocation4 + $0x44] sm:$0xf]
    %v2871 = vld [vmem:[#allocation4 + $0x48] sm:$0xf]
    %v2872 = vld [vmem:[#allocation4 + $0x4c] sm:$0xf]
    %v2873 = vpack.c.bf16 %v2866, %v2865
    %v2874 = vpack.c.bf16 %v2868, %v2867
    %v2875 = vld [vmem:[#allocation6 + $0xc] sm:$0x1]
    %v2876 = vlaneseq
    %v2877 = vshrl.u32 %v2876, 7
    %v2878 = vsub.s32 0, %v2877
    %v2879 = vrot.slane %v2875, %v2878
    %v2884 = vunpack.c.l.b16 %v2869
    %v2885 = vunpack.c.l.b16 %v2870
    %v2886 = vunpack.c.l.b16 %v2871
    %v2887 = vunpack.c.l.b16 %v2872
    %v2888 = vpack.c.b16 %v2885, %v2884
    %v2889 = vpack.c.b16 %v2887, %v2886
    %v2893 = vsel %vm83, %v2873, 0
    %v2896 = vsel %vm83, %v2874, 0
    %2898 = vmatprep.subr.bf16.mxu0 0
    %2899 = vmatpush1.bf16.msra.mxu0 0
    %2900 = vmatprep.subr.bf16.mxu0 0
    %2901 = vmatpush1.bf16.msra.mxu0 0
    %2902 = vmatprep.subr.bf16.mxu0 0
    %2903 = vmatpush1.bf16.msra.mxu0 0
    %2904 = vmatprep.subr.bf16.mxu0 0
    %2905 = vmatpush1.bf16.msra.mxu0 0
    %2906 = vmatprep.subr.bf16.mxu0 0
    %2907 = vmatpush1.bf16.msra.mxu0 0
    %2908 = vmatprep.subr.bf16.mxu0 0
    %2909 = vmatpush1.bf16.msra.mxu0 0
    %2910 = vmatprep.subr.bf16.mxu0 0
    %2911 = vmatpush1.bf16.msra.mxu0 %v2889
    %2912 = vmatprep.subr.bf16.mxu0 0
    %2913 = vmatpush1.bf16.msra.mxu0 %v2888
    %2914 = vmatprep.subr.bf16.mxu0 0
    %2915 = vmatpush2.bf16.msra.mxu0 0
    %2916 = vmatprep.subr.bf16.mxu0 0
    %2917 = vmatpush2.bf16.msra.mxu0 0
    %2918 = vmatprep.subr.bf16.mxu0 0
    %2919 = vmatpush2.bf16.msra.mxu0 0
    %2920 = vmatprep.subr.bf16.mxu0 0
    %2921 = vmatpush2.bf16.msra.mxu0 0
    %2922 = vmatprep.subr.bf16.mxu0 0
    %2923 = vmatpush2.bf16.msra.mxu0 0
    %2924 = vmatprep.subr.bf16.mxu0 0
    %2925 = vmatpush2.bf16.msra.mxu0 0
    %2926 = vmatprep.subr.bf16.mxu0 0
    %2927 = vmatpush2.bf16.msra.mxu0 0
    %2928 = vmatprep.subr.bf16.mxu0 0
    %2929 = vmatpush2.bf16.msra.mxu0 0
    %2930 = vmatprep.mubr.bf16.mxu0 0
    %2931 = vmatmul.mubr.bf16.gmra.mxu0 %v2893
    %v2932 = vpop.f32.mrf.mxu0
    %v2933 = vadd.f32 %v2879, %v2932
    %v2934 = vpop.f32.mrf.mxu0
    %v2935 = vpop.f32.mrf.mxu0
    %v2936 = vadd.f32 %v2879, %v2935
    %v2937 = vpop.f32.mrf.mxu0
    %2938 = vmatprep.mubr.bf16.mxu0 0
    %2939 = vmatmul.mubr.bf16.gmra.mxu0 %v2896
    %v2940 = vpop.f32.mrf.mxu0
    %v2941 = vadd.f32 %v2879, %v2940
    %v2942 = vpop.f32.mrf.mxu0
    %v2943 = vpop.f32.mrf.mxu0
    %v2944 = vadd.f32 %v2879, %v2943
    %v2945 = vpop.f32.mrf.mxu0
    %2946 = vdwg.mxu0
    %v2947 = vadd.f32 %v247, %v2933
    %v2948 = vadd.f32 %v248, %v2936
    %v2949 = vadd.f32 %v249, %v2941
    %v2950 = vadd.f32 %v250, %v2944
    %v2951 = vld [vmem:[#allocation6 + $0xd] sm:$0x1]
    %v2952 = vld [vmem:[#allocation6 + $0xe] sm:$0x1]
    %v2953 = vsel %vm83, %v2947, 0.0
    %2954 = vadd.xlane.f32.xlu0 %v2953
    %v2955 = vpop.xlane.xlu0 %2954
    %v2956 = vsel %vm83, %v2948, 0.0
    %2957 = vadd.xlane.f32.xlu0 %v2956
    %v2958 = vpop.xlane.xlu0 %2957
    %v2959 = vsel %vm83, %v2949, 0.0
    %2960 = vadd.xlane.f32.xlu0 %v2959
    %v2961 = vpop.xlane.xlu0 %2960
    %v2962 = vsel %vm83, %v2950, 0.0
    %2963 = vadd.xlane.f32.xlu0 %v2962
    %v2964 = vpop.xlane.xlu0 %2963
    %v2965 = vmul.f32 %v2955, %v702
    %v2966 = vmul.f32 %v2958, %v702
    %v2967 = vmul.f32 %v2961, %v702
    %v2968 = vmul.f32 %v2964, %v702
    %v2969 = vsub.f32 %v2947, %v2965
    %v2970 = vsub.f32 %v2948, %v2966
    %v2971 = vsub.f32 %v2949, %v2967
    %v2972 = vsub.f32 %v2950, %v2968
    %v2973 = vmul.f32 %v2969, %v2969
    %v2974 = vmul.f32 %v2970, %v2970
    %v2975 = vmul.f32 %v2971, %v2971
    %v2976 = vmul.f32 %v2972, %v2972
    %v2977 = vsel %vm83, %v2973, 0.0
    %2978 = vadd.xlane.f32.xlu0 %v2977
    %v2979 = vpop.xlane.xlu0 %2978
    %v2980 = vsel %vm83, %v2974, 0.0
    %2981 = vadd.xlane.f32.xlu0 %v2980
    %v2982 = vpop.xlane.xlu0 %2981
    %v2983 = vsel %vm83, %v2975, 0.0
    %2984 = vadd.xlane.f32.xlu0 %v2983
    %v2985 = vpop.xlane.xlu0 %2984
    %v2986 = vsel %vm83, %v2976, 0.0
    %2987 = vadd.xlane.f32.xlu0 %v2986
    %v2988 = vpop.xlane.xlu0 %2987
    %v2989 = vmul.f32 %v2979, %v702
    %v2990 = vmul.f32 %v2982, %v702
    %v2991 = vmul.f32 %v2985, %v702
    %v2992 = vmul.f32 %v2988, %v702
    %v2993 = vadd.f32 %v2989, 1e-05
    %v2994 = vadd.f32 %v2990, 1e-05
    %v2995 = vadd.f32 %v2991, 1e-05
    %v2996 = vadd.f32 %v2992, 1e-05
    %v2997 = vrsqrt.pop %v2993
    %v2998 = vrsqrt.pop %v2994
    %v2999 = vrsqrt.pop %v2995
    %v3000 = vrsqrt.pop %v2996
    %v3001 = vmul.f32 %v2969, %v2997
    %v3002 = vmul.f32 %v2970, %v2998
    %v3003 = vmul.f32 %v2971, %v2999
    %v3004 = vmul.f32 %v2972, %v3000
    %v3005 = vlaneseq
    %v3006 = vshrl.u32 %v3005, 7
    %v3007 = vsub.s32 0, %v3006
    %v3008 = vrot.slane %v2951, %v3007
    %v3009 = vmul.f32 %v3001, %v3008
    %v3010 = vmul.f32 %v3002, %v3008
    %v3011 = vmul.f32 %v3003, %v3008
    %v3012 = vmul.f32 %v3004, %v3008
    %v3013 = vlaneseq
    %v3014 = vshrl.u32 %v3013, 7
    %v3015 = vsub.s32 0, %v3014
    %v3016 = vrot.slane %v2952, %v3015
    %v3017 = vadd.f32 %v3009, %v3016
    %v3018 = vadd.f32 %v3010, %v3016
    %v3019 = vadd.f32 %v3011, %v3016
    %v3020 = vadd.f32 %v3012, %v3016
    %v3021 = vld [vmem:[#allocation4 + $0x50] sm:$0xf]
    %v3022 = vld [vmem:[#allocation4 + $0x54] sm:$0xf]
    %v3023 = vld [vmem:[#allocation4 + $0x58] sm:$0xf]
    %v3024 = vld [vmem:[#allocation4 + $0x5c] sm:$0xf]
    %v3025 = vpack.c.bf16 %v3018, %v3017
    %v3026 = vpack.c.bf16 %v3020, %v3019
    %v3027 = vld [vmem:[#allocation6 + $0xf] sm:$0x1]
    %v3028 = vlaneseq
    %v3029 = vshrl.u32 %v3028, 7
    %v3030 = vsub.s32 0, %v3029
    %v3031 = vrot.slane %v3027, %v3030
    %v3036 = vunpack.c.l.b16 %v3021
    %v3037 = vunpack.c.l.b16 %v3022
    %v3038 = vunpack.c.l.b16 %v3023
    %v3039 = vunpack.c.l.b16 %v3024
    %v3040 = vpack.c.b16 %v3037, %v3036
    %v3041 = vpack.c.b16 %v3039, %v3038
    %v3045 = vsel %vm83, %v3025, 0
    %v3048 = vsel %vm83, %v3026, 0
    %3050 = vmatprep.subr.bf16.mxu0 0
    %3051 = vmatpush1.bf16.msra.mxu0 0
    %3052 = vmatprep.subr.bf16.mxu0 0
    %3053 = vmatpush1.bf16.msra.mxu0 0
    %3054 = vmatprep.subr.bf16.mxu0 0
    %3055 = vmatpush1.bf16.msra.mxu0 0
    %3056 = vmatprep.subr.bf16.mxu0 0
    %3057 = vmatpush1.bf16.msra.mxu0 0
    %3058 = vmatprep.subr.bf16.mxu0 0
    %3059 = vmatpush1.bf16.msra.mxu0 0
    %3060 = vmatprep.subr.bf16.mxu0 0
    %3061 = vmatpush1.bf16.msra.mxu0 0
    %3062 = vmatprep.subr.bf16.mxu0 0
    %3063 = vmatpush1.bf16.msra.mxu0 %v3041
    %3064 = vmatprep.subr.bf16.mxu0 0
    %3065 = vmatpush1.bf16.msra.mxu0 %v3040
    %3066 = vmatprep.subr.bf16.mxu0 0
    %3067 = vmatpush2.bf16.msra.mxu0 0
    %3068 = vmatprep.subr.bf16.mxu0 0
    %3069 = vmatpush2.bf16.msra.mxu0 0
    %3070 = vmatprep.subr.bf16.mxu0 0
    %3071 = vmatpush2.bf16.msra.mxu0 0
    %3072 = vmatprep.subr.bf16.mxu0 0
    %3073 = vmatpush2.bf16.msra.mxu0 0
    %3074 = vmatprep.subr.bf16.mxu0 0
    %3075 = vmatpush2.bf16.msra.mxu0 0
    %3076 = vmatprep.subr.bf16.mxu0 0
    %3077 = vmatpush2.bf16.msra.mxu0 0
    %3078 = vmatprep.subr.bf16.mxu0 0
    %3079 = vmatpush2.bf16.msra.mxu0 0
    %3080 = vmatprep.subr.bf16.mxu0 0
    %3081 = vmatpush2.bf16.msra.mxu0 0
    %3082 = vmatprep.mubr.bf16.mxu0 0
    %3083 = vmatmul.mubr.bf16.gmra.mxu0 %v3045
    %v3084 = vpop.f32.mrf.mxu0
    %v3085 = vadd.f32 %v3031, %v3084
    %v3086 = vpop.f32.mrf.mxu0
    %v3087 = vpop.f32.mrf.mxu0
    %v3088 = vadd.f32 %v3031, %v3087
    %v3089 = vpop.f32.mrf.mxu0
    %3090 = vmatprep.mubr.bf16.mxu0 0
    %3091 = vmatmul.mubr.bf16.gmra.mxu0 %v3048
    %v3092 = vpop.f32.mrf.mxu0
    %v3093 = vadd.f32 %v3031, %v3092
    %v3094 = vpop.f32.mrf.mxu0
    %v3095 = vpop.f32.mrf.mxu0
    %v3096 = vadd.f32 %v3031, %v3095
    %v3097 = vpop.f32.mrf.mxu0
    %3098 = vdwg.mxu0
    %v3099 = vmax.f32 %v3085, 0.0
    %v3100 = vmax.f32 %v3088, 0.0
    %v3101 = vmax.f32 %v3093, 0.0
    %v3102 = vmax.f32 %v3096, 0.0
    %v3103 = vld [vmem:[#allocation4 + $0x60] sm:$0xf]
    %v3104 = vld [vmem:[#allocation4 + $0x64] sm:$0xf]
    %v3105 = vld [vmem:[#allocation4 + $0x68] sm:$0xf]
    %v3106 = vld [vmem:[#allocation4 + $0x6c] sm:$0xf]
    %v3107 = vld [vmem:[#allocation4 + $0x70] sm:$0xf]
    %v3108 = vld [vmem:[#allocation4 + $0x74] sm:$0xf]
    %v3109 = vld [vmem:[#allocation4 + $0x78] sm:$0xf]
    %v3110 = vld [vmem:[#allocation4 + $0x7c] sm:$0xf]
    %v3111 = vpack.c.bf16 %v3100, %v3099
    %v3112 = vpack.c.bf16 %v3102, %v3101
    %v3113 = vld [vmem:[#allocation6 + $0x10] sm:$0x1]
    %v3114 = vlaneseq
    %v3115 = vshrl.u32 %v3114, 7
    %v3116 = vsub.s32 0, %v3115
    %v3117 = vrot.slane %v3113, %v3116
    %v3126 = vunpack.c.l.b16 %v3103
    %v3127 = vunpack.c.l.b16 %v3104
    %v3128 = vunpack.c.l.b16 %v3105
    %v3129 = vunpack.c.l.b16 %v3106
    %v3130 = vunpack.c.l.b16 %v3107
    %v3131 = vunpack.c.l.b16 %v3108
    %v3132 = vunpack.c.l.b16 %v3109
    %v3133 = vunpack.c.l.b16 %v3110
    %v3134 = vpack.c.b16 %v3127, %v3126
    %v3135 = vpack.c.b16 %v3129, %v3128
    %v3136 = vpack.c.b16 %v3131, %v3130
    %v3137 = vpack.c.b16 %v3133, %v3132
    %v3143 = vsel %vm2375, %v3111, 0
    %v3146 = vsel %vm2375, %v3112, 0
    %3148 = vmatprep.subr.bf16.mxu0 0
    %3149 = vmatpush1.bf16.msra.mxu0 0
    %3150 = vmatprep.subr.bf16.mxu0 0
    %3151 = vmatpush1.bf16.msra.mxu0 0
    %3152 = vmatprep.subr.bf16.mxu0 0
    %3153 = vmatpush1.bf16.msra.mxu0 0
    %3154 = vmatprep.subr.bf16.mxu0 0
    %3155 = vmatpush1.bf16.msra.mxu0 0
    %3156 = vmatprep.subr.bf16.mxu0 0
    %3157 = vmatpush1.bf16.msra.mxu0 %v3137
    %3158 = vmatprep.subr.bf16.mxu0 0
    %3159 = vmatpush1.bf16.msra.mxu0 %v3136
    %3160 = vmatprep.subr.bf16.mxu0 0
    %3161 = vmatpush1.bf16.msra.mxu0 %v3135
    %3162 = vmatprep.subr.bf16.mxu0 0
    %3163 = vmatpush1.bf16.msra.mxu0 %v3134
    %3164 = vmatprep.subr.bf16.mxu0 0
    %3165 = vmatpush2.bf16.msra.mxu0 0
    %3166 = vmatprep.subr.bf16.mxu0 0
    %3167 = vmatpush2.bf16.msra.mxu0 0
    %3168 = vmatprep.subr.bf16.mxu0 0
    %3169 = vmatpush2.bf16.msra.mxu0 0
    %3170 = vmatprep.subr.bf16.mxu0 0
    %3171 = vmatpush2.bf16.msra.mxu0 0
    %3172 = vmatprep.subr.bf16.mxu0 0
    %3173 = vmatpush2.bf16.msra.mxu0 0
    %3174 = vmatprep.subr.bf16.mxu0 0
    %3175 = vmatpush2.bf16.msra.mxu0 0
    %3176 = vmatprep.subr.bf16.mxu0 0
    %3177 = vmatpush2.bf16.msra.mxu0 0
    %3178 = vmatprep.subr.bf16.mxu0 0
    %3179 = vmatpush2.bf16.msra.mxu0 0
    %3180 = vmatprep.mubr.bf16.mxu0 0
    %3181 = vmatmul.mubr.bf16.gmra.mxu0 %v3143
    %v3182 = vpop.f32.mrf.mxu0
    %v3183 = vadd.f32 %v3117, %v3182
    %v3184 = vpop.f32.mrf.mxu0
    %v3185 = vpop.f32.mrf.mxu0
    %v3186 = vadd.f32 %v3117, %v3185
    %v3187 = vpop.f32.mrf.mxu0
    %3188 = vmatprep.mubr.bf16.mxu0 0
    %3189 = vmatmul.mubr.bf16.gmra.mxu0 %v3146
    %v3190 = vpop.f32.mrf.mxu0
    %v3191 = vadd.f32 %v3117, %v3190
    %v3192 = vpop.f32.mrf.mxu0
    %v3193 = vpop.f32.mrf.mxu0
    %v3194 = vadd.f32 %v3117, %v3193
    %v3195 = vpop.f32.mrf.mxu0
    %3196 = vdwg.mxu0
    %v3197 = vadd.f32 %v2947, %v3183
    %v3198 = vadd.f32 %v2948, %v3186
    %v3199 = vadd.f32 %v2949, %v3191
    %v3200 = vadd.f32 %v2950, %v3194
    %v3201 = vld [vmem:[#allocation6 + $0x11] sm:$0x1]
    %v3202 = vld [vmem:[#allocation6 + $0x12] sm:$0x1]
    %v3203 = vsel %vm83, %v3197, 0.0
    %3204 = vadd.xlane.f32.xlu0 %v3203
    %v3205 = vpop.xlane.xlu0 %3204
    %v3206 = vsel %vm83, %v3198, 0.0
    %3207 = vadd.xlane.f32.xlu0 %v3206
    %v3208 = vpop.xlane.xlu0 %3207
    %v3209 = vsel %vm83, %v3199, 0.0
    %3210 = vadd.xlane.f32.xlu0 %v3209
    %v3211 = vpop.xlane.xlu0 %3210
    %v3212 = vsel %vm83, %v3200, 0.0
    %3213 = vadd.xlane.f32.xlu0 %v3212
    %v3214 = vpop.xlane.xlu0 %3213
    %v3215 = vmul.f32 %v3205, %v702
    %v3216 = vmul.f32 %v3208, %v702
    %v3217 = vmul.f32 %v3211, %v702
    %v3218 = vmul.f32 %v3214, %v702
    %v3219 = vsub.f32 %v3197, %v3215
    %v3220 = vsub.f32 %v3198, %v3216
    %v3221 = vsub.f32 %v3199, %v3217
    %v3222 = vsub.f32 %v3200, %v3218
    %v3223 = vmul.f32 %v3219, %v3219
    %v3224 = vmul.f32 %v3220, %v3220
    %v3225 = vmul.f32 %v3221, %v3221
    %v3226 = vmul.f32 %v3222, %v3222
    %v3227 = vsel %vm83, %v3223, 0.0
    %3228 = vadd.xlane.f32.xlu0 %v3227
    %v3229 = vpop.xlane.xlu0 %3228
    %v3230 = vsel %vm83, %v3224, 0.0
    %3231 = vadd.xlane.f32.xlu0 %v3230
    %v3232 = vpop.xlane.xlu0 %3231
    %v3233 = vsel %vm83, %v3225, 0.0
    %3234 = vadd.xlane.f32.xlu0 %v3233
    %v3235 = vpop.xlane.xlu0 %3234
    %v3236 = vsel %vm83, %v3226, 0.0
    %3237 = vadd.xlane.f32.xlu0 %v3236
    %v3238 = vpop.xlane.xlu0 %3237
    %v3239 = vmul.f32 %v3229, %v702
    %v3240 = vmul.f32 %v3232, %v702
    %v3241 = vmul.f32 %v3235, %v702
    %v3242 = vmul.f32 %v3238, %v702
    %v3243 = vadd.f32 %v3239, 1e-05
    %v3244 = vadd.f32 %v3240, 1e-05
    %v3245 = vadd.f32 %v3241, 1e-05
    %v3246 = vadd.f32 %v3242, 1e-05
    %v3247 = vrsqrt.pop %v3243
    %v3248 = vrsqrt.pop %v3244
    %v3249 = vrsqrt.pop %v3245
    %v3250 = vrsqrt.pop %v3246
    %v3251 = vmul.f32 %v3219, %v3247
    %v3252 = vmul.f32 %v3220, %v3248
    %v3253 = vmul.f32 %v3221, %v3249
    %v3254 = vmul.f32 %v3222, %v3250
    %v3255 = vlaneseq
    %v3256 = vshrl.u32 %v3255, 7
    %v3257 = vsub.s32 0, %v3256
    %v3258 = vrot.slane %v3201, %v3257
    %v3259 = vmul.f32 %v3251, %v3258
    %v3260 = vmul.f32 %v3252, %v3258
    %v3261 = vmul.f32 %v3253, %v3258
    %v3262 = vmul.f32 %v3254, %v3258
    %v3263 = vlaneseq
    %v3264 = vshrl.u32 %v3263, 7
    %v3265 = vsub.s32 0, %v3264
    %v3266 = vrot.slane %v3202, %v3265
    %v3267 = vadd.f32 %v3259, %v3266
    %v3268 = vadd.f32 %v3260, %v3266
    %v3269 = vadd.f32 %v3261, %v3266
    %v3270 = vadd.f32 %v3262, %v3266
    %v3271 = vld [vmem:[#allocation4 + $0x80] sm:$0xf]
    %v3272 = vld [vmem:[#allocation4 + $0x84] sm:$0xf]
    %v3273 = vld [vmem:[#allocation4 + $0x88] sm:$0xf]
    %v3274 = vld [vmem:[#allocation4 + $0x8c] sm:$0xf]
    %v3275 = vpack.c.bf16 %v3268, %v3267
    %v3276 = vpack.c.bf16 %v3270, %v3269
    %v3277 = vld [vmem:[#allocation6 + $0x13] sm:$0x1]
    %v3278 = vlaneseq
    %v3279 = vshrl.u32 %v3278, 7
    %v3280 = vsub.s32 0, %v3279
    %v3281 = vrot.slane %v3277, %v3280
    %v3286 = vunpack.c.l.b16 %v3271
    %v3287 = vunpack.c.l.b16 %v3272
    %v3288 = vunpack.c.l.b16 %v3273
    %v3289 = vunpack.c.l.b16 %v3274
    %v3290 = vpack.c.b16 %v3287, %v3286
    %v3291 = vpack.c.b16 %v3289, %v3288
    %v3295 = vsel %vm83, %v3275, 0
    %v3298 = vsel %vm83, %v3276, 0
    %3300 = vmatprep.subr.bf16.mxu0 0
    %3301 = vmatpush1.bf16.msra.mxu0 0
    %3302 = vmatprep.subr.bf16.mxu0 0
    %3303 = vmatpush1.bf16.msra.mxu0 0
    %3304 = vmatprep.subr.bf16.mxu0 0
    %3305 = vmatpush1.bf16.msra.mxu0 0
    %3306 = vmatprep.subr.bf16.mxu0 0
    %3307 = vmatpush1.bf16.msra.mxu0 0
    %3308 = vmatprep.subr.bf16.mxu0 0
    %3309 = vmatpush1.bf16.msra.mxu0 0
    %3310 = vmatprep.subr.bf16.mxu0 0
    %3311 = vmatpush1.bf16.msra.mxu0 0
    %3312 = vmatprep.subr.bf16.mxu0 0
    %3313 = vmatpush1.bf16.msra.mxu0 %v3291
    %3314 = vmatprep.subr.bf16.mxu0 0
    %3315 = vmatpush1.bf16.msra.mxu0 %v3290
    %3316 = vmatprep.subr.bf16.mxu0 0
    %3317 = vmatpush2.bf16.msra.mxu0 0
    %3318 = vmatprep.subr.bf16.mxu0 0
    %3319 = vmatpush2.bf16.msra.mxu0 0
    %3320 = vmatprep.subr.bf16.mxu0 0
    %3321 = vmatpush2.bf16.msra.mxu0 0
    %3322 = vmatprep.subr.bf16.mxu0 0
    %3323 = vmatpush2.bf16.msra.mxu0 0
    %3324 = vmatprep.subr.bf16.mxu0 0
    %3325 = vmatpush2.bf16.msra.mxu0 0
    %3326 = vmatprep.subr.bf16.mxu0 0
    %3327 = vmatpush2.bf16.msra.mxu0 0
    %3328 = vmatprep.subr.bf16.mxu0 0
    %3329 = vmatpush2.bf16.msra.mxu0 0
    %3330 = vmatprep.subr.bf16.mxu0 0
    %3331 = vmatpush2.bf16.msra.mxu0 0
    %3332 = vmatprep.mubr.bf16.mxu0 0
    %3333 = vmatmul.mubr.bf16.gmra.mxu0 %v3295
    %v3334 = vpop.f32.mrf.mxu0
    %v3335 = vadd.f32 %v3281, %v3334
    %v3336 = vpop.f32.mrf.mxu0
    %v3337 = vpop.f32.mrf.mxu0
    %v3338 = vadd.f32 %v3281, %v3337
    %v3339 = vpop.f32.mrf.mxu0
    %3340 = vmatprep.mubr.bf16.mxu0 0
    %3341 = vmatmul.mubr.bf16.gmra.mxu0 %v3298
    %v3342 = vpop.f32.mrf.mxu0
    %v3343 = vadd.f32 %v3281, %v3342
    %v3344 = vpop.f32.mrf.mxu0
    %v3345 = vpop.f32.mrf.mxu0
    %v3346 = vadd.f32 %v3281, %v3345
    %v3347 = vpop.f32.mrf.mxu0
    %3348 = vdwg.mxu0
    %v3349 = vmul.f32 %v3335, %v251
    %v3350 = vmul.f32 %v3338, %v252
    %v3351 = vmul.f32 %v3343, %v253
    %v3352 = vmul.f32 %v3346, %v254
    %v3353 = vmul.f32 %v3335, %v255
    %v3354 = vmul.f32 %v3338, %v256
    %v3355 = vmul.f32 %v3343, %v257
    %v3356 = vmul.f32 %v3346, %v258
    %v3357 = vmul.f32 %v3335, %v259
    %v3358 = vmul.f32 %v3338, %v260
    %v3359 = vmul.f32 %v3343, %v261
    %v3360 = vmul.f32 %v3346, %v262
    %v3361 = vmul.f32 %v3335, %v263
    %v3362 = vmul.f32 %v3338, %v264
    %v3363 = vmul.f32 %v3343, %v265
    %v3364 = vmul.f32 %v3346, %v266
    %v3365 = vmul.f32 %v3335, %v870
    %v3366 = vmul.f32 %v3338, %v872
    %v3367 = vmul.f32 %v3343, %v874
    %v3368 = vmul.f32 %v3346, %v876
    %v3369 = vmul.f32 %v3335, %v878
    %v3370 = vmul.f32 %v3338, %v880
    %v3371 = vmul.f32 %v3343, %v882
    %v3372 = vmul.f32 %v3346, %v884
    %v3373 = vmul.f32 %v3335, %v886
    %v3374 = vmul.f32 %v3338, %v888
    %v3375 = vmul.f32 %v3343, %v890
    %v3376 = vmul.f32 %v3346, %v892
    %v3377 = vmul.f32 %v3335, %v894
    %v3378 = vmul.f32 %v3338, %v896
    %v3379 = vmul.f32 %v3343, %v898
    %v3380 = vmul.f32 %v3346, %v900
    %v3381 = vpack.c.bf16 %v3350, %v3349
    %v3382 = vpack.c.bf16 %v3352, %v3351
    %v3383 = vpack.c.bf16 %v3354, %v3353
    %v3384 = vpack.c.bf16 %v3356, %v3355
    %v3385 = vpack.c.bf16 %v3358, %v3357
    %v3386 = vpack.c.bf16 %v3360, %v3359
    %v3387 = vpack.c.bf16 %v3362, %v3361
    %v3388 = vpack.c.bf16 %v3364, %v3363
    %v3389 = vpack.c.bf16 %v3338, %v3335
    %v3390 = vpack.c.bf16 %v3346, %v3343
    %v3392 = vsel %vm83, %v3381, 0
    %v3395 = vsel %vm83, %v3382, 0
    %v3398 = vsel %vm83, %v3383, 0
    %v3401 = vsel %vm83, %v3384, 0
    %v3404 = vsel %vm83, %v3385, 0
    %v3407 = vsel %vm83, %v3386, 0
    %v3410 = vsel %vm83, %v3387, 0
    %v3413 = vsel %vm83, %v3388, 0
    %3415 = vmatprep.subr.bf16.mxu0 0
    %3416 = vmatpush1.bf16.msra.mxu0 0
    %3417 = vmatprep.subr.bf16.mxu0 0
    %3418 = vmatpush1.bf16.msra.mxu0 0
    %3419 = vmatprep.subr.bf16.mxu0 0
    %3420 = vmatpush1.bf16.msra.mxu0 0
    %3421 = vmatprep.subr.bf16.mxu0 0
    %3422 = vmatpush1.bf16.msra.mxu0 0
    %3423 = vmatprep.subr.bf16.mxu0 0
    %3424 = vmatpush1.bf16.msra.mxu0 0
    %3425 = vmatprep.subr.bf16.mxu0 0
    %3426 = vmatpush1.bf16.msra.mxu0 0
    %3427 = vmatprep.subr.bf16.mxu0 0
    %3428 = vmatpush1.bf16.msra.mxu0 %v952
    %3429 = vmatprep.subr.bf16.mxu0 0
    %3430 = vmatpush1.bf16.msra.mxu0 %v951
    %3431 = vmatprep.subr.bf16.mxu0 0
    %3432 = vmatpush2.bf16.msra.mxu0 0
    %3433 = vmatprep.subr.bf16.mxu0 0
    %3434 = vmatpush2.bf16.msra.mxu0 0
    %3435 = vmatprep.subr.bf16.mxu0 0
    %3436 = vmatpush2.bf16.msra.mxu0 0
    %3437 = vmatprep.subr.bf16.mxu0 0
    %3438 = vmatpush2.bf16.msra.mxu0 0
    %3439 = vmatprep.subr.bf16.mxu0 0
    %3440 = vmatpush2.bf16.msra.mxu0 0
    %3441 = vmatprep.subr.bf16.mxu0 0
    %3442 = vmatpush2.bf16.msra.mxu0 0
    %3443 = vmatprep.subr.bf16.mxu0 0
    %3444 = vmatpush2.bf16.msra.mxu0 0
    %3445 = vmatprep.subr.bf16.mxu0 0
    %3446 = vmatpush2.bf16.msra.mxu0 0
    %3447 = vmatprep.mubr.bf16.mxu0 0
    %3448 = vmatmul.mubr.bf16.gmra.mxu0 %v3392
    %v3449 = vpop.f32.mrf.mxu0
    %v3450 = vadd.f32 0.0, %v3449
    %v3451 = vpop.f32.mrf.mxu0
    %v3452 = vpop.f32.mrf.mxu0
    %v3453 = vadd.f32 0.0, %v3452
    %v3454 = vpop.f32.mrf.mxu0
    %3455 = vmatprep.mubr.bf16.mxu0 0
    %3456 = vmatmul.mubr.bf16.gmra.mxu0 %v3395
    %v3457 = vpop.f32.mrf.mxu0
    %v3458 = vadd.f32 0.0, %v3457
    %v3459 = vpop.f32.mrf.mxu0
    %v3460 = vpop.f32.mrf.mxu0
    %v3461 = vadd.f32 0.0, %v3460
    %v3462 = vpop.f32.mrf.mxu0
    %3463 = vmatprep.mubr.bf16.mxu0 0
    %3464 = vmatmul.mubr.bf16.gmra.mxu0 %v3398
    %v3465 = vpop.f32.mrf.mxu0
    %v3466 = vadd.f32 0.0, %v3465
    %v3467 = vpop.f32.mrf.mxu0
    %v3468 = vpop.f32.mrf.mxu0
    %v3469 = vadd.f32 0.0, %v3468
    %v3470 = vpop.f32.mrf.mxu0
    %3471 = vmatprep.mubr.bf16.mxu0 0
    %3472 = vmatmul.mubr.bf16.gmra.mxu0 %v3401
    %v3473 = vpop.f32.mrf.mxu0
    %v3474 = vadd.f32 0.0, %v3473
    %v3475 = vpop.f32.mrf.mxu0
    %v3476 = vpop.f32.mrf.mxu0
    %v3477 = vadd.f32 0.0, %v3476
    %v3478 = vpop.f32.mrf.mxu0
    %3479 = vmatprep.mubr.bf16.mxu0 0
    %3480 = vmatmul.mubr.bf16.gmra.mxu0 %v3404
    %v3481 = vpop.f32.mrf.mxu0
    %v3482 = vadd.f32 0.0, %v3481
    %v3483 = vpop.f32.mrf.mxu0
    %v3484 = vpop.f32.mrf.mxu0
    %v3485 = vadd.f32 0.0, %v3484
    %v3486 = vpop.f32.mrf.mxu0
    %3487 = vmatprep.mubr.bf16.mxu0 0
    %3488 = vmatmul.mubr.bf16.gmra.mxu0 %v3407
    %v3489 = vpop.f32.mrf.mxu0
    %v3490 = vadd.f32 0.0, %v3489
    %v3491 = vpop.f32.mrf.mxu0
    %v3492 = vpop.f32.mrf.mxu0
    %v3493 = vadd.f32 0.0, %v3492
    %v3494 = vpop.f32.mrf.mxu0
    %3495 = vmatprep.mubr.bf16.mxu0 0
    %3496 = vmatmul.mubr.bf16.gmra.mxu0 %v3410
    %v3497 = vpop.f32.mrf.mxu0
    %v3498 = vadd.f32 0.0, %v3497
    %v3499 = vpop.f32.mrf.mxu0
    %v3500 = vpop.f32.mrf.mxu0
    %v3501 = vadd.f32 0.0, %v3500
    %v3502 = vpop.f32.mrf.mxu0
    %3503 = vmatprep.mubr.bf16.mxu0 0
    %3504 = vmatmul.mubr.bf16.gmra.mxu0 %v3413
    %v3505 = vpop.f32.mrf.mxu0
    %v3506 = vadd.f32 0.0, %v3505
    %v3507 = vpop.f32.mrf.mxu0
    %v3508 = vpop.f32.mrf.mxu0
    %v3509 = vadd.f32 0.0, %v3508
    %v3510 = vpop.f32.mrf.mxu0
    %3511 = vdwg.mxu0
    %3512 = vrot.lane.b32.xlu0 %v3450, 32
    %v3513 = vpop.permute.xlu0 %3512
    %v3514 = vsel %vm1076, %v3513, %v3450
    %3515 = vrot.lane.b32.xlu0 %v3453, 32
    %v3516 = vpop.permute.xlu0 %3515
    %v3517 = vsel %vm1076, %v3516, %v3453
    %3518 = vrot.lane.b32.xlu0 %v3458, 32
    %v3519 = vpop.permute.xlu0 %3518
    %v3520 = vsel %vm1076, %v3519, %v3458
    %3521 = vrot.lane.b32.xlu0 %v3461, 32
    %v3522 = vpop.permute.xlu0 %3521
    %v3523 = vsel %vm1076, %v3522, %v3461
    %3524 = vrot.lane.b32.xlu0 %v3466, 32
    %v3525 = vpop.permute.xlu0 %3524
    %v3526 = vsel %vm1076, %v3525, %v3466
    %3527 = vrot.lane.b32.xlu0 %v3469, 32
    %v3528 = vpop.permute.xlu0 %3527
    %v3529 = vsel %vm1076, %v3528, %v3469
    %3530 = vrot.lane.b32.xlu0 %v3474, 32
    %v3531 = vpop.permute.xlu0 %3530
    %v3532 = vsel %vm1076, %v3531, %v3474
    %3533 = vrot.lane.b32.xlu0 %v3477, 32
    %v3534 = vpop.permute.xlu0 %3533
    %v3535 = vsel %vm1076, %v3534, %v3477
    %3536 = vrot.lane.b32.xlu0 %v3482, 32
    %v3537 = vpop.permute.xlu0 %3536
    %v3538 = vsel %vm1076, %v3537, %v3482
    %3539 = vrot.lane.b32.xlu0 %v3485, 32
    %v3540 = vpop.permute.xlu0 %3539
    %v3541 = vsel %vm1076, %v3540, %v3485
    %3542 = vrot.lane.b32.xlu0 %v3490, 32
    %v3543 = vpop.permute.xlu0 %3542
    %v3544 = vsel %vm1076, %v3543, %v3490
    %3545 = vrot.lane.b32.xlu0 %v3493, 32
    %v3546 = vpop.permute.xlu0 %3545
    %v3547 = vsel %vm1076, %v3546, %v3493
    %3548 = vrot.lane.b32.xlu0 %v3498, 32
    %v3549 = vpop.permute.xlu0 %3548
    %v3550 = vsel %vm1076, %v3549, %v3498
    %3551 = vrot.lane.b32.xlu0 %v3501, 32
    %v3552 = vpop.permute.xlu0 %3551
    %v3553 = vsel %vm1076, %v3552, %v3501
    %3554 = vrot.lane.b32.xlu0 %v3506, 32
    %v3555 = vpop.permute.xlu0 %3554
    %v3556 = vsel %vm1076, %v3555, %v3506
    %3557 = vrot.lane.b32.xlu0 %v3509, 32
    %v3558 = vpop.permute.xlu0 %3557
    %v3559 = vsel %vm1076, %v3558, %v3509
    %3560 = vrot.lane.b32.xlu0 %v3514, 32
    %v3561 = vpop.permute.xlu0 %3560
    %3562 = vrot.lane.b32.xlu0 %v3517, 32
    %v3563 = vpop.permute.xlu0 %3562
    %3564 = vrot.lane.b32.xlu0 %v3520, 32
    %v3565 = vpop.permute.xlu0 %3564
    %3566 = vrot.lane.b32.xlu0 %v3523, 32
    %v3567 = vpop.permute.xlu0 %3566
    %3568 = vrot.lane.b32.xlu0 %v3526, 32
    %v3569 = vpop.permute.xlu0 %3568
    %3570 = vrot.lane.b32.xlu0 %v3529, 32
    %v3571 = vpop.permute.xlu0 %3570
    %3572 = vrot.lane.b32.xlu0 %v3532, 32
    %v3573 = vpop.permute.xlu0 %3572
    %3574 = vrot.lane.b32.xlu0 %v3535, 32
    %v3575 = vpop.permute.xlu0 %3574
    %3576 = vrot.lane.b32.xlu0 %v3538, 32
    %v3577 = vpop.permute.xlu0 %3576
    %3578 = vrot.lane.b32.xlu0 %v3541, 32
    %v3579 = vpop.permute.xlu0 %3578
    %3580 = vrot.lane.b32.xlu0 %v3544, 32
    %v3581 = vpop.permute.xlu0 %3580
    %3582 = vrot.lane.b32.xlu0 %v3547, 32
    %v3583 = vpop.permute.xlu0 %3582
    %3584 = vrot.lane.b32.xlu0 %v3550, 32
    %v3585 = vpop.permute.xlu0 %3584
    %3586 = vrot.lane.b32.xlu0 %v3553, 32
    %v3587 = vpop.permute.xlu0 %3586
    %3588 = vrot.lane.b32.xlu0 %v3556, 32
    %v3589 = vpop.permute.xlu0 %3588
    %3590 = vrot.lane.b32.xlu0 %v3559, 32
    %v3591 = vpop.permute.xlu0 %3590
    %v3592 = vsel %vm1076, %v3561, %v3450
    %v3593 = vsel %vm1076, %v3563, %v3453
    %v3594 = vsel %vm1076, %v3565, %v3458
    %v3595 = vsel %vm1076, %v3567, %v3461
    %v3596 = vsel %vm1076, %v3569, %v3466
    %v3597 = vsel %vm1076, %v3571, %v3469
    %v3598 = vsel %vm1076, %v3573, %v3474
    %v3599 = vsel %vm1076, %v3575, %v3477
    %v3600 = vsel %vm1076, %v3577, %v3482
    %v3601 = vsel %vm1076, %v3579, %v3485
    %v3602 = vsel %vm1076, %v3581, %v3490
    %v3603 = vsel %vm1076, %v3583, %v3493
    %v3604 = vsel %vm1076, %v3585, %v3498
    %v3605 = vsel %vm1076, %v3587, %v3501
    %v3606 = vsel %vm1076, %v3589, %v3506
    %v3607 = vsel %vm1076, %v3591, %v3509
    %3624 = vrot.lane.b32.xlu0 %v3450, 1
    %v3625 = vpop.permute.xlu0 %3624
    %3626 = vrot.lane.b32.xlu0 %v3453, 1
    %v3627 = vpop.permute.xlu0 %3626
    %3628 = vrot.lane.b32.xlu0 %v3458, 1
    %v3629 = vpop.permute.xlu0 %3628
    %3630 = vrot.lane.b32.xlu0 %v3461, 1
    %v3631 = vpop.permute.xlu0 %3630
    %3632 = vrot.lane.b32.xlu0 %v3466, 1
    %v3633 = vpop.permute.xlu0 %3632
    %3634 = vrot.lane.b32.xlu0 %v3469, 1
    %v3635 = vpop.permute.xlu0 %3634
    %3636 = vrot.lane.b32.xlu0 %v3474, 1
    %v3637 = vpop.permute.xlu0 %3636
    %3638 = vrot.lane.b32.xlu0 %v3477, 1
    %v3639 = vpop.permute.xlu0 %3638
    %3640 = vrot.lane.b32.xlu0 %v3482, 1
    %v3641 = vpop.permute.xlu0 %3640
    %3642 = vrot.lane.b32.xlu0 %v3485, 1
    %v3643 = vpop.permute.xlu0 %3642
    %3644 = vrot.lane.b32.xlu0 %v3490, 1
    %v3645 = vpop.permute.xlu0 %3644
    %3646 = vrot.lane.b32.xlu0 %v3493, 1
    %v3647 = vpop.permute.xlu0 %3646
    %3648 = vrot.lane.b32.xlu0 %v3498, 1
    %v3649 = vpop.permute.xlu0 %3648
    %3650 = vrot.lane.b32.xlu0 %v3501, 1
    %v3651 = vpop.permute.xlu0 %3650
    %3652 = vrot.lane.b32.xlu0 %v3506, 1
    %v3653 = vpop.permute.xlu0 %3652
    %3654 = vrot.lane.b32.xlu0 %v3509, 1
    %v3655 = vpop.permute.xlu0 %3654
    %v3672 = vsel %vm528, %v3592, %v3625
    %v3673 = vsel %vm529, %v3593, %v3627
    %v3674 = vsel %vm530, %v3594, %v3629
    %v3675 = vsel %vm531, %v3595, %v3631
    %v3676 = vsel %vm532, %v3596, %v3633
    %v3677 = vsel %vm533, %v3597, %v3635
    %v3678 = vsel %vm534, %v3598, %v3637
    %v3679 = vsel %vm535, %v3599, %v3639
    %v3680 = vsel %vm536, %v3600, %v3641
    %v3681 = vsel %vm537, %v3601, %v3643
    %v3682 = vsel %vm538, %v3602, %v3645
    %v3683 = vsel %vm539, %v3603, %v3647
    %v3684 = vsel %vm540, %v3604, %v3649
    %v3685 = vsel %vm541, %v3605, %v3651
    %v3686 = vsel %vm542, %v3606, %v3653
    %v3687 = vsel %vm543, %v3607, %v3655
    %3704 = vrot.lane.b32.xlu0 %v3672, 127
    %v3705 = vpop.permute.xlu0 %3704
    %3706 = vrot.lane.b32.xlu0 %v3673, 127
    %v3707 = vpop.permute.xlu0 %3706
    %3708 = vrot.lane.b32.xlu0 %v3674, 127
    %v3709 = vpop.permute.xlu0 %3708
    %3710 = vrot.lane.b32.xlu0 %v3675, 127
    %v3711 = vpop.permute.xlu0 %3710
    %3712 = vrot.lane.b32.xlu0 %v3676, 127
    %v3713 = vpop.permute.xlu0 %3712
    %3714 = vrot.lane.b32.xlu0 %v3677, 127
    %v3715 = vpop.permute.xlu0 %3714
    %3716 = vrot.lane.b32.xlu0 %v3678, 127
    %v3717 = vpop.permute.xlu0 %3716
    %3718 = vrot.lane.b32.xlu0 %v3679, 127
    %v3719 = vpop.permute.xlu0 %3718
    %3720 = vrot.lane.b32.xlu0 %v3680, 127
    %v3721 = vpop.permute.xlu0 %3720
    %3722 = vrot.lane.b32.xlu0 %v3681, 127
    %v3723 = vpop.permute.xlu0 %3722
    %3724 = vrot.lane.b32.xlu0 %v3682, 127
    %v3725 = vpop.permute.xlu0 %3724
    %3726 = vrot.lane.b32.xlu0 %v3683, 127
    %v3727 = vpop.permute.xlu0 %3726
    %3728 = vrot.lane.b32.xlu0 %v3684, 127
    %v3729 = vpop.permute.xlu0 %3728
    %3730 = vrot.lane.b32.xlu0 %v3685, 127
    %v3731 = vpop.permute.xlu0 %3730
    %3732 = vrot.lane.b32.xlu0 %v3686, 127
    %v3733 = vpop.permute.xlu0 %3732
    %3734 = vrot.lane.b32.xlu0 %v3687, 127
    %v3735 = vpop.permute.xlu0 %3734
    %3752 = vrot.lane.b32.xlu0 %v3705, 32
    %v3753 = vpop.permute.xlu0 %3752
    %v3754 = vsel %vm1076, %v3753, %v3705
    %3755 = vrot.lane.b32.xlu0 %v3707, 32
    %v3756 = vpop.permute.xlu0 %3755
    %v3757 = vsel %vm1076, %v3756, %v3707
    %3758 = vrot.lane.b32.xlu0 %v3709, 32
    %v3759 = vpop.permute.xlu0 %3758
    %v3760 = vsel %vm1076, %v3759, %v3709
    %3761 = vrot.lane.b32.xlu0 %v3711, 32
    %v3762 = vpop.permute.xlu0 %3761
    %v3763 = vsel %vm1076, %v3762, %v3711
    %3764 = vrot.lane.b32.xlu0 %v3713, 32
    %v3765 = vpop.permute.xlu0 %3764
    %v3766 = vsel %vm1076, %v3765, %v3713
    %3767 = vrot.lane.b32.xlu0 %v3715, 32
    %v3768 = vpop.permute.xlu0 %3767
    %v3769 = vsel %vm1076, %v3768, %v3715
    %3770 = vrot.lane.b32.xlu0 %v3717, 32
    %v3771 = vpop.permute.xlu0 %3770
    %v3772 = vsel %vm1076, %v3771, %v3717
    %3773 = vrot.lane.b32.xlu0 %v3719, 32
    %v3774 = vpop.permute.xlu0 %3773
    %v3775 = vsel %vm1076, %v3774, %v3719
    %3776 = vrot.lane.b32.xlu0 %v3721, 32
    %v3777 = vpop.permute.xlu0 %3776
    %v3778 = vsel %vm1076, %v3777, %v3721
    %3779 = vrot.lane.b32.xlu0 %v3723, 32
    %v3780 = vpop.permute.xlu0 %3779
    %v3781 = vsel %vm1076, %v3780, %v3723
    %3782 = vrot.lane.b32.xlu0 %v3725, 32
    %v3783 = vpop.permute.xlu0 %3782
    %v3784 = vsel %vm1076, %v3783, %v3725
    %3785 = vrot.lane.b32.xlu0 %v3727, 32
    %v3786 = vpop.permute.xlu0 %3785
    %v3787 = vsel %vm1076, %v3786, %v3727
    %3788 = vrot.lane.b32.xlu0 %v3729, 32
    %v3789 = vpop.permute.xlu0 %3788
    %v3790 = vsel %vm1076, %v3789, %v3729
    %3791 = vrot.lane.b32.xlu0 %v3731, 32
    %v3792 = vpop.permute.xlu0 %3791
    %v3793 = vsel %vm1076, %v3792, %v3731
    %3794 = vrot.lane.b32.xlu0 %v3733, 32
    %v3795 = vpop.permute.xlu0 %3794
    %v3796 = vsel %vm1076, %v3795, %v3733
    %3797 = vrot.lane.b32.xlu0 %v3735, 32
    %v3798 = vpop.permute.xlu0 %3797
    %v3799 = vsel %vm1076, %v3798, %v3735
    %3800 = vrot.lane.b32.xlu0 %v3754, 32
    %v3801 = vpop.permute.xlu0 %3800
    %3802 = vrot.lane.b32.xlu0 %v3757, 32
    %v3803 = vpop.permute.xlu0 %3802
    %3804 = vrot.lane.b32.xlu0 %v3760, 32
    %v3805 = vpop.permute.xlu0 %3804
    %3806 = vrot.lane.b32.xlu0 %v3763, 32
    %v3807 = vpop.permute.xlu0 %3806
    %3808 = vrot.lane.b32.xlu0 %v3766, 32
    %v3809 = vpop.permute.xlu0 %3808
    %3810 = vrot.lane.b32.xlu0 %v3769, 32
    %v3811 = vpop.permute.xlu0 %3810
    %3812 = vrot.lane.b32.xlu0 %v3772, 32
    %v3813 = vpop.permute.xlu0 %3812
    %3814 = vrot.lane.b32.xlu0 %v3775, 32
    %v3815 = vpop.permute.xlu0 %3814
    %3816 = vrot.lane.b32.xlu0 %v3778, 32
    %v3817 = vpop.permute.xlu0 %3816
    %3818 = vrot.lane.b32.xlu0 %v3781, 32
    %v3819 = vpop.permute.xlu0 %3818
    %3820 = vrot.lane.b32.xlu0 %v3784, 32
    %v3821 = vpop.permute.xlu0 %3820
    %3822 = vrot.lane.b32.xlu0 %v3787, 32
    %v3823 = vpop.permute.xlu0 %3822
    %3824 = vrot.lane.b32.xlu0 %v3790, 32
    %v3825 = vpop.permute.xlu0 %3824
    %3826 = vrot.lane.b32.xlu0 %v3793, 32
    %v3827 = vpop.permute.xlu0 %3826
    %3828 = vrot.lane.b32.xlu0 %v3796, 32
    %v3829 = vpop.permute.xlu0 %3828
    %3830 = vrot.lane.b32.xlu0 %v3799, 32
    %v3831 = vpop.permute.xlu0 %3830
    %v3832 = vsel %vm1076, %v3801, %v3705
    %v3833 = vsel %vm1076, %v3803, %v3707
    %v3834 = vsel %vm1076, %v3805, %v3709
    %v3835 = vsel %vm1076, %v3807, %v3711
    %v3836 = vsel %vm1076, %v3809, %v3713
    %v3837 = vsel %vm1076, %v3811, %v3715
    %v3838 = vsel %vm1076, %v3813, %v3717
    %v3839 = vsel %vm1076, %v3815, %v3719
    %v3840 = vsel %vm1076, %v3817, %v3721
    %v3841 = vsel %vm1076, %v3819, %v3723
    %v3842 = vsel %vm1076, %v3821, %v3725
    %v3843 = vsel %vm1076, %v3823, %v3727
    %v3844 = vsel %vm1076, %v3825, %v3729
    %v3845 = vsel %vm1076, %v3827, %v3731
    %v3846 = vsel %vm1076, %v3829, %v3733
    %v3847 = vsel %vm1076, %v3831, %v3735
    %3848 = vrot.lane.b32.xlu0 %v3672, 1
    %v3849 = vpop.permute.xlu0 %3848
    %3850 = vrot.lane.b32.xlu0 %v3673, 1
    %v3851 = vpop.permute.xlu0 %3850
    %3852 = vrot.lane.b32.xlu0 %v3674, 1
    %v3853 = vpop.permute.xlu0 %3852
    %3854 = vrot.lane.b32.xlu0 %v3675, 1
    %v3855 = vpop.permute.xlu0 %3854
    %3856 = vrot.lane.b32.xlu0 %v3676, 1
    %v3857 = vpop.permute.xlu0 %3856
    %3858 = vrot.lane.b32.xlu0 %v3677, 1
    %v3859 = vpop.permute.xlu0 %3858
    %3860 = vrot.lane.b32.xlu0 %v3678, 1
    %v3861 = vpop.permute.xlu0 %3860
    %3862 = vrot.lane.b32.xlu0 %v3679, 1
    %v3863 = vpop.permute.xlu0 %3862
    %3864 = vrot.lane.b32.xlu0 %v3680, 1
    %v3865 = vpop.permute.xlu0 %3864
    %3866 = vrot.lane.b32.xlu0 %v3681, 1
    %v3867 = vpop.permute.xlu0 %3866
    %3868 = vrot.lane.b32.xlu0 %v3682, 1
    %v3869 = vpop.permute.xlu0 %3868
    %3870 = vrot.lane.b32.xlu0 %v3683, 1
    %v3871 = vpop.permute.xlu0 %3870
    %3872 = vrot.lane.b32.xlu0 %v3684, 1
    %v3873 = vpop.permute.xlu0 %3872
    %3874 = vrot.lane.b32.xlu0 %v3685, 1
    %v3875 = vpop.permute.xlu0 %3874
    %3876 = vrot.lane.b32.xlu0 %v3686, 1
    %v3877 = vpop.permute.xlu0 %3876
    %3878 = vrot.lane.b32.xlu0 %v3687, 1
    %v3879 = vpop.permute.xlu0 %3878
    %v3896 = vsel %vm576, %v3832, %v3849
    %v3897 = vsel %vm577, %v3833, %v3851
    %v3898 = vsel %vm578, %v3834, %v3853
    %v3899 = vsel %vm579, %v3835, %v3855
    %v3900 = vsel %vm580, %v3836, %v3857
    %v3901 = vsel %vm581, %v3837, %v3859
    %v3902 = vsel %vm582, %v3838, %v3861
    %v3903 = vsel %vm583, %v3839, %v3863
    %v3904 = vsel %vm584, %v3840, %v3865
    %v3905 = vsel %vm585, %v3841, %v3867
    %v3906 = vsel %vm586, %v3842, %v3869
    %v3907 = vsel %vm587, %v3843, %v3871
    %v3908 = vsel %vm588, %v3844, %v3873
    %v3909 = vsel %vm589, %v3845, %v3875
    %v3910 = vsel %vm590, %v3846, %v3877
    %v3911 = vsel %vm591, %v3847, %v3879
    %3928 = vrot.lane.b32.xlu0 %v3896, 126
    %v3929 = vpop.permute.xlu0 %3928
    %3930 = vrot.lane.b32.xlu0 %v3897, 126
    %v3931 = vpop.permute.xlu0 %3930
    %3932 = vrot.lane.b32.xlu0 %v3898, 126
    %v3933 = vpop.permute.xlu0 %3932
    %3934 = vrot.lane.b32.xlu0 %v3899, 126
    %v3935 = vpop.permute.xlu0 %3934
    %3936 = vrot.lane.b32.xlu0 %v3900, 126
    %v3937 = vpop.permute.xlu0 %3936
    %3938 = vrot.lane.b32.xlu0 %v3901, 126
    %v3939 = vpop.permute.xlu0 %3938
    %3940 = vrot.lane.b32.xlu0 %v3902, 126
    %v3941 = vpop.permute.xlu0 %3940
    %3942 = vrot.lane.b32.xlu0 %v3903, 126
    %v3943 = vpop.permute.xlu0 %3942
    %3944 = vrot.lane.b32.xlu0 %v3904, 126
    %v3945 = vpop.permute.xlu0 %3944
    %3946 = vrot.lane.b32.xlu0 %v3905, 126
    %v3947 = vpop.permute.xlu0 %3946
    %3948 = vrot.lane.b32.xlu0 %v3906, 126
    %v3949 = vpop.permute.xlu0 %3948
    %3950 = vrot.lane.b32.xlu0 %v3907, 126
    %v3951 = vpop.permute.xlu0 %3950
    %3952 = vrot.lane.b32.xlu0 %v3908, 126
    %v3953 = vpop.permute.xlu0 %3952
    %3954 = vrot.lane.b32.xlu0 %v3909, 126
    %v3955 = vpop.permute.xlu0 %3954
    %3956 = vrot.lane.b32.xlu0 %v3910, 126
    %v3957 = vpop.permute.xlu0 %3956
    %3958 = vrot.lane.b32.xlu0 %v3911, 126
    %v3959 = vpop.permute.xlu0 %3958
    %3976 = vrot.lane.b32.xlu0 %v3929, 32
    %v3977 = vpop.permute.xlu0 %3976
    %v3978 = vsel %vm1076, %v3977, %v3929
    %3979 = vrot.lane.b32.xlu0 %v3931, 32
    %v3980 = vpop.permute.xlu0 %3979
    %v3981 = vsel %vm1076, %v3980, %v3931
    %3982 = vrot.lane.b32.xlu0 %v3933, 32
    %v3983 = vpop.permute.xlu0 %3982
    %v3984 = vsel %vm1076, %v3983, %v3933
    %3985 = vrot.lane.b32.xlu0 %v3935, 32
    %v3986 = vpop.permute.xlu0 %3985
    %v3987 = vsel %vm1076, %v3986, %v3935
    %3988 = vrot.lane.b32.xlu0 %v3937, 32
    %v3989 = vpop.permute.xlu0 %3988
    %v3990 = vsel %vm1076, %v3989, %v3937
    %3991 = vrot.lane.b32.xlu0 %v3939, 32
    %v3992 = vpop.permute.xlu0 %3991
    %v3993 = vsel %vm1076, %v3992, %v3939
    %3994 = vrot.lane.b32.xlu0 %v3941, 32
    %v3995 = vpop.permute.xlu0 %3994
    %v3996 = vsel %vm1076, %v3995, %v3941
    %3997 = vrot.lane.b32.xlu0 %v3943, 32
    %v3998 = vpop.permute.xlu0 %3997
    %v3999 = vsel %vm1076, %v3998, %v3943
    %4000 = vrot.lane.b32.xlu0 %v3945, 32
    %v4001 = vpop.permute.xlu0 %4000
    %v4002 = vsel %vm1076, %v4001, %v3945
    %4003 = vrot.lane.b32.xlu0 %v3947, 32
    %v4004 = vpop.permute.xlu0 %4003
    %v4005 = vsel %vm1076, %v4004, %v3947
    %4006 = vrot.lane.b32.xlu0 %v3949, 32
    %v4007 = vpop.permute.xlu0 %4006
    %v4008 = vsel %vm1076, %v4007, %v3949
    %4009 = vrot.lane.b32.xlu0 %v3951, 32
    %v4010 = vpop.permute.xlu0 %4009
    %v4011 = vsel %vm1076, %v4010, %v3951
    %4012 = vrot.lane.b32.xlu0 %v3953, 32
    %v4013 = vpop.permute.xlu0 %4012
    %v4014 = vsel %vm1076, %v4013, %v3953
    %4015 = vrot.lane.b32.xlu0 %v3955, 32
    %v4016 = vpop.permute.xlu0 %4015
    %v4017 = vsel %vm1076, %v4016, %v3955
    %4018 = vrot.lane.b32.xlu0 %v3957, 32
    %v4019 = vpop.permute.xlu0 %4018
    %v4020 = vsel %vm1076, %v4019, %v3957
    %4021 = vrot.lane.b32.xlu0 %v3959, 32
    %v4022 = vpop.permute.xlu0 %4021
    %v4023 = vsel %vm1076, %v4022, %v3959
    %4024 = vrot.lane.b32.xlu0 %v3978, 32
    %v4025 = vpop.permute.xlu0 %4024
    %4026 = vrot.lane.b32.xlu0 %v3981, 32
    %v4027 = vpop.permute.xlu0 %4026
    %4028 = vrot.lane.b32.xlu0 %v3984, 32
    %v4029 = vpop.permute.xlu0 %4028
    %4030 = vrot.lane.b32.xlu0 %v3987, 32
    %v4031 = vpop.permute.xlu0 %4030
    %4032 = vrot.lane.b32.xlu0 %v3990, 32
    %v4033 = vpop.permute.xlu0 %4032
    %4034 = vrot.lane.b32.xlu0 %v3993, 32
    %v4035 = vpop.permute.xlu0 %4034
    %4036 = vrot.lane.b32.xlu0 %v3996, 32
    %v4037 = vpop.permute.xlu0 %4036
    %4038 = vrot.lane.b32.xlu0 %v3999, 32
    %v4039 = vpop.permute.xlu0 %4038
    %4040 = vrot.lane.b32.xlu0 %v4002, 32
    %v4041 = vpop.permute.xlu0 %4040
    %4042 = vrot.lane.b32.xlu0 %v4005, 32
    %v4043 = vpop.permute.xlu0 %4042
    %4044 = vrot.lane.b32.xlu0 %v4008, 32
    %v4045 = vpop.permute.xlu0 %4044
    %4046 = vrot.lane.b32.xlu0 %v4011, 32
    %v4047 = vpop.permute.xlu0 %4046
    %4048 = vrot.lane.b32.xlu0 %v4014, 32
    %v4049 = vpop.permute.xlu0 %4048
    %4050 = vrot.lane.b32.xlu0 %v4017, 32
    %v4051 = vpop.permute.xlu0 %4050
    %4052 = vrot.lane.b32.xlu0 %v4020, 32
    %v4053 = vpop.permute.xlu0 %4052
    %4054 = vrot.lane.b32.xlu0 %v4023, 32
    %v4055 = vpop.permute.xlu0 %4054
    %v4056 = vsel %vm1076, %v4025, %v3929
    %v4057 = vsel %vm1076, %v4027, %v3931
    %v4058 = vsel %vm1076, %v4029, %v3933
    %v4059 = vsel %vm1076, %v4031, %v3935
    %v4060 = vsel %vm1076, %v4033, %v3937
    %v4061 = vsel %vm1076, %v4035, %v3939
    %v4062 = vsel %vm1076, %v4037, %v3941
    %v4063 = vsel %vm1076, %v4039, %v3943
    %v4064 = vsel %vm1076, %v4041, %v3945
    %v4065 = vsel %vm1076, %v4043, %v3947
    %v4066 = vsel %vm1076, %v4045, %v3949
    %v4067 = vsel %vm1076, %v4047, %v3951
    %v4068 = vsel %vm1076, %v4049, %v3953
    %v4069 = vsel %vm1076, %v4051, %v3955
    %v4070 = vsel %vm1076, %v4053, %v3957
    %v4071 = vsel %vm1076, %v4055, %v3959
    %4072 = vrot.lane.b32.xlu0 %v3896, 2
    %v4073 = vpop.permute.xlu0 %4072
    %4074 = vrot.lane.b32.xlu0 %v3897, 2
    %v4075 = vpop.permute.xlu0 %4074
    %4076 = vrot.lane.b32.xlu0 %v3898, 2
    %v4077 = vpop.permute.xlu0 %4076
    %4078 = vrot.lane.b32.xlu0 %v3899, 2
    %v4079 = vpop.permute.xlu0 %4078
    %4080 = vrot.lane.b32.xlu0 %v3900, 2
    %v4081 = vpop.permute.xlu0 %4080
    %4082 = vrot.lane.b32.xlu0 %v3901, 2
    %v4083 = vpop.permute.xlu0 %4082
    %4084 = vrot.lane.b32.xlu0 %v3902, 2
    %v4085 = vpop.permute.xlu0 %4084
    %4086 = vrot.lane.b32.xlu0 %v3903, 2
    %v4087 = vpop.permute.xlu0 %4086
    %4088 = vrot.lane.b32.xlu0 %v3904, 2
    %v4089 = vpop.permute.xlu0 %4088
    %4090 = vrot.lane.b32.xlu0 %v3905, 2
    %v4091 = vpop.permute.xlu0 %4090
    %4092 = vrot.lane.b32.xlu0 %v3906, 2
    %v4093 = vpop.permute.xlu0 %4092
    %4094 = vrot.lane.b32.xlu0 %v3907, 2
    %v4095 = vpop.permute.xlu0 %4094
    %4096 = vrot.lane.b32.xlu0 %v3908, 2
    %v4097 = vpop.permute.xlu0 %4096
    %4098 = vrot.lane.b32.xlu0 %v3909, 2
    %v4099 = vpop.permute.xlu0 %4098
    %4100 = vrot.lane.b32.xlu0 %v3910, 2
    %v4101 = vpop.permute.xlu0 %4100
    %4102 = vrot.lane.b32.xlu0 %v3911, 2
    %v4103 = vpop.permute.xlu0 %4102
    %v4120 = vsel %vm624, %v4056, %v4073
    %v4121 = vsel %vm625, %v4057, %v4075
    %v4122 = vsel %vm626, %v4058, %v4077
    %v4123 = vsel %vm627, %v4059, %v4079
    %v4124 = vsel %vm628, %v4060, %v4081
    %v4125 = vsel %vm629, %v4061, %v4083
    %v4126 = vsel %vm630, %v4062, %v4085
    %v4127 = vsel %vm631, %v4063, %v4087
    %v4128 = vsel %vm632, %v4064, %v4089
    %v4129 = vsel %vm633, %v4065, %v4091
    %v4130 = vsel %vm634, %v4066, %v4093
    %v4131 = vsel %vm635, %v4067, %v4095
    %v4132 = vsel %vm636, %v4068, %v4097
    %v4133 = vsel %vm637, %v4069, %v4099
    %v4134 = vsel %vm638, %v4070, %v4101
    %v4135 = vsel %vm639, %v4071, %v4103
    %4152 = vrot.lane.b32.xlu0 %v4120, 124
    %v4153 = vpop.permute.xlu0 %4152
    %4154 = vrot.lane.b32.xlu0 %v4121, 124
    %v4155 = vpop.permute.xlu0 %4154
    %4156 = vrot.lane.b32.xlu0 %v4122, 124
    %v4157 = vpop.permute.xlu0 %4156
    %4158 = vrot.lane.b32.xlu0 %v4123, 124
    %v4159 = vpop.permute.xlu0 %4158
    %4160 = vrot.lane.b32.xlu0 %v4124, 124
    %v4161 = vpop.permute.xlu0 %4160
    %4162 = vrot.lane.b32.xlu0 %v4125, 124
    %v4163 = vpop.permute.xlu0 %4162
    %4164 = vrot.lane.b32.xlu0 %v4126, 124
    %v4165 = vpop.permute.xlu0 %4164
    %4166 = vrot.lane.b32.xlu0 %v4127, 124
    %v4167 = vpop.permute.xlu0 %4166
    %4168 = vrot.lane.b32.xlu0 %v4128, 124
    %v4169 = vpop.permute.xlu0 %4168
    %4170 = vrot.lane.b32.xlu0 %v4129, 124
    %v4171 = vpop.permute.xlu0 %4170
    %4172 = vrot.lane.b32.xlu0 %v4130, 124
    %v4173 = vpop.permute.xlu0 %4172
    %4174 = vrot.lane.b32.xlu0 %v4131, 124
    %v4175 = vpop.permute.xlu0 %4174
    %4176 = vrot.lane.b32.xlu0 %v4132, 124
    %v4177 = vpop.permute.xlu0 %4176
    %4178 = vrot.lane.b32.xlu0 %v4133, 124
    %v4179 = vpop.permute.xlu0 %4178
    %4180 = vrot.lane.b32.xlu0 %v4134, 124
    %v4181 = vpop.permute.xlu0 %4180
    %4182 = vrot.lane.b32.xlu0 %v4135, 124
    %v4183 = vpop.permute.xlu0 %4182
    %4200 = vrot.lane.b32.xlu0 %v4153, 32
    %v4201 = vpop.permute.xlu0 %4200
    %v4202 = vsel %vm1076, %v4201, %v4153
    %4203 = vrot.lane.b32.xlu0 %v4155, 32
    %v4204 = vpop.permute.xlu0 %4203
    %v4205 = vsel %vm1076, %v4204, %v4155
    %4206 = vrot.lane.b32.xlu0 %v4157, 32
    %v4207 = vpop.permute.xlu0 %4206
    %v4208 = vsel %vm1076, %v4207, %v4157
    %4209 = vrot.lane.b32.xlu0 %v4159, 32
    %v4210 = vpop.permute.xlu0 %4209
    %v4211 = vsel %vm1076, %v4210, %v4159
    %4212 = vrot.lane.b32.xlu0 %v4161, 32
    %v4213 = vpop.permute.xlu0 %4212
    %v4214 = vsel %vm1076, %v4213, %v4161
    %4215 = vrot.lane.b32.xlu0 %v4163, 32
    %v4216 = vpop.permute.xlu0 %4215
    %v4217 = vsel %vm1076, %v4216, %v4163
    %4218 = vrot.lane.b32.xlu0 %v4165, 32
    %v4219 = vpop.permute.xlu0 %4218
    %v4220 = vsel %vm1076, %v4219, %v4165
    %4221 = vrot.lane.b32.xlu0 %v4167, 32
    %v4222 = vpop.permute.xlu0 %4221
    %v4223 = vsel %vm1076, %v4222, %v4167
    %4224 = vrot.lane.b32.xlu0 %v4169, 32
    %v4225 = vpop.permute.xlu0 %4224
    %v4226 = vsel %vm1076, %v4225, %v4169
    %4227 = vrot.lane.b32.xlu0 %v4171, 32
    %v4228 = vpop.permute.xlu0 %4227
    %v4229 = vsel %vm1076, %v4228, %v4171
    %4230 = vrot.lane.b32.xlu0 %v4173, 32
    %v4231 = vpop.permute.xlu0 %4230
    %v4232 = vsel %vm1076, %v4231, %v4173
    %4233 = vrot.lane.b32.xlu0 %v4175, 32
    %v4234 = vpop.permute.xlu0 %4233
    %v4235 = vsel %vm1076, %v4234, %v4175
    %4236 = vrot.lane.b32.xlu0 %v4177, 32
    %v4237 = vpop.permute.xlu0 %4236
    %v4238 = vsel %vm1076, %v4237, %v4177
    %4239 = vrot.lane.b32.xlu0 %v4179, 32
    %v4240 = vpop.permute.xlu0 %4239
    %v4241 = vsel %vm1076, %v4240, %v4179
    %4242 = vrot.lane.b32.xlu0 %v4181, 32
    %v4243 = vpop.permute.xlu0 %4242
    %v4244 = vsel %vm1076, %v4243, %v4181
    %4245 = vrot.lane.b32.xlu0 %v4183, 32
    %v4246 = vpop.permute.xlu0 %4245
    %v4247 = vsel %vm1076, %v4246, %v4183
    %4248 = vrot.lane.b32.xlu0 %v4202, 32
    %v4249 = vpop.permute.xlu0 %4248
    %4250 = vrot.lane.b32.xlu0 %v4205, 32
    %v4251 = vpop.permute.xlu0 %4250
    %4252 = vrot.lane.b32.xlu0 %v4208, 32
    %v4253 = vpop.permute.xlu0 %4252
    %4254 = vrot.lane.b32.xlu0 %v4211, 32
    %v4255 = vpop.permute.xlu0 %4254
    %4256 = vrot.lane.b32.xlu0 %v4214, 32
    %v4257 = vpop.permute.xlu0 %4256
    %4258 = vrot.lane.b32.xlu0 %v4217, 32
    %v4259 = vpop.permute.xlu0 %4258
    %4260 = vrot.lane.b32.xlu0 %v4220, 32
    %v4261 = vpop.permute.xlu0 %4260
    %4262 = vrot.lane.b32.xlu0 %v4223, 32
    %v4263 = vpop.permute.xlu0 %4262
    %4264 = vrot.lane.b32.xlu0 %v4226, 32
    %v4265 = vpop.permute.xlu0 %4264
    %4266 = vrot.lane.b32.xlu0 %v4229, 32
    %v4267 = vpop.permute.xlu0 %4266
    %4268 = vrot.lane.b32.xlu0 %v4232, 32
    %v4269 = vpop.permute.xlu0 %4268
    %4270 = vrot.lane.b32.xlu0 %v4235, 32
    %v4271 = vpop.permute.xlu0 %4270
    %4272 = vrot.lane.b32.xlu0 %v4238, 32
    %v4273 = vpop.permute.xlu0 %4272
    %4274 = vrot.lane.b32.xlu0 %v4241, 32
    %v4275 = vpop.permute.xlu0 %4274
    %4276 = vrot.lane.b32.xlu0 %v4244, 32
    %v4277 = vpop.permute.xlu0 %4276
    %4278 = vrot.lane.b32.xlu0 %v4247, 32
    %v4279 = vpop.permute.xlu0 %4278
    %v4280 = vsel %vm1076, %v4249, %v4153
    %v4281 = vsel %vm1076, %v4251, %v4155
    %v4282 = vsel %vm1076, %v4253, %v4157
    %v4283 = vsel %vm1076, %v4255, %v4159
    %v4284 = vsel %vm1076, %v4257, %v4161
    %v4285 = vsel %vm1076, %v4259, %v4163
    %v4286 = vsel %vm1076, %v4261, %v4165
    %v4287 = vsel %vm1076, %v4263, %v4167
    %v4288 = vsel %vm1076, %v4265, %v4169
    %v4289 = vsel %vm1076, %v4267, %v4171
    %v4290 = vsel %vm1076, %v4269, %v4173
    %v4291 = vsel %vm1076, %v4271, %v4175
    %v4292 = vsel %vm1076, %v4273, %v4177
    %v4293 = vsel %vm1076, %v4275, %v4179
    %v4294 = vsel %vm1076, %v4277, %v4181
    %v4295 = vsel %vm1076, %v4279, %v4183
    %4296 = vrot.lane.b32.xlu0 %v4120, 4
    %v4297 = vpop.permute.xlu0 %4296
    %4298 = vrot.lane.b32.xlu0 %v4121, 4
    %v4299 = vpop.permute.xlu0 %4298
    %4300 = vrot.lane.b32.xlu0 %v4122, 4
    %v4301 = vpop.permute.xlu0 %4300
    %4302 = vrot.lane.b32.xlu0 %v4123, 4
    %v4303 = vpop.permute.xlu0 %4302
    %4304 = vrot.lane.b32.xlu0 %v4124, 4
    %v4305 = vpop.permute.xlu0 %4304
    %4306 = vrot.lane.b32.xlu0 %v4125, 4
    %v4307 = vpop.permute.xlu0 %4306
    %4308 = vrot.lane.b32.xlu0 %v4126, 4
    %v4309 = vpop.permute.xlu0 %4308
    %4310 = vrot.lane.b32.xlu0 %v4127, 4
    %v4311 = vpop.permute.xlu0 %4310
    %4312 = vrot.lane.b32.xlu0 %v4128, 4
    %v4313 = vpop.permute.xlu0 %4312
    %4314 = vrot.lane.b32.xlu0 %v4129, 4
    %v4315 = vpop.permute.xlu0 %4314
    %4316 = vrot.lane.b32.xlu0 %v4130, 4
    %v4317 = vpop.permute.xlu0 %4316
    %4318 = vrot.lane.b32.xlu0 %v4131, 4
    %v4319 = vpop.permute.xlu0 %4318
    %4320 = vrot.lane.b32.xlu0 %v4132, 4
    %v4321 = vpop.permute.xlu0 %4320
    %4322 = vrot.lane.b32.xlu0 %v4133, 4
    %v4323 = vpop.permute.xlu0 %4322
    %4324 = vrot.lane.b32.xlu0 %v4134, 4
    %v4325 = vpop.permute.xlu0 %4324
    %4326 = vrot.lane.b32.xlu0 %v4135, 4
    %v4327 = vpop.permute.xlu0 %4326
    %v4344 = vsel %vm672, %v4280, %v4297
    %v4345 = vsel %vm673, %v4281, %v4299
    %v4346 = vsel %vm674, %v4282, %v4301
    %v4347 = vsel %vm675, %v4283, %v4303
    %v4348 = vsel %vm676, %v4284, %v4305
    %v4349 = vsel %vm677, %v4285, %v4307
    %v4350 = vsel %vm678, %v4286, %v4309
    %v4351 = vsel %vm679, %v4287, %v4311
    %v4352 = vsel %vm680, %v4288, %v4313
    %v4353 = vsel %vm681, %v4289, %v4315
    %v4354 = vsel %vm682, %v4290, %v4317
    %v4355 = vsel %vm683, %v4291, %v4319
    %v4356 = vsel %vm684, %v4292, %v4321
    %v4357 = vsel %vm685, %v4293, %v4323
    %v4358 = vsel %vm686, %v4294, %v4325
    %v4359 = vsel %vm687, %v4295, %v4327
    %4376 = vrot.lane.b32.xlu0 %v4344, 120
    %v4377 = vpop.permute.xlu0 %4376
    %4378 = vrot.lane.b32.xlu0 %v4345, 120
    %v4379 = vpop.permute.xlu0 %4378
    %4380 = vrot.lane.b32.xlu0 %v4346, 120
    %v4381 = vpop.permute.xlu0 %4380
    %4382 = vrot.lane.b32.xlu0 %v4347, 120
    %v4383 = vpop.permute.xlu0 %4382
    %4384 = vrot.lane.b32.xlu0 %v4348, 120
    %v4385 = vpop.permute.xlu0 %4384
    %4386 = vrot.lane.b32.xlu0 %v4349, 120
    %v4387 = vpop.permute.xlu0 %4386
    %4388 = vrot.lane.b32.xlu0 %v4350, 120
    %v4389 = vpop.permute.xlu0 %4388
    %4390 = vrot.lane.b32.xlu0 %v4351, 120
    %v4391 = vpop.permute.xlu0 %4390
    %4392 = vrot.lane.b32.xlu0 %v4352, 120
    %v4393 = vpop.permute.xlu0 %4392
    %4394 = vrot.lane.b32.xlu0 %v4353, 120
    %v4395 = vpop.permute.xlu0 %4394
    %4396 = vrot.lane.b32.xlu0 %v4354, 120
    %v4397 = vpop.permute.xlu0 %4396
    %4398 = vrot.lane.b32.xlu0 %v4355, 120
    %v4399 = vpop.permute.xlu0 %4398
    %4400 = vrot.lane.b32.xlu0 %v4356, 120
    %v4401 = vpop.permute.xlu0 %4400
    %4402 = vrot.lane.b32.xlu0 %v4357, 120
    %v4403 = vpop.permute.xlu0 %4402
    %4404 = vrot.lane.b32.xlu0 %v4358, 120
    %v4405 = vpop.permute.xlu0 %4404
    %4406 = vrot.lane.b32.xlu0 %v4359, 120
    %v4407 = vpop.permute.xlu0 %4406
    %4424 = vrot.lane.b32.xlu0 %v4344, 8
    %v4425 = vpop.permute.xlu0 %4424
    %4426 = vrot.lane.b32.xlu0 %v4345, 8
    %v4427 = vpop.permute.xlu0 %4426
    %4428 = vrot.lane.b32.xlu0 %v4346, 8
    %v4429 = vpop.permute.xlu0 %4428
    %4430 = vrot.lane.b32.xlu0 %v4347, 8
    %v4431 = vpop.permute.xlu0 %4430
    %4432 = vrot.lane.b32.xlu0 %v4348, 8
    %v4433 = vpop.permute.xlu0 %4432
    %4434 = vrot.lane.b32.xlu0 %v4349, 8
    %v4435 = vpop.permute.xlu0 %4434
    %4436 = vrot.lane.b32.xlu0 %v4350, 8
    %v4437 = vpop.permute.xlu0 %4436
    %4438 = vrot.lane.b32.xlu0 %v4351, 8
    %v4439 = vpop.permute.xlu0 %4438
    %4440 = vrot.lane.b32.xlu0 %v4352, 8
    %v4441 = vpop.permute.xlu0 %4440
    %4442 = vrot.lane.b32.xlu0 %v4353, 8
    %v4443 = vpop.permute.xlu0 %4442
    %4444 = vrot.lane.b32.xlu0 %v4354, 8
    %v4445 = vpop.permute.xlu0 %4444
    %4446 = vrot.lane.b32.xlu0 %v4355, 8
    %v4447 = vpop.permute.xlu0 %4446
    %4448 = vrot.lane.b32.xlu0 %v4356, 8
    %v4449 = vpop.permute.xlu0 %4448
    %4450 = vrot.lane.b32.xlu0 %v4357, 8
    %v4451 = vpop.permute.xlu0 %4450
    %4452 = vrot.lane.b32.xlu0 %v4358, 8
    %v4453 = vpop.permute.xlu0 %4452
    %4454 = vrot.lane.b32.xlu0 %v4359, 8
    %v4455 = vpop.permute.xlu0 %4454
    %4472 = vrot.lane.b32.xlu0 %v4344, 24
    %v4473 = vpop.permute.xlu0 %4472
    %4474 = vrot.lane.b32.xlu0 %v4345, 24
    %v4475 = vpop.permute.xlu0 %4474
    %4476 = vrot.lane.b32.xlu0 %v4346, 24
    %v4477 = vpop.permute.xlu0 %4476
    %4478 = vrot.lane.b32.xlu0 %v4347, 24
    %v4479 = vpop.permute.xlu0 %4478
    %4480 = vrot.lane.b32.xlu0 %v4348, 24
    %v4481 = vpop.permute.xlu0 %4480
    %4482 = vrot.lane.b32.xlu0 %v4349, 24
    %v4483 = vpop.permute.xlu0 %4482
    %4484 = vrot.lane.b32.xlu0 %v4350, 24
    %v4485 = vpop.permute.xlu0 %4484
    %4486 = vrot.lane.b32.xlu0 %v4351, 24
    %v4487 = vpop.permute.xlu0 %4486
    %4488 = vrot.lane.b32.xlu0 %v4352, 24
    %v4489 = vpop.permute.xlu0 %4488
    %4490 = vrot.lane.b32.xlu0 %v4353, 24
    %v4491 = vpop.permute.xlu0 %4490
    %4492 = vrot.lane.b32.xlu0 %v4354, 24
    %v4493 = vpop.permute.xlu0 %4492
    %4494 = vrot.lane.b32.xlu0 %v4355, 24
    %v4495 = vpop.permute.xlu0 %4494
    %4496 = vrot.lane.b32.xlu0 %v4356, 24
    %v4497 = vpop.permute.xlu0 %4496
    %4498 = vrot.lane.b32.xlu0 %v4357, 24
    %v4499 = vpop.permute.xlu0 %4498
    %4500 = vrot.lane.b32.xlu0 %v4358, 24
    %v4501 = vpop.permute.xlu0 %4500
    %4502 = vrot.lane.b32.xlu0 %v4359, 24
    %v4503 = vpop.permute.xlu0 %4502
    %4520 = vrot.lane.b32.xlu0 %v4344, 40
    %v4521 = vpop.permute.xlu0 %4520
    %4522 = vrot.lane.b32.xlu0 %v4345, 40
    %v4523 = vpop.permute.xlu0 %4522
    %4524 = vrot.lane.b32.xlu0 %v4346, 40
    %v4525 = vpop.permute.xlu0 %4524
    %4526 = vrot.lane.b32.xlu0 %v4347, 40
    %v4527 = vpop.permute.xlu0 %4526
    %4528 = vrot.lane.b32.xlu0 %v4348, 40
    %v4529 = vpop.permute.xlu0 %4528
    %4530 = vrot.lane.b32.xlu0 %v4349, 40
    %v4531 = vpop.permute.xlu0 %4530
    %4532 = vrot.lane.b32.xlu0 %v4350, 40
    %v4533 = vpop.permute.xlu0 %4532
    %4534 = vrot.lane.b32.xlu0 %v4351, 40
    %v4535 = vpop.permute.xlu0 %4534
    %4536 = vrot.lane.b32.xlu0 %v4352, 40
    %v4537 = vpop.permute.xlu0 %4536
    %4538 = vrot.lane.b32.xlu0 %v4353, 40
    %v4539 = vpop.permute.xlu0 %4538
    %4540 = vrot.lane.b32.xlu0 %v4354, 40
    %v4541 = vpop.permute.xlu0 %4540
    %4542 = vrot.lane.b32.xlu0 %v4355, 40
    %v4543 = vpop.permute.xlu0 %4542
    %4544 = vrot.lane.b32.xlu0 %v4356, 40
    %v4545 = vpop.permute.xlu0 %4544
    %4546 = vrot.lane.b32.xlu0 %v4357, 40
    %v4547 = vpop.permute.xlu0 %4546
    %4548 = vrot.lane.b32.xlu0 %v4358, 40
    %v4549 = vpop.permute.xlu0 %4548
    %4550 = vrot.lane.b32.xlu0 %v4359, 40
    %v4551 = vpop.permute.xlu0 %4550
    %4568 = vrot.lane.b32.xlu0 %v4344, 56
    %v4569 = vpop.permute.xlu0 %4568
    %4570 = vrot.lane.b32.xlu0 %v4345, 56
    %v4571 = vpop.permute.xlu0 %4570
    %4572 = vrot.lane.b32.xlu0 %v4346, 56
    %v4573 = vpop.permute.xlu0 %4572
    %4574 = vrot.lane.b32.xlu0 %v4347, 56
    %v4575 = vpop.permute.xlu0 %4574
    %4576 = vrot.lane.b32.xlu0 %v4348, 56
    %v4577 = vpop.permute.xlu0 %4576
    %4578 = vrot.lane.b32.xlu0 %v4349, 56
    %v4579 = vpop.permute.xlu0 %4578
    %4580 = vrot.lane.b32.xlu0 %v4350, 56
    %v4581 = vpop.permute.xlu0 %4580
    %4582 = vrot.lane.b32.xlu0 %v4351, 56
    %v4583 = vpop.permute.xlu0 %4582
    %4584 = vrot.lane.b32.xlu0 %v4352, 56
    %v4585 = vpop.permute.xlu0 %4584
    %4586 = vrot.lane.b32.xlu0 %v4353, 56
    %v4587 = vpop.permute.xlu0 %4586
    %4588 = vrot.lane.b32.xlu0 %v4354, 56
    %v4589 = vpop.permute.xlu0 %4588
    %4590 = vrot.lane.b32.xlu0 %v4355, 56
    %v4591 = vpop.permute.xlu0 %4590
    %4592 = vrot.lane.b32.xlu0 %v4356, 56
    %v4593 = vpop.permute.xlu0 %4592
    %4594 = vrot.lane.b32.xlu0 %v4357, 56
    %v4595 = vpop.permute.xlu0 %4594
    %4596 = vrot.lane.b32.xlu0 %v4358, 56
    %v4597 = vpop.permute.xlu0 %4596
    %4598 = vrot.lane.b32.xlu0 %v4359, 56
    %v4599 = vpop.permute.xlu0 %4598
    %4616 = vrot.lane.b32.xlu0 %v4344, 72
    %v4617 = vpop.permute.xlu0 %4616
    %4618 = vrot.lane.b32.xlu0 %v4345, 72
    %v4619 = vpop.permute.xlu0 %4618
    %4620 = vrot.lane.b32.xlu0 %v4346, 72
    %v4621 = vpop.permute.xlu0 %4620
    %4622 = vrot.lane.b32.xlu0 %v4347, 72
    %v4623 = vpop.permute.xlu0 %4622
    %4624 = vrot.lane.b32.xlu0 %v4348, 72
    %v4625 = vpop.permute.xlu0 %4624
    %4626 = vrot.lane.b32.xlu0 %v4349, 72
    %v4627 = vpop.permute.xlu0 %4626
    %4628 = vrot.lane.b32.xlu0 %v4350, 72
    %v4629 = vpop.permute.xlu0 %4628
    %4630 = vrot.lane.b32.xlu0 %v4351, 72
    %v4631 = vpop.permute.xlu0 %4630
    %4632 = vrot.lane.b32.xlu0 %v4352, 72
    %v4633 = vpop.permute.xlu0 %4632
    %4634 = vrot.lane.b32.xlu0 %v4353, 72
    %v4635 = vpop.permute.xlu0 %4634
    %4636 = vrot.lane.b32.xlu0 %v4354, 72
    %v4637 = vpop.permute.xlu0 %4636
    %4638 = vrot.lane.b32.xlu0 %v4355, 72
    %v4639 = vpop.permute.xlu0 %4638
    %4640 = vrot.lane.b32.xlu0 %v4356, 72
    %v4641 = vpop.permute.xlu0 %4640
    %4642 = vrot.lane.b32.xlu0 %v4357, 72
    %v4643 = vpop.permute.xlu0 %4642
    %4644 = vrot.lane.b32.xlu0 %v4358, 72
    %v4645 = vpop.permute.xlu0 %4644
    %4646 = vrot.lane.b32.xlu0 %v4359, 72
    %v4647 = vpop.permute.xlu0 %4646
    %4664 = vrot.lane.b32.xlu0 %v4344, 88
    %v4665 = vpop.permute.xlu0 %4664
    %4666 = vrot.lane.b32.xlu0 %v4345, 88
    %v4667 = vpop.permute.xlu0 %4666
    %4668 = vrot.lane.b32.xlu0 %v4346, 88
    %v4669 = vpop.permute.xlu0 %4668
    %4670 = vrot.lane.b32.xlu0 %v4347, 88
    %v4671 = vpop.permute.xlu0 %4670
    %4672 = vrot.lane.b32.xlu0 %v4348, 88
    %v4673 = vpop.permute.xlu0 %4672
    %4674 = vrot.lane.b32.xlu0 %v4349, 88
    %v4675 = vpop.permute.xlu0 %4674
    %4676 = vrot.lane.b32.xlu0 %v4350, 88
    %v4677 = vpop.permute.xlu0 %4676
    %4678 = vrot.lane.b32.xlu0 %v4351, 88
    %v4679 = vpop.permute.xlu0 %4678
    %4680 = vrot.lane.b32.xlu0 %v4352, 88
    %v4681 = vpop.permute.xlu0 %4680
    %4682 = vrot.lane.b32.xlu0 %v4353, 88
    %v4683 = vpop.permute.xlu0 %4682
    %4684 = vrot.lane.b32.xlu0 %v4354, 88
    %v4685 = vpop.permute.xlu0 %4684
    %4686 = vrot.lane.b32.xlu0 %v4355, 88
    %v4687 = vpop.permute.xlu0 %4686
    %4688 = vrot.lane.b32.xlu0 %v4356, 88
    %v4689 = vpop.permute.xlu0 %4688
    %4690 = vrot.lane.b32.xlu0 %v4357, 88
    %v4691 = vpop.permute.xlu0 %4690
    %4692 = vrot.lane.b32.xlu0 %v4358, 88
    %v4693 = vpop.permute.xlu0 %4692
    %4694 = vrot.lane.b32.xlu0 %v4359, 88
    %v4695 = vpop.permute.xlu0 %4694
    %4712 = vrot.lane.b32.xlu0 %v4344, 104
    %v4713 = vpop.permute.xlu0 %4712
    %4714 = vrot.lane.b32.xlu0 %v4345, 104
    %v4715 = vpop.permute.xlu0 %4714
    %4716 = vrot.lane.b32.xlu0 %v4346, 104
    %v4717 = vpop.permute.xlu0 %4716
    %4718 = vrot.lane.b32.xlu0 %v4347, 104
    %v4719 = vpop.permute.xlu0 %4718
    %4720 = vrot.lane.b32.xlu0 %v4348, 104
    %v4721 = vpop.permute.xlu0 %4720
    %4722 = vrot.lane.b32.xlu0 %v4349, 104
    %v4723 = vpop.permute.xlu0 %4722
    %4724 = vrot.lane.b32.xlu0 %v4350, 104
    %v4725 = vpop.permute.xlu0 %4724
    %4726 = vrot.lane.b32.xlu0 %v4351, 104
    %v4727 = vpop.permute.xlu0 %4726
    %4728 = vrot.lane.b32.xlu0 %v4352, 104
    %v4729 = vpop.permute.xlu0 %4728
    %4730 = vrot.lane.b32.xlu0 %v4353, 104
    %v4731 = vpop.permute.xlu0 %4730
    %4732 = vrot.lane.b32.xlu0 %v4354, 104
    %v4733 = vpop.permute.xlu0 %4732
    %4734 = vrot.lane.b32.xlu0 %v4355, 104
    %v4735 = vpop.permute.xlu0 %4734
    %4736 = vrot.lane.b32.xlu0 %v4356, 104
    %v4737 = vpop.permute.xlu0 %4736
    %4738 = vrot.lane.b32.xlu0 %v4357, 104
    %v4739 = vpop.permute.xlu0 %4738
    %4740 = vrot.lane.b32.xlu0 %v4358, 104
    %v4741 = vpop.permute.xlu0 %4740
    %4742 = vrot.lane.b32.xlu0 %v4359, 104
    %v4743 = vpop.permute.xlu0 %4742
    %v4760 = vsel %vm2325, %v4377, %v4425
    %v4761 = vsel %vm2325, %v4379, %v4427
    %v4762 = vsel %vm2325, %v4381, %v4429
    %v4763 = vsel %vm2325, %v4383, %v4431
    %v4764 = vsel %vm2325, %v4385, %v4433
    %v4765 = vsel %vm2325, %v4387, %v4435
    %v4766 = vsel %vm2325, %v4389, %v4437
    %v4767 = vsel %vm2325, %v4391, %v4439
    %v4768 = vsel %vm2325, %v4393, %v4441
    %v4769 = vsel %vm2325, %v4395, %v4443
    %v4770 = vsel %vm2325, %v4397, %v4445
    %v4771 = vsel %vm2325, %v4399, %v4447
    %v4772 = vsel %vm2325, %v4401, %v4449
    %v4773 = vsel %vm2325, %v4403, %v4451
    %v4774 = vsel %vm2325, %v4405, %v4453
    %v4775 = vsel %vm2325, %v4407, %v4455
    %v4776 = vsel %vm83, %v4760, %v4473
    %v4777 = vsel %vm83, %v4761, %v4475
    %v4778 = vsel %vm83, %v4762, %v4477
    %v4779 = vsel %vm83, %v4763, %v4479
    %v4780 = vsel %vm83, %v4764, %v4481
    %v4781 = vsel %vm83, %v4765, %v4483
    %v4782 = vsel %vm83, %v4766, %v4485
    %v4783 = vsel %vm83, %v4767, %v4487
    %v4784 = vsel %vm83, %v4768, %v4489
    %v4785 = vsel %vm83, %v4769, %v4491
    %v4786 = vsel %vm83, %v4770, %v4493
    %v4787 = vsel %vm83, %v4771, %v4495
    %v4788 = vsel %vm83, %v4772, %v4497
    %v4789 = vsel %vm83, %v4773, %v4499
    %v4790 = vsel %vm83, %v4774, %v4501
    %v4791 = vsel %vm83, %v4775, %v4503
    %v4792 = vsel %vm2358, %v4776, %v4521
    %v4793 = vsel %vm2358, %v4777, %v4523
    %v4794 = vsel %vm2358, %v4778, %v4525
    %v4795 = vsel %vm2358, %v4779, %v4527
    %v4796 = vsel %vm2358, %v4780, %v4529
    %v4797 = vsel %vm2358, %v4781, %v4531
    %v4798 = vsel %vm2358, %v4782, %v4533
    %v4799 = vsel %vm2358, %v4783, %v4535
    %v4800 = vsel %vm2358, %v4784, %v4537
    %v4801 = vsel %vm2358, %v4785, %v4539
    %v4802 = vsel %vm2358, %v4786, %v4541
    %v4803 = vsel %vm2358, %v4787, %v4543
    %v4804 = vsel %vm2358, %v4788, %v4545
    %v4805 = vsel %vm2358, %v4789, %v4547
    %v4806 = vsel %vm2358, %v4790, %v4549
    %v4807 = vsel %vm2358, %v4791, %v4551
    %v4808 = vsel %vm2375, %v4792, %v4569
    %v4809 = vsel %vm2375, %v4793, %v4571
    %v4810 = vsel %vm2375, %v4794, %v4573
    %v4811 = vsel %vm2375, %v4795, %v4575
    %v4812 = vsel %vm2375, %v4796, %v4577
    %v4813 = vsel %vm2375, %v4797, %v4579
    %v4814 = vsel %vm2375, %v4798, %v4581
    %v4815 = vsel %vm2375, %v4799, %v4583
    %v4816 = vsel %vm2375, %v4800, %v4585
    %v4817 = vsel %vm2375, %v4801, %v4587
    %v4818 = vsel %vm2375, %v4802, %v4589
    %v4819 = vsel %vm2375, %v4803, %v4591
    %v4820 = vsel %vm2375, %v4804, %v4593
    %v4821 = vsel %vm2375, %v4805, %v4595
    %v4822 = vsel %vm2375, %v4806, %v4597
    %v4823 = vsel %vm2375, %v4807, %v4599
    %v4824 = vsel %vm2392, %v4808, %v4617
    %v4825 = vsel %vm2392, %v4809, %v4619
    %v4826 = vsel %vm2392, %v4810, %v4621
    %v4827 = vsel %vm2392, %v4811, %v4623
    %v4828 = vsel %vm2392, %v4812, %v4625
    %v4829 = vsel %vm2392, %v4813, %v4627
    %v4830 = vsel %vm2392, %v4814, %v4629
    %v4831 = vsel %vm2392, %v4815, %v4631
    %v4832 = vsel %vm2392, %v4816, %v4633
    %v4833 = vsel %vm2392, %v4817, %v4635
    %v4834 = vsel %vm2392, %v4818, %v4637
    %v4835 = vsel %vm2392, %v4819, %v4639
    %v4836 = vsel %vm2392, %v4820, %v4641
    %v4837 = vsel %vm2392, %v4821, %v4643
    %v4838 = vsel %vm2392, %v4822, %v4645
    %v4839 = vsel %vm2392, %v4823, %v4647
    %v4840 = vsel %vm2409, %v4824, %v4665
    %v4841 = vsel %vm2409, %v4825, %v4667
    %v4842 = vsel %vm2409, %v4826, %v4669
    %v4843 = vsel %vm2409, %v4827, %v4671
    %v4844 = vsel %vm2409, %v4828, %v4673
    %v4845 = vsel %vm2409, %v4829, %v4675
    %v4846 = vsel %vm2409, %v4830, %v4677
    %v4847 = vsel %vm2409, %v4831, %v4679
    %v4848 = vsel %vm2409, %v4832, %v4681
    %v4849 = vsel %vm2409, %v4833, %v4683
    %v4850 = vsel %vm2409, %v4834, %v4685
    %v4851 = vsel %vm2409, %v4835, %v4687
    %v4852 = vsel %vm2409, %v4836, %v4689
    %v4853 = vsel %vm2409, %v4837, %v4691
    %v4854 = vsel %vm2409, %v4838, %v4693
    %v4855 = vsel %vm2409, %v4839, %v4695
    %v4856 = vsel %vm2426, %v4840, %v4713
    %v4857 = vsel %vm2426, %v4841, %v4715
    %v4858 = vsel %vm2426, %v4842, %v4717
    %v4859 = vsel %vm2426, %v4843, %v4719
    %v4860 = vsel %vm2426, %v4844, %v4721
    %v4861 = vsel %vm2426, %v4845, %v4723
    %v4862 = vsel %vm2426, %v4846, %v4725
    %v4863 = vsel %vm2426, %v4847, %v4727
    %v4864 = vsel %vm2426, %v4848, %v4729
    %v4865 = vsel %vm2426, %v4849, %v4731
    %v4866 = vsel %vm2426, %v4850, %v4733
    %v4867 = vsel %vm2426, %v4851, %v4735
    %v4868 = vsel %vm2426, %v4852, %v4737
    %v4869 = vsel %vm2426, %v4853, %v4739
    %v4870 = vsel %vm2426, %v4854, %v4741
    %v4871 = vsel %vm2426, %v4855, %v4743
    %4874 = vrot.lane.b32.xlu0 %v3389, 96
    %v4875 = vpop.permute.xlu0 %4874
    %4876 = vrot.lane.b32.xlu0 %v3390, 96
    %v4877 = vpop.permute.xlu0 %4876
    %v4879 = vsel %vm83, %v4875, 0
    %v4882 = vsel %vm83, %v4877, 0
    %4884 = vmatprep.subr.bf16.mxu0 0
    %4885 = vmatpush1.bf16.xpose.msra.mxu0 %v4882
    %4886 = vmatprep.subr.bf16.mxu0 0
    %4887 = vmatpush1.bf16.xpose.msra.mxu0 %v4879
    %4888 = vmatprep.subr.bf16.mxu0 0
    %4889 = vmatpush1.bf16.xpose.msra.mxu0 %v4882
    %4890 = vmatprep.subr.bf16.mxu0 0
    %4891 = vmatpush1.bf16.xpose.msra.mxu0 %v4879
    %4892 = vmatprep.subr.bf16.mxu0 0
    %4893 = vmatpush1.bf16.xpose.msra.mxu0 %v4882
    %4894 = vmatprep.subr.bf16.mxu0 0
    %4895 = vmatpush1.bf16.xpose.msra.mxu0 %v4879
    %4896 = vmatprep.subr.bf16.mxu0 0
    %4897 = vmatpush1.bf16.xpose.msra.mxu0 %v4882
    %4898 = vmatprep.subr.bf16.mxu0 0
    %4899 = vmatpush1.bf16.xpose.msra.mxu0 %v4879
    %4900 = vmatprep.subr.bf16.mxu0 0
    %4901 = vmatpush2.bf16.xpose.msra.mxu0 0
    %4902 = vmatprep.subr.bf16.mxu0 0
    %4903 = vmatpush2.bf16.xpose.msra.mxu0 0
    %4904 = vmatprep.subr.bf16.mxu0 0
    %4905 = vmatpush2.bf16.xpose.msra.mxu0 0
    %4906 = vmatprep.subr.bf16.mxu0 0
    %4907 = vmatpush2.bf16.xpose.msra.mxu0 0
    %4908 = vmatprep.subr.bf16.mxu0 0
    %4909 = vmatpush2.bf16.xpose.msra.mxu0 0
    %4910 = vmatprep.subr.bf16.mxu0 0
    %4911 = vmatpush2.bf16.xpose.msra.mxu0 0
    %4912 = vmatprep.subr.bf16.mxu0 0
    %4913 = vmatpush2.bf16.xpose.msra.mxu0 0
    %4914 = vmatprep.subr.bf16.mxu0 0
    %4915 = vmatpush2.bf16.xpose.msra.mxu0 0
    %4916 = vmatprep.mubr.bf16.mxu0 0
    %4917 = vmatmul.mubr.bf16.gmra.mxu0 %v3392
    %v4918 = vpop.f32.mrf.mxu0
    %v4919 = vadd.f32 %v4856, %v4918
    %v4920 = vpop.f32.mrf.mxu0
    %v4921 = vpop.f32.mrf.mxu0
    %v4922 = vadd.f32 %v4857, %v4921
    %v4923 = vpop.f32.mrf.mxu0
    %4924 = vmatprep.mubr.bf16.mxu0 0
    %4925 = vmatmul.mubr.bf16.gmra.mxu0 %v3395
    %v4926 = vpop.f32.mrf.mxu0
    %v4927 = vadd.f32 %v4858, %v4926
    %v4928 = vpop.f32.mrf.mxu0
    %v4929 = vpop.f32.mrf.mxu0
    %v4930 = vadd.f32 %v4859, %v4929
    %v4931 = vpop.f32.mrf.mxu0
    %4932 = vmatprep.mubr.bf16.mxu0 0
    %4933 = vmatmul.mubr.bf16.gmra.mxu0 %v3398
    %v4934 = vpop.f32.mrf.mxu0
    %v4935 = vadd.f32 %v4860, %v4934
    %v4936 = vpop.f32.mrf.mxu0
    %v4937 = vpop.f32.mrf.mxu0
    %v4938 = vadd.f32 %v4861, %v4937
    %v4939 = vpop.f32.mrf.mxu0
    %4940 = vmatprep.mubr.bf16.mxu0 0
    %4941 = vmatmul.mubr.bf16.gmra.mxu0 %v3401
    %v4942 = vpop.f32.mrf.mxu0
    %v4943 = vadd.f32 %v4862, %v4942
    %v4944 = vpop.f32.mrf.mxu0
    %v4945 = vpop.f32.mrf.mxu0
    %v4946 = vadd.f32 %v4863, %v4945
    %v4947 = vpop.f32.mrf.mxu0
    %4948 = vmatprep.mubr.bf16.mxu0 0
    %4949 = vmatmul.mubr.bf16.gmra.mxu0 %v3404
    %v4950 = vpop.f32.mrf.mxu0
    %v4951 = vadd.f32 %v4864, %v4950
    %v4952 = vpop.f32.mrf.mxu0
    %v4953 = vpop.f32.mrf.mxu0
    %v4954 = vadd.f32 %v4865, %v4953
    %v4955 = vpop.f32.mrf.mxu0
    %4956 = vmatprep.mubr.bf16.mxu0 0
    %4957 = vmatmul.mubr.bf16.gmra.mxu0 %v3407
    %v4958 = vpop.f32.mrf.mxu0
    %v4959 = vadd.f32 %v4866, %v4958
    %v4960 = vpop.f32.mrf.mxu0
    %v4961 = vpop.f32.mrf.mxu0
    %v4962 = vadd.f32 %v4867, %v4961
    %v4963 = vpop.f32.mrf.mxu0
    %4964 = vmatprep.mubr.bf16.mxu0 0
    %4965 = vmatmul.mubr.bf16.gmra.mxu0 %v3410
    %v4966 = vpop.f32.mrf.mxu0
    %v4967 = vadd.f32 %v4868, %v4966
    %v4968 = vpop.f32.mrf.mxu0
    %v4969 = vpop.f32.mrf.mxu0
    %v4970 = vadd.f32 %v4869, %v4969
    %v4971 = vpop.f32.mrf.mxu0
    %4972 = vmatprep.mubr.bf16.mxu0 0
    %4973 = vmatmul.mubr.bf16.gmra.mxu0 %v3413
    %v4974 = vpop.f32.mrf.mxu0
    %v4975 = vadd.f32 %v4870, %v4974
    %v4976 = vpop.f32.mrf.mxu0
    %v4977 = vpop.f32.mrf.mxu0
    %v4978 = vadd.f32 %v4871, %v4977
    %v4979 = vpop.f32.mrf.mxu0
    %4980 = vdwg.mxu0
    %v4981 = vadd.f32 %v4919, %v267
    %v4982 = vadd.f32 %v4922, %v268
    %v4983 = vadd.f32 %v4927, %v269
    %v4984 = vadd.f32 %v4930, %v270
    %v4985 = vadd.f32 %v4935, %v271
    %v4986 = vadd.f32 %v4938, %v272
    %v4987 = vadd.f32 %v4943, %v273
    %v4988 = vadd.f32 %v4946, %v274
    %v4989 = vadd.f32 %v4951, %v275
    %v4990 = vadd.f32 %v4954, %v276
    %v4991 = vadd.f32 %v4959, %v277
    %v4992 = vadd.f32 %v4962, %v278
    %v4993 = vadd.f32 %v4967, %v279
    %v4994 = vadd.f32 %v4970, %v280
    %v4995 = vadd.f32 %v4975, %v281
    %v4996 = vadd.f32 %v4978, %v282
    %4997 = vmax.xlane.f32.xlu0 %v4981
    %v4998 = vpop.xlane.xlu0 %4997
    %4999 = vmax.xlane.f32.xlu0 %v4982
    %v5000 = vpop.xlane.xlu0 %4999
    %5001 = vmax.xlane.f32.xlu0 %v4983
    %v5002 = vpop.xlane.xlu0 %5001
    %5003 = vmax.xlane.f32.xlu0 %v4984
    %v5004 = vpop.xlane.xlu0 %5003
    %5005 = vmax.xlane.f32.xlu0 %v4985
    %v5006 = vpop.xlane.xlu0 %5005
    %5007 = vmax.xlane.f32.xlu0 %v4986
    %v5008 = vpop.xlane.xlu0 %5007
    %5009 = vmax.xlane.f32.xlu0 %v4987
    %v5010 = vpop.xlane.xlu0 %5009
    %5011 = vmax.xlane.f32.xlu0 %v4988
    %v5012 = vpop.xlane.xlu0 %5011
    %5013 = vmax.xlane.f32.xlu0 %v4989
    %v5014 = vpop.xlane.xlu0 %5013
    %5015 = vmax.xlane.f32.xlu0 %v4990
    %v5016 = vpop.xlane.xlu0 %5015
    %5017 = vmax.xlane.f32.xlu0 %v4991
    %v5018 = vpop.xlane.xlu0 %5017
    %5019 = vmax.xlane.f32.xlu0 %v4992
    %v5020 = vpop.xlane.xlu0 %5019
    %5021 = vmax.xlane.f32.xlu0 %v4993
    %v5022 = vpop.xlane.xlu0 %5021
    %5023 = vmax.xlane.f32.xlu0 %v4994
    %v5024 = vpop.xlane.xlu0 %5023
    %5025 = vmax.xlane.f32.xlu0 %v4995
    %v5026 = vpop.xlane.xlu0 %5025
    %5027 = vmax.xlane.f32.xlu0 %v4996
    %v5028 = vpop.xlane.xlu0 %5027
    %v5029 = vsub.f32 %v4981, %v4998
    %v5030 = vsub.f32 %v4982, %v5000
    %v5031 = vsub.f32 %v4983, %v5002
    %v5032 = vsub.f32 %v4984, %v5004
    %v5033 = vsub.f32 %v4985, %v5006
    %v5034 = vsub.f32 %v4986, %v5008
    %v5035 = vsub.f32 %v4987, %v5010
    %v5036 = vsub.f32 %v4988, %v5012
    %v5037 = vsub.f32 %v4989, %v5014
    %v5038 = vsub.f32 %v4990, %v5016
    %v5039 = vsub.f32 %v4991, %v5018
    %v5040 = vsub.f32 %v4992, %v5020
    %v5041 = vsub.f32 %v4993, %v5022
    %v5042 = vsub.f32 %v4994, %v5024
    %v5043 = vsub.f32 %v4995, %v5026
    %v5044 = vsub.f32 %v4996, %v5028
    %v5045 = vmul.f32 %v5029, 1.442695
    %v5046 = vpow.pop %v5045
    %v5047 = vmul.f32 %v5030, 1.442695
    %v5048 = vpow.pop %v5047
    %v5049 = vmul.f32 %v5031, 1.442695
    %v5050 = vpow.pop %v5049
    %v5051 = vmul.f32 %v5032, 1.442695
    %v5052 = vpow.pop %v5051
    %v5053 = vmul.f32 %v5033, 1.442695
    %v5054 = vpow.pop %v5053
    %v5055 = vmul.f32 %v5034, 1.442695
    %v5056 = vpow.pop %v5055
    %v5057 = vmul.f32 %v5035, 1.442695
    %v5058 = vpow.pop %v5057
    %v5059 = vmul.f32 %v5036, 1.442695
    %v5060 = vpow.pop %v5059
    %v5061 = vmul.f32 %v5037, 1.442695
    %v5062 = vpow.pop %v5061
    %v5063 = vmul.f32 %v5038, 1.442695
    %v5064 = vpow.pop %v5063
    %v5065 = vmul.f32 %v5039, 1.442695
    %v5066 = vpow.pop %v5065
    %v5067 = vmul.f32 %v5040, 1.442695
    %v5068 = vpow.pop %v5067
    %v5069 = vmul.f32 %v5041, 1.442695
    %v5070 = vpow.pop %v5069
    %v5071 = vmul.f32 %v5042, 1.442695
    %v5072 = vpow.pop %v5071
    %v5073 = vmul.f32 %v5043, 1.442695
    %v5074 = vpow.pop %v5073
    %v5075 = vmul.f32 %v5044, 1.442695
    %v5076 = vpow.pop %v5075
    %5077 = vadd.xlane.f32.xlu0 %v5046
    %v5078 = vpop.xlane.xlu0 %5077
    %5079 = vadd.xlane.f32.xlu0 %v5048
    %v5080 = vpop.xlane.xlu0 %5079
    %5081 = vadd.xlane.f32.xlu0 %v5050
    %v5082 = vpop.xlane.xlu0 %5081
    %5083 = vadd.xlane.f32.xlu0 %v5052
    %v5084 = vpop.xlane.xlu0 %5083
    %5085 = vadd.xlane.f32.xlu0 %v5054
    %v5086 = vpop.xlane.xlu0 %5085
    %5087 = vadd.xlane.f32.xlu0 %v5056
    %v5088 = vpop.xlane.xlu0 %5087
    %5089 = vadd.xlane.f32.xlu0 %v5058
    %v5090 = vpop.xlane.xlu0 %5089
    %5091 = vadd.xlane.f32.xlu0 %v5060
    %v5092 = vpop.xlane.xlu0 %5091
    %5093 = vadd.xlane.f32.xlu0 %v5062
    %v5094 = vpop.xlane.xlu0 %5093
    %5095 = vadd.xlane.f32.xlu0 %v5064
    %v5096 = vpop.xlane.xlu0 %5095
    %5097 = vadd.xlane.f32.xlu0 %v5066
    %v5098 = vpop.xlane.xlu0 %5097
    %5099 = vadd.xlane.f32.xlu0 %v5068
    %v5100 = vpop.xlane.xlu0 %5099
    %5101 = vadd.xlane.f32.xlu0 %v5070
    %v5102 = vpop.xlane.xlu0 %5101
    %5103 = vadd.xlane.f32.xlu0 %v5072
    %v5104 = vpop.xlane.xlu0 %5103
    %5105 = vadd.xlane.f32.xlu0 %v5074
    %v5106 = vpop.xlane.xlu0 %5105
    %5107 = vadd.xlane.f32.xlu0 %v5076
    %v5108 = vpop.xlane.xlu0 %5107
    %v5109 = vrcp.pop %v5078
    %v5110 = vrcp.pop %v5080
    %v5111 = vrcp.pop %v5082
    %v5112 = vrcp.pop %v5084
    %v5113 = vrcp.pop %v5086
    %v5114 = vrcp.pop %v5088
    %v5115 = vrcp.pop %v5090
    %v5116 = vrcp.pop %v5092
    %v5117 = vrcp.pop %v5094
    %v5118 = vrcp.pop %v5096
    %v5119 = vrcp.pop %v5098
    %v5120 = vrcp.pop %v5100
    %v5121 = vrcp.pop %v5102
    %v5122 = vrcp.pop %v5104
    %v5123 = vrcp.pop %v5106
    %v5124 = vrcp.pop %v5108
    %v5125 = vmul.f32 %v5046, %v5109
    %v5126 = vmul.f32 %v5048, %v5110
    %v5127 = vmul.f32 %v5050, %v5111
    %v5128 = vmul.f32 %v5052, %v5112
    %v5129 = vmul.f32 %v5054, %v5113
    %v5130 = vmul.f32 %v5056, %v5114
    %v5131 = vmul.f32 %v5058, %v5115
    %v5132 = vmul.f32 %v5060, %v5116
    %v5133 = vmul.f32 %v5062, %v5117
    %v5134 = vmul.f32 %v5064, %v5118
    %v5135 = vmul.f32 %v5066, %v5119
    %v5136 = vmul.f32 %v5068, %v5120
    %v5137 = vmul.f32 %v5070, %v5121
    %v5138 = vmul.f32 %v5072, %v5122
    %v5139 = vmul.f32 %v5074, %v5123
    %v5140 = vmul.f32 %v5076, %v5124
    %v5141 = vpack.c.bf16 %v5126, %v5125
    %v5142 = vpack.c.bf16 %v5128, %v5127
    %v5143 = vpack.c.bf16 %v5130, %v5129
    %v5144 = vpack.c.bf16 %v5132, %v5131
    %v5145 = vpack.c.bf16 %v5134, %v5133
    %v5146 = vpack.c.bf16 %v5136, %v5135
    %v5147 = vpack.c.bf16 %v5138, %v5137
    %v5148 = vpack.c.bf16 %v5140, %v5139
    %v5149 = vpack.c.bf16 %v3366, %v3365
    %v5150 = vpack.c.bf16 %v3368, %v3367
    %v5151 = vpack.c.bf16 %v3370, %v3369
    %v5152 = vpack.c.bf16 %v3372, %v3371
    %v5153 = vpack.c.bf16 %v3374, %v3373
    %v5154 = vpack.c.bf16 %v3376, %v3375
    %v5155 = vpack.c.bf16 %v3378, %v3377
    %v5156 = vpack.c.bf16 %v3380, %v3379
    %5165 = vrot.lane.b32.xlu0 %v5149, 64
    %v5166 = vpop.permute.xlu0 %5165
    %5167 = vrot.lane.b32.xlu0 %v5150, 64
    %v5168 = vpop.permute.xlu0 %5167
    %5169 = vrot.lane.b32.xlu0 %v5151, 64
    %v5170 = vpop.permute.xlu0 %5169
    %5171 = vrot.lane.b32.xlu0 %v5152, 64
    %v5172 = vpop.permute.xlu0 %5171
    %5173 = vrot.lane.b32.xlu0 %v5153, 64
    %v5174 = vpop.permute.xlu0 %5173
    %5175 = vrot.lane.b32.xlu0 %v5154, 64
    %v5176 = vpop.permute.xlu0 %5175
    %5177 = vrot.lane.b32.xlu0 %v5155, 64
    %v5178 = vpop.permute.xlu0 %5177
    %5179 = vrot.lane.b32.xlu0 %v5156, 64
    %v5180 = vpop.permute.xlu0 %5179
    %5189 = vmatprep.subr.bf16.mxu0 0
    %5190 = vmatpush1.bf16.msra.mxu0 %v5180
    %5191 = vmatprep.subr.bf16.mxu0 0
    %5192 = vmatpush1.bf16.msra.mxu0 %v5178
    %5193 = vmatprep.subr.bf16.mxu0 0
    %5194 = vmatpush1.bf16.msra.mxu0 %v5176
    %5195 = vmatprep.subr.bf16.mxu0 0
    %5196 = vmatpush1.bf16.msra.mxu0 %v5174
    %5197 = vmatprep.subr.bf16.mxu0 0
    %5198 = vmatpush1.bf16.msra.mxu0 %v5172
    %5199 = vmatprep.subr.bf16.mxu0 0
    %5200 = vmatpush1.bf16.msra.mxu0 %v5170
    %5201 = vmatprep.subr.bf16.mxu0 0
    %5202 = vmatpush1.bf16.msra.mxu0 %v5168
    %5203 = vmatprep.subr.bf16.mxu0 0
    %5204 = vmatpush1.bf16.msra.mxu0 %v5166
    %5205 = vmatprep.subr.bf16.mxu0 0
    %5206 = vmatpush2.bf16.msra.mxu0 0
    %5207 = vmatprep.subr.bf16.mxu0 0
    %5208 = vmatpush2.bf16.msra.mxu0 0
    %5209 = vmatprep.subr.bf16.mxu0 0
    %5210 = vmatpush2.bf16.msra.mxu0 0
    %5211 = vmatprep.subr.bf16.mxu0 0
    %5212 = vmatpush2.bf16.msra.mxu0 0
    %5213 = vmatprep.subr.bf16.mxu0 0
    %5214 = vmatpush2.bf16.msra.mxu0 0
    %5215 = vmatprep.subr.bf16.mxu0 0
    %5216 = vmatpush2.bf16.msra.mxu0 0
    %5217 = vmatprep.subr.bf16.mxu0 0
    %5218 = vmatpush2.bf16.msra.mxu0 0
    %5219 = vmatprep.subr.bf16.mxu0 0
    %5220 = vmatpush2.bf16.msra.mxu0 0
    %5221 = vmatprep.mubr.bf16.mxu0 0
    %5222 = vmatmul.mubr.bf16.gmra.mxu0 %v5141
    %v5223 = vpop.f32.mrf.mxu0
    %v5224 = vadd.f32 0.0, %v5223
    %v5225 = vpop.f32.mrf.mxu0
    %v5226 = vpop.f32.mrf.mxu0
    %v5227 = vadd.f32 0.0, %v5226
    %v5228 = vpop.f32.mrf.mxu0
    %5229 = vmatprep.mubr.bf16.mxu0 0
    %5230 = vmatmul.mubr.bf16.gmra.mxu0 %v5142
    %v5231 = vpop.f32.mrf.mxu0
    %v5232 = vadd.f32 0.0, %v5231
    %v5233 = vpop.f32.mrf.mxu0
    %v5234 = vpop.f32.mrf.mxu0
    %v5235 = vadd.f32 0.0, %v5234
    %v5236 = vpop.f32.mrf.mxu0
    %5237 = vmatprep.mubr.bf16.mxu0 0
    %5238 = vmatmul.mubr.bf16.gmra.mxu0 %v5143
    %v5239 = vpop.f32.mrf.mxu0
    %v5240 = vadd.f32 0.0, %v5239
    %v5241 = vpop.f32.mrf.mxu0
    %v5242 = vpop.f32.mrf.mxu0
    %v5243 = vadd.f32 0.0, %v5242
    %v5244 = vpop.f32.mrf.mxu0
    %5245 = vmatprep.mubr.bf16.mxu0 0
    %5246 = vmatmul.mubr.bf16.gmra.mxu0 %v5144
    %v5247 = vpop.f32.mrf.mxu0
    %v5248 = vadd.f32 0.0, %v5247
    %v5249 = vpop.f32.mrf.mxu0
    %v5250 = vpop.f32.mrf.mxu0
    %v5251 = vadd.f32 0.0, %v5250
    %v5252 = vpop.f32.mrf.mxu0
    %5253 = vmatprep.mubr.bf16.mxu0 0
    %5254 = vmatmul.mubr.bf16.gmra.mxu0 %v5145
    %v5255 = vpop.f32.mrf.mxu0
    %v5256 = vadd.f32 0.0, %v5255
    %v5257 = vpop.f32.mrf.mxu0
    %v5258 = vpop.f32.mrf.mxu0
    %v5259 = vadd.f32 0.0, %v5258
    %v5260 = vpop.f32.mrf.mxu0
    %5261 = vmatprep.mubr.bf16.mxu0 0
    %5262 = vmatmul.mubr.bf16.gmra.mxu0 %v5146
    %v5263 = vpop.f32.mrf.mxu0
    %v5264 = vadd.f32 0.0, %v5263
    %v5265 = vpop.f32.mrf.mxu0
    %v5266 = vpop.f32.mrf.mxu0
    %v5267 = vadd.f32 0.0, %v5266
    %v5268 = vpop.f32.mrf.mxu0
    %5269 = vmatprep.mubr.bf16.mxu0 0
    %5270 = vmatmul.mubr.bf16.gmra.mxu0 %v5147
    %v5271 = vpop.f32.mrf.mxu0
    %v5272 = vadd.f32 0.0, %v5271
    %v5273 = vpop.f32.mrf.mxu0
    %v5274 = vpop.f32.mrf.mxu0
    %v5275 = vadd.f32 0.0, %v5274
    %v5276 = vpop.f32.mrf.mxu0
    %5277 = vmatprep.mubr.bf16.mxu0 0
    %5278 = vmatmul.mubr.bf16.gmra.mxu0 %v5148
    %v5279 = vpop.f32.mrf.mxu0
    %v5280 = vadd.f32 0.0, %v5279
    %v5281 = vpop.f32.mrf.mxu0
    %v5282 = vpop.f32.mrf.mxu0
    %v5283 = vadd.f32 0.0, %v5282
    %v5284 = vpop.f32.mrf.mxu0
    %5285 = vdwg.mxu0
    %v5286 = vadd.f32 %v5224, %v5240
    %v5287 = vadd.f32 %v5227, %v5243
    %v5288 = vadd.f32 %v5232, %v5248
    %v5289 = vadd.f32 %v5235, %v5251
    %v5290 = vadd.f32 %v5286, %v5256
    %v5291 = vadd.f32 %v5287, %v5259
    %v5292 = vadd.f32 %v5288, %v5264
    %v5293 = vadd.f32 %v5289, %v5267
    %v5294 = vadd.f32 %v5290, %v5272
    %v5295 = vadd.f32 %v5291, %v5275
    %v5296 = vadd.f32 %v5292, %v5280
    %v5297 = vadd.f32 %v5293, %v5283
    %v5298 = vld [vmem:[#allocation4 + $0x90] sm:$0xf]
    %v5299 = vld [vmem:[#allocation4 + $0x94] sm:$0xf]
    %v5300 = vld [vmem:[#allocation4 + $0x98] sm:$0xf]
    %v5301 = vld [vmem:[#allocation4 + $0x9c] sm:$0xf]
    %v5302 = vpack.c.bf16 %v5295, %v5294
    %v5303 = vpack.c.bf16 %v5297, %v5296
    %v5304 = vld [vmem:[#allocation6 + $0x14] sm:$0x1]
    %v5305 = vlaneseq
    %v5306 = vshrl.u32 %v5305, 7
    %v5307 = vsub.s32 0, %v5306
    %v5308 = vrot.slane %v5304, %v5307
    %v5313 = vunpack.c.l.b16 %v5298
    %v5314 = vunpack.c.l.b16 %v5299
    %v5315 = vunpack.c.l.b16 %v5300
    %v5316 = vunpack.c.l.b16 %v5301
    %v5317 = vpack.c.b16 %v5314, %v5313
    %v5318 = vpack.c.b16 %v5316, %v5315
    %v5322 = vsel %vm83, %v5302, 0
    %v5325 = vsel %vm83, %v5303, 0
    %5327 = vmatprep.subr.bf16.mxu0 0
    %5328 = vmatpush1.bf16.msra.mxu0 0
    %5329 = vmatprep.subr.bf16.mxu0 0
    %5330 = vmatpush1.bf16.msra.mxu0 0
    %5331 = vmatprep.subr.bf16.mxu0 0
    %5332 = vmatpush1.bf16.msra.mxu0 0
    %5333 = vmatprep.subr.bf16.mxu0 0
    %5334 = vmatpush1.bf16.msra.mxu0 0
    %5335 = vmatprep.subr.bf16.mxu0 0
    %5336 = vmatpush1.bf16.msra.mxu0 0
    %5337 = vmatprep.subr.bf16.mxu0 0
    %5338 = vmatpush1.bf16.msra.mxu0 0
    %5339 = vmatprep.subr.bf16.mxu0 0
    %5340 = vmatpush1.bf16.msra.mxu0 %v5318
    %5341 = vmatprep.subr.bf16.mxu0 0
    %5342 = vmatpush1.bf16.msra.mxu0 %v5317
    %5343 = vmatprep.subr.bf16.mxu0 0
    %5344 = vmatpush2.bf16.msra.mxu0 0
    %5345 = vmatprep.subr.bf16.mxu0 0
    %5346 = vmatpush2.bf16.msra.mxu0 0
    %5347 = vmatprep.subr.bf16.mxu0 0
    %5348 = vmatpush2.bf16.msra.mxu0 0
    %5349 = vmatprep.subr.bf16.mxu0 0
    %5350 = vmatpush2.bf16.msra.mxu0 0
    %5351 = vmatprep.subr.bf16.mxu0 0
    %5352 = vmatpush2.bf16.msra.mxu0 0
    %5353 = vmatprep.subr.bf16.mxu0 0
    %5354 = vmatpush2.bf16.msra.mxu0 0
    %5355 = vmatprep.subr.bf16.mxu0 0
    %5356 = vmatpush2.bf16.msra.mxu0 0
    %5357 = vmatprep.subr.bf16.mxu0 0
    %5358 = vmatpush2.bf16.msra.mxu0 0
    %5359 = vmatprep.mubr.bf16.mxu0 0
    %5360 = vmatmul.mubr.bf16.gmra.mxu0 %v5322
    %v5361 = vpop.f32.mrf.mxu0
    %v5362 = vadd.f32 %v5308, %v5361
    %v5363 = vpop.f32.mrf.mxu0
    %v5364 = vpop.f32.mrf.mxu0
    %v5365 = vadd.f32 %v5308, %v5364
    %v5366 = vpop.f32.mrf.mxu0
    %5367 = vmatprep.mubr.bf16.mxu0 0
    %5368 = vmatmul.mubr.bf16.gmra.mxu0 %v5325
    %v5369 = vpop.f32.mrf.mxu0
    %v5370 = vadd.f32 %v5308, %v5369
    %v5371 = vpop.f32.mrf.mxu0
    %v5372 = vpop.f32.mrf.mxu0
    %v5373 = vadd.f32 %v5308, %v5372
    %v5374 = vpop.f32.mrf.mxu0
    %5375 = vdwg.mxu0
    %v5376 = vadd.f32 %v3197, %v5362
    %v5377 = vadd.f32 %v3198, %v5365
    %v5378 = vadd.f32 %v3199, %v5370
    %v5379 = vadd.f32 %v3200, %v5373
    %v5380 = vld [vmem:[#allocation6 + $0x15] sm:$0x1]
    %v5381 = vld [vmem:[#allocation6 + $0x16] sm:$0x1]
    %v5382 = vsel %vm83, %v5376, 0.0
    %5383 = vadd.xlane.f32.xlu0 %v5382
    %v5384 = vpop.xlane.xlu0 %5383
    %v5385 = vsel %vm83, %v5377, 0.0
    %5386 = vadd.xlane.f32.xlu0 %v5385
    %v5387 = vpop.xlane.xlu0 %5386
    %v5388 = vsel %vm83, %v5378, 0.0
    %5389 = vadd.xlane.f32.xlu0 %v5388
    %v5390 = vpop.xlane.xlu0 %5389
    %v5391 = vsel %vm83, %v5379, 0.0
    %5392 = vadd.xlane.f32.xlu0 %v5391
    %v5393 = vpop.xlane.xlu0 %5392
    %v5394 = vmul.f32 %v5384, %v702
    %v5395 = vmul.f32 %v5387, %v702
    %v5396 = vmul.f32 %v5390, %v702
    %v5397 = vmul.f32 %v5393, %v702
    %v5398 = vsub.f32 %v5376, %v5394
    %v5399 = vsub.f32 %v5377, %v5395
    %v5400 = vsub.f32 %v5378, %v5396
    %v5401 = vsub.f32 %v5379, %v5397
    %v5402 = vmul.f32 %v5398, %v5398
    %v5403 = vmul.f32 %v5399, %v5399
    %v5404 = vmul.f32 %v5400, %v5400
    %v5405 = vmul.f32 %v5401, %v5401
    %v5406 = vsel %vm83, %v5402, 0.0
    %5407 = vadd.xlane.f32.xlu0 %v5406
    %v5408 = vpop.xlane.xlu0 %5407
    %v5409 = vsel %vm83, %v5403, 0.0
    %5410 = vadd.xlane.f32.xlu0 %v5409
    %v5411 = vpop.xlane.xlu0 %5410
    %v5412 = vsel %vm83, %v5404, 0.0
    %5413 = vadd.xlane.f32.xlu0 %v5412
    %v5414 = vpop.xlane.xlu0 %5413
    %v5415 = vsel %vm83, %v5405, 0.0
    %5416 = vadd.xlane.f32.xlu0 %v5415
    %v5417 = vpop.xlane.xlu0 %5416
    %v5418 = vmul.f32 %v5408, %v702
    %v5419 = vmul.f32 %v5411, %v702
    %v5420 = vmul.f32 %v5414, %v702
    %v5421 = vmul.f32 %v5417, %v702
    %v5422 = vadd.f32 %v5418, 1e-05
    %v5423 = vadd.f32 %v5419, 1e-05
    %v5424 = vadd.f32 %v5420, 1e-05
    %v5425 = vadd.f32 %v5421, 1e-05
    %v5426 = vrsqrt.pop %v5422
    %v5427 = vrsqrt.pop %v5423
    %v5428 = vrsqrt.pop %v5424
    %v5429 = vrsqrt.pop %v5425
    %v5430 = vmul.f32 %v5398, %v5426
    %v5431 = vmul.f32 %v5399, %v5427
    %v5432 = vmul.f32 %v5400, %v5428
    %v5433 = vmul.f32 %v5401, %v5429
    %v5434 = vlaneseq
    %v5435 = vshrl.u32 %v5434, 7
    %v5436 = vsub.s32 0, %v5435
    %v5437 = vrot.slane %v5380, %v5436
    %v5438 = vmul.f32 %v5430, %v5437
    %v5439 = vmul.f32 %v5431, %v5437
    %v5440 = vmul.f32 %v5432, %v5437
    %v5441 = vmul.f32 %v5433, %v5437
    %v5442 = vlaneseq
    %v5443 = vshrl.u32 %v5442, 7
    %v5444 = vsub.s32 0, %v5443
    %v5445 = vrot.slane %v5381, %v5444
    %v5446 = vadd.f32 %v5438, %v5445
    %v5447 = vadd.f32 %v5439, %v5445
    %v5448 = vadd.f32 %v5440, %v5445
    %v5449 = vadd.f32 %v5441, %v5445
    %v5450 = vld [vmem:[#allocation4 + $0xa0] sm:$0xf]
    %v5451 = vld [vmem:[#allocation4 + $0xa4] sm:$0xf]
    %v5452 = vld [vmem:[#allocation4 + $0xa8] sm:$0xf]
    %v5453 = vld [vmem:[#allocation4 + $0xac] sm:$0xf]
    %v5454 = vpack.c.bf16 %v5447, %v5446
    %v5455 = vpack.c.bf16 %v5449, %v5448
    %v5456 = vld [vmem:[#allocation6 + $0x17] sm:$0x1]
    %v5457 = vlaneseq
    %v5458 = vshrl.u32 %v5457, 7
    %v5459 = vsub.s32 0, %v5458
    %v5460 = vrot.slane %v5456, %v5459
    %v5465 = vunpack.c.l.b16 %v5450
    %v5466 = vunpack.c.l.b16 %v5451
    %v5467 = vunpack.c.l.b16 %v5452
    %v5468 = vunpack.c.l.b16 %v5453
    %v5469 = vpack.c.b16 %v5466, %v5465
    %v5470 = vpack.c.b16 %v5468, %v5467
    %v5474 = vsel %vm83, %v5454, 0
    %v5477 = vsel %vm83, %v5455, 0
    %5479 = vmatprep.subr.bf16.mxu0 0
    %5480 = vmatpush1.bf16.msra.mxu0 0
    %5481 = vmatprep.subr.bf16.mxu0 0
    %5482 = vmatpush1.bf16.msra.mxu0 0
    %5483 = vmatprep.subr.bf16.mxu0 0
    %5484 = vmatpush1.bf16.msra.mxu0 0
    %5485 = vmatprep.subr.bf16.mxu0 0
    %5486 = vmatpush1.bf16.msra.mxu0 0
    %5487 = vmatprep.subr.bf16.mxu0 0
    %5488 = vmatpush1.bf16.msra.mxu0 0
    %5489 = vmatprep.subr.bf16.mxu0 0
    %5490 = vmatpush1.bf16.msra.mxu0 0
    %5491 = vmatprep.subr.bf16.mxu0 0
    %5492 = vmatpush1.bf16.msra.mxu0 %v5470
    %5493 = vmatprep.subr.bf16.mxu0 0
    %5494 = vmatpush1.bf16.msra.mxu0 %v5469
    %5495 = vmatprep.subr.bf16.mxu0 0
    %5496 = vmatpush2.bf16.msra.mxu0 0
    %5497 = vmatprep.subr.bf16.mxu0 0
    %5498 = vmatpush2.bf16.msra.mxu0 0
    %5499 = vmatprep.subr.bf16.mxu0 0
    %5500 = vmatpush2.bf16.msra.mxu0 0
    %5501 = vmatprep.subr.bf16.mxu0 0
    %5502 = vmatpush2.bf16.msra.mxu0 0
    %5503 = vmatprep.subr.bf16.mxu0 0
    %5504 = vmatpush2.bf16.msra.mxu0 0
    %5505 = vmatprep.subr.bf16.mxu0 0
    %5506 = vmatpush2.bf16.msra.mxu0 0
    %5507 = vmatprep.subr.bf16.mxu0 0
    %5508 = vmatpush2.bf16.msra.mxu0 0
    %5509 = vmatprep.subr.bf16.mxu0 0
    %5510 = vmatpush2.bf16.msra.mxu0 0
    %5511 = vmatprep.mubr.bf16.mxu0 0
    %5512 = vmatmul.mubr.bf16.gmra.mxu0 %v5474
    %v5513 = vpop.f32.mrf.mxu0
    %v5514 = vadd.f32 %v5460, %v5513
    %v5515 = vpop.f32.mrf.mxu0
    %v5516 = vpop.f32.mrf.mxu0
    %v5517 = vadd.f32 %v5460, %v5516
    %v5518 = vpop.f32.mrf.mxu0
    %5519 = vmatprep.mubr.bf16.mxu0 0
    %5520 = vmatmul.mubr.bf16.gmra.mxu0 %v5477
    %v5521 = vpop.f32.mrf.mxu0
    %v5522 = vadd.f32 %v5460, %v5521
    %v5523 = vpop.f32.mrf.mxu0
    %v5524 = vpop.f32.mrf.mxu0
    %v5525 = vadd.f32 %v5460, %v5524
    %v5526 = vpop.f32.mrf.mxu0
    %5527 = vdwg.mxu0
    %v5528 = vmax.f32 %v5514, 0.0
    %v5529 = vmax.f32 %v5517, 0.0
    %v5530 = vmax.f32 %v5522, 0.0
    %v5531 = vmax.f32 %v5525, 0.0
    %v5532 = vld [vmem:[#allocation4 + $0xb0] sm:$0xf]
    %v5533 = vld [vmem:[#allocation4 + $0xb4] sm:$0xf]
    %v5534 = vld [vmem:[#allocation4 + $0xb8] sm:$0xf]
    %v5535 = vld [vmem:[#allocation4 + $0xbc] sm:$0xf]
    %v5536 = vld [vmem:[#allocation4 + $0xc0] sm:$0xf]
    %v5537 = vld [vmem:[#allocation4 + $0xc4] sm:$0xf]
    %v5538 = vld [vmem:[#allocation4 + $0xc8] sm:$0xf]
    %v5539 = vld [vmem:[#allocation4 + $0xcc] sm:$0xf]
    %v5540 = vpack.c.bf16 %v5529, %v5528
    %v5541 = vpack.c.bf16 %v5531, %v5530
    %v5542 = vld [vmem:[#allocation6 + $0x18] sm:$0x1]
    %v5543 = vlaneseq
    %v5544 = vshrl.u32 %v5543, 7
    %v5545 = vsub.s32 0, %v5544
    %v5546 = vrot.slane %v5542, %v5545
    %v5555 = vunpack.c.l.b16 %v5532
    %v5556 = vunpack.c.l.b16 %v5533
    %v5557 = vunpack.c.l.b16 %v5534
    %v5558 = vunpack.c.l.b16 %v5535
    %v5559 = vunpack.c.l.b16 %v5536
    %v5560 = vunpack.c.l.b16 %v5537
    %v5561 = vunpack.c.l.b16 %v5538
    %v5562 = vunpack.c.l.b16 %v5539
    %v5563 = vpack.c.b16 %v5556, %v5555
    %v5564 = vpack.c.b16 %v5558, %v5557
    %v5565 = vpack.c.b16 %v5560, %v5559
    %v5566 = vpack.c.b16 %v5562, %v5561
    %v5572 = vsel %vm2375, %v5540, 0
    %v5575 = vsel %vm2375, %v5541, 0
    %5577 = vmatprep.subr.bf16.mxu0 0
    %5578 = vmatpush1.bf16.msra.mxu0 0
    %5579 = vmatprep.subr.bf16.mxu0 0
    %5580 = vmatpush1.bf16.msra.mxu0 0
    %5581 = vmatprep.subr.bf16.mxu0 0
    %5582 = vmatpush1.bf16.msra.mxu0 0
    %5583 = vmatprep.subr.bf16.mxu0 0
    %5584 = vmatpush1.bf16.msra.mxu0 0
    %5585 = vmatprep.subr.bf16.mxu0 0
    %5586 = vmatpush1.bf16.msra.mxu0 %v5566
    %5587 = vmatprep.subr.bf16.mxu0 0
    %5588 = vmatpush1.bf16.msra.mxu0 %v5565
    %5589 = vmatprep.subr.bf16.mxu0 0
    %5590 = vmatpush1.bf16.msra.mxu0 %v5564
    %5591 = vmatprep.subr.bf16.mxu0 0
    %5592 = vmatpush1.bf16.msra.mxu0 %v5563
    %5593 = vmatprep.subr.bf16.mxu0 0
    %5594 = vmatpush2.bf16.msra.mxu0 0
    %5595 = vmatprep.subr.bf16.mxu0 0
    %5596 = vmatpush2.bf16.msra.mxu0 0
    %5597 = vmatprep.subr.bf16.mxu0 0
    %5598 = vmatpush2.bf16.msra.mxu0 0
    %5599 = vmatprep.subr.bf16.mxu0 0
    %5600 = vmatpush2.bf16.msra.mxu0 0
    %5601 = vmatprep.subr.bf16.mxu0 0
    %5602 = vmatpush2.bf16.msra.mxu0 0
    %5603 = vmatprep.subr.bf16.mxu0 0
    %5604 = vmatpush2.bf16.msra.mxu0 0
    %5605 = vmatprep.subr.bf16.mxu0 0
    %5606 = vmatpush2.bf16.msra.mxu0 0
    %5607 = vmatprep.subr.bf16.mxu0 0
    %5608 = vmatpush2.bf16.msra.mxu0 0
    %5609 = vmatprep.mubr.bf16.mxu0 0
    %5610 = vmatmul.mubr.bf16.gmra.mxu0 %v5572
    %v5611 = vpop.f32.mrf.mxu0
    %v5612 = vadd.f32 %v5546, %v5611
    %v5613 = vpop.f32.mrf.mxu0
    %v5614 = vpop.f32.mrf.mxu0
    %v5615 = vadd.f32 %v5546, %v5614
    %v5616 = vpop.f32.mrf.mxu0
    %5617 = vmatprep.mubr.bf16.mxu0 0
    %5618 = vmatmul.mubr.bf16.gmra.mxu0 %v5575
    %v5619 = vpop.f32.mrf.mxu0
    %v5620 = vadd.f32 %v5546, %v5619
    %v5621 = vpop.f32.mrf.mxu0
    %v5622 = vpop.f32.mrf.mxu0
    %v5623 = vadd.f32 %v5546, %v5622
    %v5624 = vpop.f32.mrf.mxu0
    %5625 = vdwg.mxu0
    %v5626 = vadd.f32 %v5376, %v5612
    %v5627 = vadd.f32 %v5377, %v5615
    %v5628 = vadd.f32 %v5378, %v5620
    %v5629 = vadd.f32 %v5379, %v5623
    %v5630 = vld [vmem:[#allocation6 + $0x5] sm:$0x1]
    %v5631 = vld [vmem:[#allocation6 + $0x6] sm:$0x1]
    %v5632 = vsel %vm83, %v5626, 0.0
    %5633 = vadd.xlane.f32.xlu0 %v5632
    %v5634 = vpop.xlane.xlu0 %5633
    %v5635 = vsel %vm83, %v5627, 0.0
    %5636 = vadd.xlane.f32.xlu0 %v5635
    %v5637 = vpop.xlane.xlu0 %5636
    %v5638 = vsel %vm83, %v5628, 0.0
    %5639 = vadd.xlane.f32.xlu0 %v5638
    %v5640 = vpop.xlane.xlu0 %5639
    %v5641 = vsel %vm83, %v5629, 0.0
    %5642 = vadd.xlane.f32.xlu0 %v5641
    %v5643 = vpop.xlane.xlu0 %5642
    %v5644 = vmul.f32 %v5634, %v702
    %v5645 = vmul.f32 %v5637, %v702
    %v5646 = vmul.f32 %v5640, %v702
    %v5647 = vmul.f32 %v5643, %v702
    %v5648 = vsub.f32 %v5626, %v5644
    %v5649 = vsub.f32 %v5627, %v5645
    %v5650 = vsub.f32 %v5628, %v5646
    %v5651 = vsub.f32 %v5629, %v5647
    %v5652 = vmul.f32 %v5648, %v5648
    %v5653 = vmul.f32 %v5649, %v5649
    %v5654 = vmul.f32 %v5650, %v5650
    %v5655 = vmul.f32 %v5651, %v5651
    %v5656 = vsel %vm83, %v5652, 0.0
    %5657 = vadd.xlane.f32.xlu0 %v5656
    %v5658 = vpop.xlane.xlu0 %5657
    %v5659 = vsel %vm83, %v5653, 0.0
    %5660 = vadd.xlane.f32.xlu0 %v5659
    %v5661 = vpop.xlane.xlu0 %5660
    %v5662 = vsel %vm83, %v5654, 0.0
    %5663 = vadd.xlane.f32.xlu0 %v5662
    %v5664 = vpop.xlane.xlu0 %5663
    %v5665 = vsel %vm83, %v5655, 0.0
    %5666 = vadd.xlane.f32.xlu0 %v5665
    %v5667 = vpop.xlane.xlu0 %5666
    %v5668 = vmul.f32 %v5658, %v702
    %v5669 = vmul.f32 %v5661, %v702
    %v5670 = vmul.f32 %v5664, %v702
    %v5671 = vmul.f32 %v5667, %v702
    %v5672 = vadd.f32 %v5668, 1e-05
    %v5673 = vadd.f32 %v5669, 1e-05
    %v5674 = vadd.f32 %v5670, 1e-05
    %v5675 = vadd.f32 %v5671, 1e-05
    %v5676 = vrsqrt.pop %v5672
    %v5677 = vrsqrt.pop %v5673
    %v5678 = vrsqrt.pop %v5674
    %v5679 = vrsqrt.pop %v5675
    %v5680 = vmul.f32 %v5648, %v5676
    %v5681 = vmul.f32 %v5649, %v5677
    %v5682 = vmul.f32 %v5650, %v5678
    %v5683 = vmul.f32 %v5651, %v5679
    %v5684 = vlaneseq
    %v5685 = vshrl.u32 %v5684, 7
    %v5686 = vsub.s32 0, %v5685
    %v5687 = vrot.slane %v5630, %v5686
    %v5688 = vmul.f32 %v5680, %v5687
    %v5689 = vmul.f32 %v5681, %v5687
    %v5690 = vmul.f32 %v5682, %v5687
    %v5691 = vmul.f32 %v5683, %v5687
    %v5692 = vlaneseq
    %v5693 = vshrl.u32 %v5692, 7
    %v5694 = vsub.s32 0, %v5693
    %v5695 = vrot.slane %v5631, %v5694
    %v5696 = vadd.f32 %v5688, %v5695
    %v5697 = vadd.f32 %v5689, %v5695
    %v5698 = vadd.f32 %v5690, %v5695
    %v5699 = vadd.f32 %v5691, %v5695
    %v5700 = vld [vmem:[#allocation4 + $0xd0] sm:$0xf]
    %v5701 = vld [vmem:[#allocation4 + $0xd4] sm:$0xf]
    %v5702 = vld [vmem:[#allocation4 + $0xd8] sm:$0xf]
    %v5703 = vld [vmem:[#allocation4 + $0xdc] sm:$0xf]
    %v5704 = vpack.c.bf16 %v5697, %v5696
    %v5705 = vpack.c.bf16 %v5699, %v5698
    %v5706 = vld [vmem:[#allocation6 + $0x7] sm:$0x1]
    %v5707 = vlaneseq
    %v5708 = vshrl.u32 %v5707, 7
    %v5709 = vsub.s32 0, %v5708
    %v5710 = vrot.slane %v5706, %v5709
    %v5715 = vunpack.c.l.b16 %v5700
    %v5716 = vunpack.c.l.b16 %v5701
    %v5717 = vunpack.c.l.b16 %v5702
    %v5718 = vunpack.c.l.b16 %v5703
    %v5719 = vpack.c.b16 %v5716, %v5715
    %v5720 = vpack.c.b16 %v5718, %v5717
    %v5724 = vsel %vm83, %v5704, 0
    %v5727 = vsel %vm83, %v5705, 0
    %5729 = vmatprep.subr.bf16.mxu0 0
    %5730 = vmatpush1.bf16.msra.mxu0 0
    %5731 = vmatprep.subr.bf16.mxu0 0
    %5732 = vmatpush1.bf16.msra.mxu0 0
    %5733 = vmatprep.subr.bf16.mxu0 0
    %5734 = vmatpush1.bf16.msra.mxu0 0
    %5735 = vmatprep.subr.bf16.mxu0 0
    %5736 = vmatpush1.bf16.msra.mxu0 0
    %5737 = vmatprep.subr.bf16.mxu0 0
    %5738 = vmatpush1.bf16.msra.mxu0 0
    %5739 = vmatprep.subr.bf16.mxu0 0
    %5740 = vmatpush1.bf16.msra.mxu0 0
    %5741 = vmatprep.subr.bf16.mxu0 0
    %5742 = vmatpush1.bf16.msra.mxu0 %v5720
    %5743 = vmatprep.subr.bf16.mxu0 0
    %5744 = vmatpush1.bf16.msra.mxu0 %v5719
    %5745 = vmatprep.subr.bf16.mxu0 0
    %5746 = vmatpush2.bf16.msra.mxu0 0
    %5747 = vmatprep.subr.bf16.mxu0 0
    %5748 = vmatpush2.bf16.msra.mxu0 0
    %5749 = vmatprep.subr.bf16.mxu0 0
    %5750 = vmatpush2.bf16.msra.mxu0 0
    %5751 = vmatprep.subr.bf16.mxu0 0
    %5752 = vmatpush2.bf16.msra.mxu0 0
    %5753 = vmatprep.subr.bf16.mxu0 0
    %5754 = vmatpush2.bf16.msra.mxu0 0
    %5755 = vmatprep.subr.bf16.mxu0 0
    %5756 = vmatpush2.bf16.msra.mxu0 0
    %5757 = vmatprep.subr.bf16.mxu0 0
    %5758 = vmatpush2.bf16.msra.mxu0 0
    %5759 = vmatprep.subr.bf16.mxu0 0
    %5760 = vmatpush2.bf16.msra.mxu0 0
    %5761 = vmatprep.mubr.bf16.mxu0 0
    %5762 = vmatmul.mubr.bf16.gmra.mxu0 %v5724
    %v5763 = vpop.f32.mrf.mxu0
    %v5764 = vadd.f32 %v5710, %v5763
    %v5765 = vpop.f32.mrf.mxu0
    %v5766 = vpop.f32.mrf.mxu0
    %v5767 = vadd.f32 %v5710, %v5766
    %v5768 = vpop.f32.mrf.mxu0
    %5769 = vmatprep.mubr.bf16.mxu0 0
    %5770 = vmatmul.mubr.bf16.gmra.mxu0 %v5727
    %v5771 = vpop.f32.mrf.mxu0
    %v5772 = vadd.f32 %v5710, %v5771
    %v5773 = vpop.f32.mrf.mxu0
    %v5774 = vpop.f32.mrf.mxu0
    %v5775 = vadd.f32 %v5710, %v5774
    %v5776 = vpop.f32.mrf.mxu0
    %5777 = vdwg.mxu0
    %v5778 = vld [vmem:[#allocation6 + $0x4] sm:$0x1]
    %vm5779 = vcmp.gt.f32.partialorder %v5764, 0.0
    %vm5780 = vcmp.gt.f32.partialorder %v5767, 0.0
    %vm5781 = vcmp.gt.f32.partialorder %v5772, 0.0
    %vm5782 = vcmp.gt.f32.partialorder %v5775, 0.0
    %v5783 = vlaneseq
    %v5784 = vshrl.u32 %v5783, 7
    %v5785 = vsub.s32 0, %v5784
    %v5786 = vrot.slane %v5778, %v5785
    %v5787 = vmul.f32 %v5786, %v5764
    %v5788 = vmul.f32 %v5786, %v5767
    %v5789 = vmul.f32 %v5786, %v5772
    %v5790 = vmul.f32 %v5786, %v5775
    %v5791 = vsel %vm5779, %v5764, %v5787
    %v5792 = vsel %vm5780, %v5767, %v5788
    %v5793 = vsel %vm5781, %v5772, %v5789
    %v5794 = vsel %vm5782, %v5775, %v5790
    %v5795 = vld [vmem:[#allocation4 + $0xe0] sm:$0xf]
    %v5796 = vld [vmem:[#allocation4 + $0xe4] sm:$0xf]
    %v5797 = vld [vmem:[#allocation4 + $0xe8] sm:$0xf]
    %v5798 = vld [vmem:[#allocation4 + $0xec] sm:$0xf]
    %v5799 = vpack.c.bf16 %v5792, %v5791
    %v5800 = vpack.c.bf16 %v5794, %v5793
    %v5801 = vld [vmem:[#allocation6 + $0x8] sm:$0x1]
    %v5802 = vlaneseq
    %v5803 = vshrl.u32 %v5802, 7
    %v5804 = vsub.s32 0, %v5803
    %v5805 = vrot.slane %v5801, %v5804
    %v5810 = vunpack.c.l.b16 %v5795
    %v5811 = vunpack.c.l.b16 %v5796
    %v5812 = vunpack.c.l.b16 %v5797
    %v5813 = vunpack.c.l.b16 %v5798
    %v5814 = vpack.c.b16 %v5811, %v5810
    %v5815 = vpack.c.b16 %v5813, %v5812
    %v5819 = vsel %vm83, %v5799, 0
    %v5822 = vsel %vm83, %v5800, 0
    %5824 = vmatprep.subr.bf16.mxu0 0
    %5825 = vmatpush1.bf16.msra.mxu0 0
    %5826 = vmatprep.subr.bf16.mxu0 0
    %5827 = vmatpush1.bf16.msra.mxu0 0
    %5828 = vmatprep.subr.bf16.mxu0 0
    %5829 = vmatpush1.bf16.msra.mxu0 0
    %5830 = vmatprep.subr.bf16.mxu0 0
    %5831 = vmatpush1.bf16.msra.mxu0 0
    %5832 = vmatprep.subr.bf16.mxu0 0
    %5833 = vmatpush1.bf16.msra.mxu0 0
    %5834 = vmatprep.subr.bf16.mxu0 0
    %5835 = vmatpush1.bf16.msra.mxu0 0
    %5836 = vmatprep.subr.bf16.mxu0 0
    %5837 = vmatpush1.bf16.msra.mxu0 %v5815
    %5838 = vmatprep.subr.bf16.mxu0 0
    %5839 = vmatpush1.bf16.msra.mxu0 %v5814
    %5840 = vmatprep.subr.bf16.mxu0 0
    %5841 = vmatpush2.bf16.msra.mxu0 0
    %5842 = vmatprep.subr.bf16.mxu0 0
    %5843 = vmatpush2.bf16.msra.mxu0 0
    %5844 = vmatprep.subr.bf16.mxu0 0
    %5845 = vmatpush2.bf16.msra.mxu0 0
    %5846 = vmatprep.subr.bf16.mxu0 0
    %5847 = vmatpush2.bf16.msra.mxu0 0
    %5848 = vmatprep.subr.bf16.mxu0 0
    %5849 = vmatpush2.bf16.msra.mxu0 0
    %5850 = vmatprep.subr.bf16.mxu0 0
    %5851 = vmatpush2.bf16.msra.mxu0 0
    %5852 = vmatprep.subr.bf16.mxu0 0
    %5853 = vmatpush2.bf16.msra.mxu0 0
    %5854 = vmatprep.subr.bf16.mxu0 0
    %5855 = vmatpush2.bf16.msra.mxu0 0
    %5856 = vmatprep.mubr.bf16.mxu0 0
    %5857 = vmatmul.mubr.bf16.gmra.mxu0 %v5819
    %v5858 = vpop.f32.mrf.mxu0
    %v5859 = vadd.f32 %v5805, %v5858
    %v5860 = vpop.f32.mrf.mxu0
    %v5861 = vpop.f32.mrf.mxu0
    %v5862 = vadd.f32 %v5805, %v5861
    %v5863 = vpop.f32.mrf.mxu0
    %5864 = vmatprep.mubr.bf16.mxu0 0
    %5865 = vmatmul.mubr.bf16.gmra.mxu0 %v5822
    %v5866 = vpop.f32.mrf.mxu0
    %v5867 = vadd.f32 %v5805, %v5866
    %v5868 = vpop.f32.mrf.mxu0
    %v5869 = vpop.f32.mrf.mxu0
    %v5870 = vadd.f32 %v5805, %v5869
    %v5871 = vpop.f32.mrf.mxu0
    %5872 = vdwg.mxu0
    %5877 = vrot.lane.b32.xlu0 %v56, 16
    %v5878 = vpop.permute.xlu0 %5877
    %5879 = vrot.lane.b32.xlu0 %v57, 16
    %v5880 = vpop.permute.xlu0 %5879
    %5881 = vrot.lane.b32.xlu0 %v58, 16
    %v5882 = vpop.permute.xlu0 %5881
    %5883 = vrot.lane.b32.xlu0 %v59, 16
    %v5884 = vpop.permute.xlu0 %5883
    %v5889 = vmul.f32 %v56, %v5878
    %v5890 = vmul.f32 %v57, %v5880
    %v5891 = vmul.f32 %v58, %v5882
    %v5892 = vmul.f32 %v59, %v5884
    %v5893 = vsub.f32 1.0, %v56
    %v5894 = vsub.f32 1.0, %v57
    %v5895 = vsub.f32 1.0, %v58
    %v5896 = vsub.f32 1.0, %v59
    %5901 = vrot.lane.b32.xlu0 %v5859, 16
    %v5902 = vpop.permute.xlu0 %5901
    %5903 = vrot.lane.b32.xlu0 %v5862, 16
    %v5904 = vpop.permute.xlu0 %5903
    %5905 = vrot.lane.b32.xlu0 %v5867, 16
    %v5906 = vpop.permute.xlu0 %5905
    %5907 = vrot.lane.b32.xlu0 %v5870, 16
    %v5908 = vpop.permute.xlu0 %5907
    %v5913 = vmul.f32 %v5893, %v5902
    %v5914 = vmul.f32 %v5894, %v5904
    %v5915 = vmul.f32 %v5895, %v5906
    %v5916 = vmul.f32 %v5896, %v5908
    %v5917 = vadd.f32 %v5889, %v5913
    %v5918 = vadd.f32 %v5890, %v5914
    %v5919 = vadd.f32 %v5891, %v5915
    %v5920 = vadd.f32 %v5892, %v5916
    %v5921 = vsub.f32 0.0, %v5859
    %v5922 = vsub.f32 0.0, %v5862
    %v5923 = vsub.f32 0.0, %v5867
    %v5924 = vsub.f32 0.0, %v5870
    %v5925 = vmul.f32 %v5921, 1.442695
    %v5926 = vpow.pop %v5925
    %v5927 = vmul.f32 %v5922, 1.442695
    %v5928 = vpow.pop %v5927
    %v5929 = vmul.f32 %v5923, 1.442695
    %v5930 = vpow.pop %v5929
    %v5931 = vmul.f32 %v5924, 1.442695
    %v5932 = vpow.pop %v5931
    %v5933 = vadd.f32 %v5926, 1.0
    %v5934 = vadd.f32 %v5928, 1.0
    %v5935 = vadd.f32 %v5930, 1.0
    %v5936 = vadd.f32 %v5932, 1.0
    %v5937 = vrcp.pop %v5933
    %v5938 = vrcp.pop %v5934
    %v5939 = vrcp.pop %v5935
    %v5940 = vrcp.pop %v5936
    %v5941 = vlaneseq
    %v5942 = vand.u32 %v5941, 127
    %vm5943 = vcmp.lt.s32.totalorder %v5942, 6
    %5948 = vrot.lane.b32.xlu0 %v5917, 112
    %v5949 = vpop.permute.xlu0 %5948
    %5950 = vrot.lane.b32.xlu0 %v5918, 112
    %v5951 = vpop.permute.xlu0 %5950
    %5952 = vrot.lane.b32.xlu0 %v5919, 112
    %v5953 = vpop.permute.xlu0 %5952
    %5954 = vrot.lane.b32.xlu0 %v5920, 112
    %v5955 = vpop.permute.xlu0 %5954
    %v5960 = vsel %vm5943, %v5949, %v5937
    %v5961 = vsel %vm5943, %v5951, %v5938
    %v5962 = vsel %vm5943, %v5953, %v5939
    %v5963 = vsel %vm5943, %v5955, %v5940
    %5964 = vst.msk [vmem:[%s3] sm:$0xff] %vm2325, %v5960
    %5965 = vst.msk [vmem:[%s3 + $0x8] sm:$0xff] %vm2325, %v5961
    %5966 = vst.msk [vmem:[%s3 + $0x10] sm:$0xff] %vm2325, %v5962
    %5967 = vst.msk [vmem:[%s3 + $0x18] sm:$0xff] %vm2325, %v5963
    // Predicated region
    $region26: #{tpu_custom_call.1} parent=1 // pred_check
      _
    $region27: #{tpu_custom_call.1} parent=1 // pred_check_branch
      %5969 = sbr.rel (0) target = $region29
    $region28: #{tpu_custom_call.1} parent=1 // pred_region
      _
    $region29: #{tpu_custom_call.1} parent=1 // pred_fallthru
      _
    // Predicated region
    $region30: #{tpu_custom_call.1} parent=1 // pred_check
      _
    $region31: #{tpu_custom_call.1} parent=1 // pred_check_branch
      %5971 = sbr.rel (0) target = $region33
    $region32: #{tpu_custom_call.1} parent=1 // pred_region
      _
    $region33: #{tpu_custom_call.1} parent=1 // pred_fallthru
      _
    %5972 = vsyncpa [#allocation3], 1
    %5973 = vsyncpa [#allocation5], 1

</llo_original>
